<compile_context>
chip_gen: v7x
topology: tpu7x:2x2x1
jax: 0.10.0
libtpu: 0.0.40
codegen_flags: <defaults>
</compile_context>

<pallas_src>
import functools

import jax
import jax.numpy as jnp
from jax.experimental import pallas as pl
from jax.experimental.pallas import tpu as pltpu

TEMP = 10.0
THRESHOLD = 0.8
_NEG_BIG = -1e9      # logit bias for padded classes (never win softmax/argmax)
_TINY = 1e-30        # clamp inside m*log(m) (protects underflow; ref would NaN)


def _round_up(x, m):
    return ((x + m - 1) // m) * m


def _log_softmax_lanes(z):
    """log-softmax over the last (lane) axis."""
    zs = z - jnp.max(z, axis=-1, keepdims=True)
    return zs - jnp.log(jnp.sum(jnp.exp(zs), axis=-1, keepdims=True))


def _log_softmax_sublanes(z):
    """log-softmax over the first (sublane) axis."""
    zs = z - jnp.max(z, axis=0, keepdims=True)
    return zs - jnp.log(jnp.sum(jnp.exp(zs), axis=0, keepdims=True))


def pdd_loss_kernel(f_ref, w_ref, b_ref, lab_col_ref, lab_row_ref, out_ref,
                    *, bsz, n_cls):
    # f_ref       : (2*bp, D)  f32  VMEM   (source half then target half, rows
    #                                       >= bsz in each half are zero pad)
    # w_ref       : (D, cp)    f32  VMEM   (pre-transposed Linear weight)
    # b_ref       : (1, cp)    f32  VMEM   (padded classes = -1e9)
    # lab_col_ref : (bp, 1)    int32 VMEM  (padded rows = -1)
    # lab_row_ref : (1, bp)    int32 VMEM  (same labels, lane layout)
    # out_ref     : (1, 1)     f32  SMEM   (scalar loss)
    bp = lab_col_ref.shape[0]
    cp = w_ref.shape[1]
    inv_temp = jnp.float32(1.0 / TEMP)

    # ---- classifier: clean (M,K)x(K,N) matmul on the MXU, f32 accumulate ----
    y = jax.lax.dot_general(f_ref[...], w_ref[...], (((1,), (0,)), ((), ())),
                            preferred_element_type=jnp.float32) + b_ref[...]
    y_s = y[:bp, :]                     # source logits, i on sublanes
    y_t = y[bp:, :]                     # target logits

    # ---- source side, row layout (i on sublanes) ----------------------------
    logp_s = _log_softmax_lanes(y_s * inv_temp)          # (bp, cp)
    p_s = jnp.exp(logp_s)
    h_s = jnp.sum(p_s * logp_s, axis=-1, keepdims=True)  # (bp, 1) = Σ p log p

    # ---- target side, computed directly in transposed (j-on-lanes) layout ---
    y_tT = jnp.transpose(y_t)                             # (cp, bp)
    ymax_row = jnp.max(y_tT, axis=0, keepdims=True)       # (1, bp)
    denom_row = jnp.sum(jnp.exp(y_tT - ymax_row), axis=0, keepdims=True)
    # max softmax prob = 1/denom;  conf >= thr  <=>  denom <= 1/thr  (exact)
    conf_ok_row = (denom_row <= jnp.float32(1.0 / THRESHOLD)).astype(jnp.float32)
    cls_f = jax.lax.broadcasted_iota(jnp.int32, y_tT.shape, 0).astype(jnp.float32)
    # first-occurrence argmax (matches torch.argmax semantics)
    pseudo_row = jnp.min(jnp.where(y_tT >= ymax_row, cls_f, jnp.float32(cp)),
                         axis=0, keepdims=True).astype(jnp.int32)   # (1, bp)
    logp_tT = _log_softmax_sublanes(y_tT * inv_temp)       # (cp, bp)
    p_tT = jnp.exp(logp_tT)
    h_t_row = jnp.sum(p_tT * logp_tT, axis=0, keepdims=True)        # (1, bp)

    p_sT = jnp.transpose(p_s)                              # (cp, bp)

    # ---- pair masks via direct integer compares (no MXU one-hots) -----------
    lab_col = lab_col_ref[...]                             # (bp, 1)
    lab_row = lab_row_ref[...]                             # (1, bp)
    row_i = jax.lax.broadcasted_iota(jnp.int32, (bp, bp), 0)
    col_j = jax.lax.broadcasted_iota(jnp.int32, (bp, bp), 1)
    valid = jnp.logical_and(row_i < bsz, col_j < bsz)
    mask_st = (jnp.logical_and(lab_col == pseudo_row, valid).astype(jnp.float32)
               * conf_ok_row)                              # (bp, bp)
    match_ss = jnp.logical_and(lab_col == lab_row, valid).astype(jnp.float32)
    mask_ss = match_ss * (col_j > row_i).astype(jnp.float32)   # strict upper

    # ---- lane-dense pairwise mixture: C slabs of (bp, bp), j on lanes -------
    acc_st = jnp.zeros((bp, bp), jnp.float32)
    acc_ss = jnp.zeros((bp, bp), jnp.float32)
    for c in range(n_cls):                  # real classes only (pads have p=0)
        ps_c = p_s[:, c:c + 1]              # (bp, 1)  p_s[i, c]
        pt_c = p_tT[c:c + 1, :]             # (1, bp)  p_t[j, c]
        pss_c = p_sT[c:c + 1, :]            # (1, bp)  p_s[j, c]
        m_st = 0.5 * (ps_c + pt_c)
        m_ss = 0.5 * (ps_c + pss_c)
        acc_st = acc_st + m_st * jnp.log(jnp.maximum(m_st, jnp.float32(_TINY)))
        acc_ss = acc_ss + m_ss * jnp.log(jnp.maximum(m_ss, jnp.float32(_TINY)))
    # TODO(synk): tile the pair space (2-D grid, skip lower-triangular intra
    # blocks with pl.when) once B or C grow beyond single-VMEM scale.

    # ---- masked reductions: JS(i,j) = 0.5*(H_a[i] + H_b[j]) - Σ_c m log m ---
    inter_cnt = jnp.sum(mask_st)
    intra_cnt = jnp.sum(mask_ss)

    rowsum_st = jnp.sum(mask_st, axis=1, keepdims=True)    # (bp, 1)
    colsum_st = jnp.sum(mask_st, axis=0, keepdims=True)    # (1, bp)
    term_h_inter = jnp.sum(h_s * rowsum_st) + jnp.sum(h_t_row * colsum_st)
    inter_sum = 0.5 * term_h_inter - jnp.sum(mask_st * acc_st)

    # intra entropies by symmetry: Σ_{i<j,match}(H[i]+H[j]) = Σ_i H[i]*(row_i-1)
    valid_i_col = (jax.lax.broadcasted_iota(jnp.int32, (bp, 1), 0)
                   < bsz).astype(jnp.float32)
    fullrow = jnp.sum(match_ss, axis=1, keepdims=True)     # (bp, 1), incl diag
    term_h_intra = jnp.sum(valid_i_col * h_s * (fullrow - 1.0))
    intra_sum = 0.5 * term_h_intra - jnp.sum(mask_ss * acc_ss)

    loss_inter = jnp.where(inter_cnt > 0.0,
                           inter_sum / jnp.maximum(inter_cnt, 1.0), 0.0)
    loss_intra = jnp.where(intra_cnt > 0.0,
                           intra_sum / jnp.maximum(intra_cnt, 1.0), 0.0)
    out_ref[0, 0] = jnp.float32(TEMP * TEMP) * (loss_inter + loss_intra)


@jax.jit
def adversarial_loss_pdd(f, labels_s, w, b):
    """f: (2B, D) f32, labels_s: (B,) int, w: (C, D) f32 (torch Linear), b: (C,)."""
    two_b, d = f.shape
    c = w.shape[0]
    bsz = two_b // 2
    # Pad per-half batch and class count to multiples of 128 so pair slabs are
    # lane-dense and in-kernel transposes / the MXU N dim are tile-aligned.
    bp = max(128, _round_up(bsz, 128))
    cp = max(128, _round_up(c, 128))

    f32 = jnp.float32
    f_s = jnp.pad(f[:bsz].astype(f32), ((0, bp - bsz), (0, 0)))
    f_t = jnp.pad(f[bsz:].astype(f32), ((0, bp - bsz), (0, 0)))
    f_pad = jnp.concatenate([f_s, f_t], axis=0)                     # (2bp, D)
    w_dc = jnp.pad(w.astype(f32).T, ((0, 0), (0, cp - c)))          # (D, cp)
    bias = jnp.pad(b.astype(f32).reshape(1, c), ((0, 0), (0, cp - c)),
                   constant_values=_NEG_BIG)                        # (1, cp)
    lab_col = jnp.pad(labels_s.astype(jnp.int32).reshape(bsz, 1),
                      ((0, bp - bsz), (0, 0)), constant_values=-1)  # (bp, 1)
    lab_row = lab_col.reshape(1, bp)                                # (1, bp)

    # Scoped-VMEM limit sized to the real working set (inputs + logit/prob
    # arrays + pair slabs) with headroom.
    ws = 4 * (f_pad.size + w_dc.size + bias.size
              + 8 * bp * cp + 8 * bp * bp)
    vmem_limit = int(min(48 * 2**20, max(16 * 2**20, 2 * ws)))

    kernel = functools.partial(pdd_loss_kernel, bsz=bsz, n_cls=c)
    out = pl.pallas_call(
        kernel,
        out_shape=jax.ShapeDtypeStruct((1, 1), jnp.float32),
        in_specs=[
            pl.BlockSpec(memory_space=pltpu.MemorySpace.VMEM),   # f_pad
            pl.BlockSpec(memory_space=pltpu.MemorySpace.VMEM),   # w (D, cp)
            pl.BlockSpec(memory_space=pltpu.MemorySpace.VMEM),   # bias
            pl.BlockSpec(memory_space=pltpu.MemorySpace.VMEM),   # labels (bp,1)
            pl.BlockSpec(memory_space=pltpu.MemorySpace.VMEM),   # labels (1,bp)
        ],
        out_specs=pl.BlockSpec(memory_space=pltpu.MemorySpace.SMEM),
        compiler_params=pltpu.CompilerParams(vmem_limit_bytes=vmem_limit),
    )(f_pad, w_dc, bias, lab_col, lab_row)
    return out[0, 0]


def reference_loss(f, labels_s, w, b, temp=TEMP, threshold=THRESHOLD):
    """Pure-JAX mirror of the PyTorch forward (for verification only)."""
    y = f @ w.T + b
    bsz = f.shape[0] // 2
    y_s, y_t = y[:bsz], y[bsz:]
    pseudo = jnp.argmax(y_t, axis=1)
    conf = jnp.max(jax.nn.softmax(y_t, axis=1), axis=1)
    p_s = jax.nn.softmax(y_s / temp, axis=1)
    p_t = jax.nn.softmax(y_t / temp, axis=1)

    def js(p, q):
        m = 0.5 * (p + q)
        logm = jnp.log(m)
        return 0.5 * (jnp.sum(p * (jnp.log(p) - logm)) +
                      jnp.sum(q * (jnp.log(q) - logm)))

    inter_sum, inter_cnt = 0.0, 0.0
    for i in range(bsz):
        for j in range(bsz):
            cond = jnp.logical_and(conf[j] >= threshold,
                                   labels_s[i] == pseudo[j])
            inter_sum = inter_sum + jnp.where(cond, js(p_s[i], p_t[j]), 0.0)
            inter_cnt = inter_cnt + cond.astype(jnp.float32)
    intra_sum, intra_cnt = 0.0, 0.0
    for i in range(bsz):
        for j in range(i + 1, bsz):
            cond = labels_s[i] == labels_s[j]
            intra_sum = intra_sum + jnp.where(cond, js(p_s[i], p_s[j]), 0.0)
            intra_cnt = intra_cnt + cond.astype(jnp.float32)
    li = jnp.where(inter_cnt > 0, inter_sum / inter_cnt, 0.0)
    la = jnp.where(intra_cnt > 0, intra_sum / intra_cnt, 0.0)
    return temp ** 2 * (li + la)


if __name__ == "__main__":
    # Small deterministic example: B=4 source + 4 target samples, D=32 feats,
    # C=8 classes.
    B, D, C = 4, 32, 8
    key = jax.random.PRNGKey(0)
    k1, k2, k3 = jax.random.split(key, 3)
    f = jax.random.normal(k1, (2 * B, D), dtype=jnp.float32)
    w = 0.5 * jax.random.normal(k2, (C, D), dtype=jnp.float32)   # Linear weight
    bias = 0.1 * jax.random.normal(k3, (C,), dtype=jnp.float32)  # Linear bias
    labels_s = jnp.array([0, 1, 0, 1], dtype=jnp.int32)

    loss = adversarial_loss_pdd(f, labels_s, w, bias)
    jax.block_until_ready(loss)

    ref = reference_loss(f, labels_s, w, bias)
    assert bool(jnp.isfinite(loss)), f"non-finite loss: {loss}"
    assert jnp.allclose(loss, ref, rtol=1e-3, atol=1e-3), (loss, ref)
    print("KERNEL_OK")
</pallas_src>

<mosaic_0001>
module attributes {stable_mosaic.version = 11 : i64} {
  func.func @pdd_loss_kernel(%arg0: memref<256x32xf32, #tpu.memory_space<vmem>>, %arg1: memref<32x128xf32, #tpu.memory_space<vmem>>, %arg2: memref<1x128xf32, #tpu.memory_space<vmem>>, %arg3: memref<128x1xi32, #tpu.memory_space<vmem>>, %arg4: memref<1x128xi32, #tpu.memory_space<vmem>>, %arg5: memref<1x1xf32, #tpu.memory_space<smem>>) attributes {dimension_semantics = [], scalar_prefetch = 0 : i64, scratch_operands = 0 : i64, tpu.core_type = #tpu.core_type<tc>} {
    %c0 = arith.constant 0 : index
    %c0_0 = arith.constant 0 : index
    %0 = vector.load %arg0[%c0, %c0_0] : memref<256x32xf32, #tpu.memory_space<vmem>>, vector<256x32xf32>
    %c0_1 = arith.constant 0 : index
    %c0_2 = arith.constant 0 : index
    %1 = vector.load %arg1[%c0_1, %c0_2] : memref<32x128xf32, #tpu.memory_space<vmem>>, vector<32x128xf32>
    %cst = arith.constant dense<0.000000e+00> : vector<256x128xf32>
    %2 = tpu.matmul %0, %1, %cst {dimension_numbers = #tpu.dot_dimension_numbers<[1], [0], [0], [1], [0, 0, 1, 1], [], []>} : vector<256x32xf32>, vector<32x128xf32>, vector<256x128xf32> -> vector<256x128xf32>
    %c0_3 = arith.constant 0 : index
    %c0_4 = arith.constant 0 : index
    %3 = vector.load %arg2[%c0_3, %c0_4] : memref<1x128xf32, #tpu.memory_space<vmem>>, vector<1x128xf32>
    %4 = vector.broadcast %3 : vector<1x128xf32> to vector<256x128xf32>
    %5 = arith.addf %2, %4 : vector<256x128xf32>
    %6 = vector.extract_strided_slice %5 {offsets = [0, 0], sizes = [128, 128], strides = [1, 1]} : vector<256x128xf32> to vector<128x128xf32>
    %7 = vector.extract_strided_slice %5 {offsets = [128, 0], sizes = [128, 128], strides = [1, 1]} : vector<256x128xf32> to vector<128x128xf32>
    %cst_5 = arith.constant 1.000000e-01 : f32
    %8 = vector.broadcast %cst_5 : f32 to vector<128x128xf32>
    %9 = arith.mulf %6, %8 : vector<128x128xf32>
    %cst_6 = arith.constant dense<0xFF800000> : vector<128xf32>
    %10 = vector.multi_reduction <maximumf>, %9, %cst_6 [1] : vector<128x128xf32> to vector<128xf32>
    %11 = vector.shape_cast %10 : vector<128xf32> to vector<128x1xf32>
    %12 = vector.broadcast %11 : vector<128x1xf32> to vector<128x128xf32>
    %13 = arith.subf %9, %12 : vector<128x128xf32>
    %14 = math.exp %13 : vector<128x128xf32>
    %cst_7 = arith.constant dense<0.000000e+00> : vector<128xf32>
    %15 = vector.multi_reduction <add>, %14, %cst_7 [1] : vector<128x128xf32> to vector<128xf32>
    %16 = vector.shape_cast %15 : vector<128xf32> to vector<128x1xf32>
    %17 = math.log %16 : vector<128x1xf32>
    %18 = vector.broadcast %17 : vector<128x1xf32> to vector<128x128xf32>
    %19 = arith.subf %13, %18 : vector<128x128xf32>
    %20 = math.exp %19 : vector<128x128xf32>
    %21 = arith.mulf %20, %19 : vector<128x128xf32>
    %cst_8 = arith.constant dense<0.000000e+00> : vector<128xf32>
    %22 = vector.multi_reduction <add>, %21, %cst_8 [1] : vector<128x128xf32> to vector<128xf32>
    %23 = vector.shape_cast %22 : vector<128xf32> to vector<128x1xf32>
    %24 = tpu.transpose %7, [1, 0] : vector<128x128xf32> -> vector<128x128xf32>
    %cst_9 = arith.constant dense<0xFF800000> : vector<128xf32>
    %25 = vector.multi_reduction <maximumf>, %24, %cst_9 [0] : vector<128x128xf32> to vector<128xf32>
    %26 = vector.shape_cast %25 : vector<128xf32> to vector<1x128xf32>
    %27 = vector.broadcast %26 : vector<1x128xf32> to vector<128x128xf32>
    %28 = arith.subf %24, %27 : vector<128x128xf32>
    %29 = math.exp %28 : vector<128x128xf32>
    %cst_10 = arith.constant dense<0.000000e+00> : vector<128xf32>
    %30 = vector.multi_reduction <add>, %29, %cst_10 [0] : vector<128x128xf32> to vector<128xf32>
    %31 = vector.shape_cast %30 : vector<128xf32> to vector<1x128xf32>
    %cst_11 = arith.constant 1.250000e+00 : f32
    %32 = vector.broadcast %cst_11 : f32 to vector<1x128xf32>
    %33 = arith.cmpf ole, %31, %32 : vector<1x128xf32>
    %34 = arith.extui %33 : vector<1x128xi1> to vector<1x128xi32>
    %35 = arith.sitofp %34 : vector<1x128xi32> to vector<1x128xf32>
    %36 = tpu.iota {dimensions = array<i32: 0>} : vector<128x128xi32>
    %37 = arith.sitofp %36 : vector<128x128xi32> to vector<128x128xf32>
    %38 = vector.broadcast %26 : vector<1x128xf32> to vector<128x128xf32>
    %39 = arith.cmpf oge, %24, %38 : vector<128x128xf32>
    %cst_12 = arith.constant 1.280000e+02 : f32
    %40 = vector.broadcast %cst_12 : f32 to vector<128x128xf32>
    %41 = arith.select %39, %37, %40 : vector<128x128xi1>, vector<128x128xf32>
    %cst_13 = arith.constant dense<0x7F800000> : vector<128xf32>
    %42 = vector.multi_reduction <minimumf>, %41, %cst_13 [0] : vector<128x128xf32> to vector<128xf32>
    %43 = vector.shape_cast %42 : vector<128xf32> to vector<1x128xf32>
    %44 = arith.fptosi %43 : vector<1x128xf32> to vector<1x128xi32>
    %cst_14 = arith.constant 1.000000e-01 : f32
    %45 = vector.broadcast %cst_14 : f32 to vector<128x128xf32>
    %46 = arith.mulf %24, %45 : vector<128x128xf32>
    %cst_15 = arith.constant dense<0xFF800000> : vector<128xf32>
    %47 = vector.multi_reduction <maximumf>, %46, %cst_15 [0] : vector<128x128xf32> to vector<128xf32>
    %48 = vector.shape_cast %47 : vector<128xf32> to vector<1x128xf32>
    %49 = vector.broadcast %48 : vector<1x128xf32> to vector<128x128xf32>
    %50 = arith.subf %46, %49 : vector<128x128xf32>
    %51 = math.exp %50 : vector<128x128xf32>
    %cst_16 = arith.constant dense<0.000000e+00> : vector<128xf32>
    %52 = vector.multi_reduction <add>, %51, %cst_16 [0] : vector<128x128xf32> to vector<128xf32>
    %53 = vector.shape_cast %52 : vector<128xf32> to vector<1x128xf32>
    %54 = math.log %53 : vector<1x128xf32>
    %55 = vector.broadcast %54 : vector<1x128xf32> to vector<128x128xf32>
    %56 = arith.subf %50, %55 : vector<128x128xf32>
    %57 = math.exp %56 : vector<128x128xf32>
    %58 = arith.mulf %57, %56 : vector<128x128xf32>
    %cst_17 = arith.constant dense<0.000000e+00> : vector<128xf32>
    %59 = vector.multi_reduction <add>, %58, %cst_17 [0] : vector<128x128xf32> to vector<128xf32>
    %60 = vector.shape_cast %59 : vector<128xf32> to vector<1x128xf32>
    %61 = tpu.transpose %20, [1, 0] : vector<128x128xf32> -> vector<128x128xf32>
    %c0_18 = arith.constant 0 : index
    %c0_19 = arith.constant 0 : index
    %62 = vector.load %arg3[%c0_18, %c0_19] : memref<128x1xi32, #tpu.memory_space<vmem>>, vector<128x1xi32>
    %c0_20 = arith.constant 0 : index
    %c0_21 = arith.constant 0 : index
    %63 = vector.load %arg4[%c0_20, %c0_21] : memref<1x128xi32, #tpu.memory_space<vmem>>, vector<1x128xi32>
    %64 = tpu.iota {dimensions = array<i32: 0>} : vector<128x128xi32>
    %65 = tpu.iota {dimensions = array<i32: 1>} : vector<128x128xi32>
    %c4_i32 = arith.constant 4 : i32
    %66 = vector.broadcast %c4_i32 : i32 to vector<128x128xi32>
    %67 = arith.cmpi slt, %64, %66 : vector<128x128xi32>
    %c4_i32_22 = arith.constant 4 : i32
    %68 = vector.broadcast %c4_i32_22 : i32 to vector<128x128xi32>
    %69 = arith.cmpi slt, %65, %68 : vector<128x128xi32>
    %70 = arith.andi %67, %69 : vector<128x128xi1>
    %71 = vector.broadcast %62 : vector<128x1xi32> to vector<128x128xi32>
    %72 = vector.broadcast %44 : vector<1x128xi32> to vector<128x128xi32>
    %73 = arith.cmpi eq, %71, %72 : vector<128x128xi32>
    %74 = arith.andi %73, %70 : vector<128x128xi1>
    %75 = arith.extui %74 : vector<128x128xi1> to vector<128x128xi32>
    %76 = arith.sitofp %75 : vector<128x128xi32> to vector<128x128xf32>
    %77 = vector.broadcast %35 : vector<1x128xf32> to vector<128x128xf32>
    %78 = arith.mulf %76, %77 : vector<128x128xf32>
    %79 = vector.broadcast %62 : vector<128x1xi32> to vector<128x128xi32>
    %80 = vector.broadcast %63 : vector<1x128xi32> to vector<128x128xi32>
    %81 = arith.cmpi eq, %79, %80 : vector<128x128xi32>
    %82 = arith.andi %81, %70 : vector<128x128xi1>
    %83 = arith.extui %82 : vector<128x128xi1> to vector<128x128xi32>
    %84 = arith.sitofp %83 : vector<128x128xi32> to vector<128x128xf32>
    %85 = arith.cmpi sgt, %65, %64 : vector<128x128xi32>
    %86 = arith.extui %85 : vector<128x128xi1> to vector<128x128xi32>
    %87 = arith.sitofp %86 : vector<128x128xi32> to vector<128x128xf32>
    %88 = arith.mulf %84, %87 : vector<128x128xf32>
    %cst_23 = arith.constant 0.000000e+00 : f32
    %89 = vector.broadcast %cst_23 : f32 to vector<128x128xf32>
    %cst_24 = arith.constant 0.000000e+00 : f32
    %90 = vector.broadcast %cst_24 : f32 to vector<128x128xf32>
    %91 = vector.extract_strided_slice %20 {offsets = [0, 0], sizes = [128, 1], strides = [1, 1]} : vector<128x128xf32> to vector<128x1xf32>
    %92 = vector.extract_strided_slice %57 {offsets = [0, 0], sizes = [1, 128], strides = [1, 1]} : vector<128x128xf32> to vector<1x128xf32>
    %93 = vector.extract_strided_slice %61 {offsets = [0, 0], sizes = [1, 128], strides = [1, 1]} : vector<128x128xf32> to vector<1x128xf32>
    %94 = vector.broadcast %91 : vector<128x1xf32> to vector<128x128xf32>
    %95 = vector.broadcast %92 : vector<1x128xf32> to vector<128x128xf32>
    %96 = arith.addf %94, %95 : vector<128x128xf32>
    %cst_25 = arith.constant 5.000000e-01 : f32
    %97 = vector.broadcast %cst_25 : f32 to vector<128x128xf32>
    %98 = arith.mulf %97, %96 : vector<128x128xf32>
    %99 = vector.broadcast %91 : vector<128x1xf32> to vector<128x128xf32>
    %100 = vector.broadcast %93 : vector<1x128xf32> to vector<128x128xf32>
    %101 = arith.addf %99, %100 : vector<128x128xf32>
    %cst_26 = arith.constant 5.000000e-01 : f32
    %102 = vector.broadcast %cst_26 : f32 to vector<128x128xf32>
    %103 = arith.mulf %102, %101 : vector<128x128xf32>
    %cst_27 = arith.constant 1.000000e-30 : f32
    %104 = vector.broadcast %cst_27 : f32 to vector<128x128xf32>
    %105 = arith.maximumf %98, %104 : vector<128x128xf32>
    %106 = math.log %105 : vector<128x128xf32>
    %107 = arith.mulf %98, %106 : vector<128x128xf32>
    %108 = arith.addf %89, %107 : vector<128x128xf32>
    %cst_28 = arith.constant 1.000000e-30 : f32
    %109 = vector.broadcast %cst_28 : f32 to vector<128x128xf32>
    %110 = arith.maximumf %103, %109 : vector<128x128xf32>
    %111 = math.log %110 : vector<128x128xf32>
    %112 = arith.mulf %103, %111 : vector<128x128xf32>
    %113 = arith.addf %90, %112 : vector<128x128xf32>
    %114 = vector.extract_strided_slice %20 {offsets = [0, 1], sizes = [128, 1], strides = [1, 1]} : vector<128x128xf32> to vector<128x1xf32>
    %115 = vector.extract_strided_slice %57 {offsets = [1, 0], sizes = [1, 128], strides = [1, 1]} : vector<128x128xf32> to vector<1x128xf32>
    %116 = vector.extract_strided_slice %61 {offsets = [1, 0], sizes = [1, 128], strides = [1, 1]} : vector<128x128xf32> to vector<1x128xf32>
    %117 = vector.broadcast %114 : vector<128x1xf32> to vector<128x128xf32>
    %118 = vector.broadcast %115 : vector<1x128xf32> to vector<128x128xf32>
    %119 = arith.addf %117, %118 : vector<128x128xf32>
    %cst_29 = arith.constant 5.000000e-01 : f32
    %120 = vector.broadcast %cst_29 : f32 to vector<128x128xf32>
    %121 = arith.mulf %120, %119 : vector<128x128xf32>
    %122 = vector.broadcast %114 : vector<128x1xf32> to vector<128x128xf32>
    %123 = vector.broadcast %116 : vector<1x128xf32> to vector<128x128xf32>
    %124 = arith.addf %122, %123 : vector<128x128xf32>
    %cst_30 = arith.constant 5.000000e-01 : f32
    %125 = vector.broadcast %cst_30 : f32 to vector<128x128xf32>
    %126 = arith.mulf %125, %124 : vector<128x128xf32>
    %cst_31 = arith.constant 1.000000e-30 : f32
    %127 = vector.broadcast %cst_31 : f32 to vector<128x128xf32>
    %128 = arith.maximumf %121, %127 : vector<128x128xf32>
    %129 = math.log %128 : vector<128x128xf32>
    %130 = arith.mulf %121, %129 : vector<128x128xf32>
    %131 = arith.addf %108, %130 : vector<128x128xf32>
    %cst_32 = arith.constant 1.000000e-30 : f32
    %132 = vector.broadcast %cst_32 : f32 to vector<128x128xf32>
    %133 = arith.maximumf %126, %132 : vector<128x128xf32>
    %134 = math.log %133 : vector<128x128xf32>
    %135 = arith.mulf %126, %134 : vector<128x128xf32>
    %136 = arith.addf %113, %135 : vector<128x128xf32>
    %137 = vector.extract_strided_slice %20 {offsets = [0, 2], sizes = [128, 1], strides = [1, 1]} : vector<128x128xf32> to vector<128x1xf32>
    %138 = vector.extract_strided_slice %57 {offsets = [2, 0], sizes = [1, 128], strides = [1, 1]} : vector<128x128xf32> to vector<1x128xf32>
    %139 = vector.extract_strided_slice %61 {offsets = [2, 0], sizes = [1, 128], strides = [1, 1]} : vector<128x128xf32> to vector<1x128xf32>
    %140 = vector.broadcast %137 : vector<128x1xf32> to vector<128x128xf32>
    %141 = vector.broadcast %138 : vector<1x128xf32> to vector<128x128xf32>
    %142 = arith.addf %140, %141 : vector<128x128xf32>
    %cst_33 = arith.constant 5.000000e-01 : f32
    %143 = vector.broadcast %cst_33 : f32 to vector<128x128xf32>
    %144 = arith.mulf %143, %142 : vector<128x128xf32>
    %145 = vector.broadcast %137 : vector<128x1xf32> to vector<128x128xf32>
    %146 = vector.broadcast %139 : vector<1x128xf32> to vector<128x128xf32>
    %147 = arith.addf %145, %146 : vector<128x128xf32>
    %cst_34 = arith.constant 5.000000e-01 : f32
    %148 = vector.broadcast %cst_34 : f32 to vector<128x128xf32>
    %149 = arith.mulf %148, %147 : vector<128x128xf32>
    %cst_35 = arith.constant 1.000000e-30 : f32
    %150 = vector.broadcast %cst_35 : f32 to vector<128x128xf32>
    %151 = arith.maximumf %144, %150 : vector<128x128xf32>
    %152 = math.log %151 : vector<128x128xf32>
    %153 = arith.mulf %144, %152 : vector<128x128xf32>
    %154 = arith.addf %131, %153 : vector<128x128xf32>
    %cst_36 = arith.constant 1.000000e-30 : f32
    %155 = vector.broadcast %cst_36 : f32 to vector<128x128xf32>
    %156 = arith.maximumf %149, %155 : vector<128x128xf32>
    %157 = math.log %156 : vector<128x128xf32>
    %158 = arith.mulf %149, %157 : vector<128x128xf32>
    %159 = arith.addf %136, %158 : vector<128x128xf32>
    %160 = vector.extract_strided_slice %20 {offsets = [0, 3], sizes = [128, 1], strides = [1, 1]} : vector<128x128xf32> to vector<128x1xf32>
    %161 = vector.extract_strided_slice %57 {offsets = [3, 0], sizes = [1, 128], strides = [1, 1]} : vector<128x128xf32> to vector<1x128xf32>
    %162 = vector.extract_strided_slice %61 {offsets = [3, 0], sizes = [1, 128], strides = [1, 1]} : vector<128x128xf32> to vector<1x128xf32>
    %163 = vector.broadcast %160 : vector<128x1xf32> to vector<128x128xf32>
    %164 = vector.broadcast %161 : vector<1x128xf32> to vector<128x128xf32>
    %165 = arith.addf %163, %164 : vector<128x128xf32>
    %cst_37 = arith.constant 5.000000e-01 : f32
    %166 = vector.broadcast %cst_37 : f32 to vector<128x128xf32>
    %167 = arith.mulf %166, %165 : vector<128x128xf32>
    %168 = vector.broadcast %160 : vector<128x1xf32> to vector<128x128xf32>
    %169 = vector.broadcast %162 : vector<1x128xf32> to vector<128x128xf32>
    %170 = arith.addf %168, %169 : vector<128x128xf32>
    %cst_38 = arith.constant 5.000000e-01 : f32
    %171 = vector.broadcast %cst_38 : f32 to vector<128x128xf32>
    %172 = arith.mulf %171, %170 : vector<128x128xf32>
    %cst_39 = arith.constant 1.000000e-30 : f32
    %173 = vector.broadcast %cst_39 : f32 to vector<128x128xf32>
    %174 = arith.maximumf %167, %173 : vector<128x128xf32>
    %175 = math.log %174 : vector<128x128xf32>
    %176 = arith.mulf %167, %175 : vector<128x128xf32>
    %177 = arith.addf %154, %176 : vector<128x128xf32>
    %cst_40 = arith.constant 1.000000e-30 : f32
    %178 = vector.broadcast %cst_40 : f32 to vector<128x128xf32>
    %179 = arith.maximumf %172, %178 : vector<128x128xf32>
    %180 = math.log %179 : vector<128x128xf32>
    %181 = arith.mulf %172, %180 : vector<128x128xf32>
    %182 = arith.addf %159, %181 : vector<128x128xf32>
    %183 = vector.extract_strided_slice %20 {offsets = [0, 4], sizes = [128, 1], strides = [1, 1]} : vector<128x128xf32> to vector<128x1xf32>
    %184 = vector.extract_strided_slice %57 {offsets = [4, 0], sizes = [1, 128], strides = [1, 1]} : vector<128x128xf32> to vector<1x128xf32>
    %185 = vector.extract_strided_slice %61 {offsets = [4, 0], sizes = [1, 128], strides = [1, 1]} : vector<128x128xf32> to vector<1x128xf32>
    %186 = vector.broadcast %183 : vector<128x1xf32> to vector<128x128xf32>
    %187 = vector.broadcast %184 : vector<1x128xf32> to vector<128x128xf32>
    %188 = arith.addf %186, %187 : vector<128x128xf32>
    %cst_41 = arith.constant 5.000000e-01 : f32
    %189 = vector.broadcast %cst_41 : f32 to vector<128x128xf32>
    %190 = arith.mulf %189, %188 : vector<128x128xf32>
    %191 = vector.broadcast %183 : vector<128x1xf32> to vector<128x128xf32>
    %192 = vector.broadcast %185 : vector<1x128xf32> to vector<128x128xf32>
    %193 = arith.addf %191, %192 : vector<128x128xf32>
    %cst_42 = arith.constant 5.000000e-01 : f32
    %194 = vector.broadcast %cst_42 : f32 to vector<128x128xf32>
    %195 = arith.mulf %194, %193 : vector<128x128xf32>
    %cst_43 = arith.constant 1.000000e-30 : f32
    %196 = vector.broadcast %cst_43 : f32 to vector<128x128xf32>
    %197 = arith.maximumf %190, %196 : vector<128x128xf32>
    %198 = math.log %197 : vector<128x128xf32>
    %199 = arith.mulf %190, %198 : vector<128x128xf32>
    %200 = arith.addf %177, %199 : vector<128x128xf32>
    %cst_44 = arith.constant 1.000000e-30 : f32
    %201 = vector.broadcast %cst_44 : f32 to vector<128x128xf32>
    %202 = arith.maximumf %195, %201 : vector<128x128xf32>
    %203 = math.log %202 : vector<128x128xf32>
    %204 = arith.mulf %195, %203 : vector<128x128xf32>
    %205 = arith.addf %182, %204 : vector<128x128xf32>
    %206 = vector.extract_strided_slice %20 {offsets = [0, 5], sizes = [128, 1], strides = [1, 1]} : vector<128x128xf32> to vector<128x1xf32>
    %207 = vector.extract_strided_slice %57 {offsets = [5, 0], sizes = [1, 128], strides = [1, 1]} : vector<128x128xf32> to vector<1x128xf32>
    %208 = vector.extract_strided_slice %61 {offsets = [5, 0], sizes = [1, 128], strides = [1, 1]} : vector<128x128xf32> to vector<1x128xf32>
    %209 = vector.broadcast %206 : vector<128x1xf32> to vector<128x128xf32>
    %210 = vector.broadcast %207 : vector<1x128xf32> to vector<128x128xf32>
    %211 = arith.addf %209, %210 : vector<128x128xf32>
    %cst_45 = arith.constant 5.000000e-01 : f32
    %212 = vector.broadcast %cst_45 : f32 to vector<128x128xf32>
    %213 = arith.mulf %212, %211 : vector<128x128xf32>
    %214 = vector.broadcast %206 : vector<128x1xf32> to vector<128x128xf32>
    %215 = vector.broadcast %208 : vector<1x128xf32> to vector<128x128xf32>
    %216 = arith.addf %214, %215 : vector<128x128xf32>
    %cst_46 = arith.constant 5.000000e-01 : f32
    %217 = vector.broadcast %cst_46 : f32 to vector<128x128xf32>
    %218 = arith.mulf %217, %216 : vector<128x128xf32>
    %cst_47 = arith.constant 1.000000e-30 : f32
    %219 = vector.broadcast %cst_47 : f32 to vector<128x128xf32>
    %220 = arith.maximumf %213, %219 : vector<128x128xf32>
    %221 = math.log %220 : vector<128x128xf32>
    %222 = arith.mulf %213, %221 : vector<128x128xf32>
    %223 = arith.addf %200, %222 : vector<128x128xf32>
    %cst_48 = arith.constant 1.000000e-30 : f32
    %224 = vector.broadcast %cst_48 : f32 to vector<128x128xf32>
    %225 = arith.maximumf %218, %224 : vector<128x128xf32>
    %226 = math.log %225 : vector<128x128xf32>
    %227 = arith.mulf %218, %226 : vector<128x128xf32>
    %228 = arith.addf %205, %227 : vector<128x128xf32>
    %229 = vector.extract_strided_slice %20 {offsets = [0, 6], sizes = [128, 1], strides = [1, 1]} : vector<128x128xf32> to vector<128x1xf32>
    %230 = vector.extract_strided_slice %57 {offsets = [6, 0], sizes = [1, 128], strides = [1, 1]} : vector<128x128xf32> to vector<1x128xf32>
    %231 = vector.extract_strided_slice %61 {offsets = [6, 0], sizes = [1, 128], strides = [1, 1]} : vector<128x128xf32> to vector<1x128xf32>
    %232 = vector.broadcast %229 : vector<128x1xf32> to vector<128x128xf32>
    %233 = vector.broadcast %230 : vector<1x128xf32> to vector<128x128xf32>
    %234 = arith.addf %232, %233 : vector<128x128xf32>
    %cst_49 = arith.constant 5.000000e-01 : f32
    %235 = vector.broadcast %cst_49 : f32 to vector<128x128xf32>
    %236 = arith.mulf %235, %234 : vector<128x128xf32>
    %237 = vector.broadcast %229 : vector<128x1xf32> to vector<128x128xf32>
    %238 = vector.broadcast %231 : vector<1x128xf32> to vector<128x128xf32>
    %239 = arith.addf %237, %238 : vector<128x128xf32>
    %cst_50 = arith.constant 5.000000e-01 : f32
    %240 = vector.broadcast %cst_50 : f32 to vector<128x128xf32>
    %241 = arith.mulf %240, %239 : vector<128x128xf32>
    %cst_51 = arith.constant 1.000000e-30 : f32
    %242 = vector.broadcast %cst_51 : f32 to vector<128x128xf32>
    %243 = arith.maximumf %236, %242 : vector<128x128xf32>
    %244 = math.log %243 : vector<128x128xf32>
    %245 = arith.mulf %236, %244 : vector<128x128xf32>
    %246 = arith.addf %223, %245 : vector<128x128xf32>
    %cst_52 = arith.constant 1.000000e-30 : f32
    %247 = vector.broadcast %cst_52 : f32 to vector<128x128xf32>
    %248 = arith.maximumf %241, %247 : vector<128x128xf32>
    %249 = math.log %248 : vector<128x128xf32>
    %250 = arith.mulf %241, %249 : vector<128x128xf32>
    %251 = arith.addf %228, %250 : vector<128x128xf32>
    %252 = vector.extract_strided_slice %20 {offsets = [0, 7], sizes = [128, 1], strides = [1, 1]} : vector<128x128xf32> to vector<128x1xf32>
    %253 = vector.extract_strided_slice %57 {offsets = [7, 0], sizes = [1, 128], strides = [1, 1]} : vector<128x128xf32> to vector<1x128xf32>
    %254 = vector.extract_strided_slice %61 {offsets = [7, 0], sizes = [1, 128], strides = [1, 1]} : vector<128x128xf32> to vector<1x128xf32>
    %255 = vector.broadcast %252 : vector<128x1xf32> to vector<128x128xf32>
    %256 = vector.broadcast %253 : vector<1x128xf32> to vector<128x128xf32>
    %257 = arith.addf %255, %256 : vector<128x128xf32>
    %cst_53 = arith.constant 5.000000e-01 : f32
    %258 = vector.broadcast %cst_53 : f32 to vector<128x128xf32>
    %259 = arith.mulf %258, %257 : vector<128x128xf32>
    %260 = vector.broadcast %252 : vector<128x1xf32> to vector<128x128xf32>
    %261 = vector.broadcast %254 : vector<1x128xf32> to vector<128x128xf32>
    %262 = arith.addf %260, %261 : vector<128x128xf32>
    %cst_54 = arith.constant 5.000000e-01 : f32
    %263 = vector.broadcast %cst_54 : f32 to vector<128x128xf32>
    %264 = arith.mulf %263, %262 : vector<128x128xf32>
    %cst_55 = arith.constant 1.000000e-30 : f32
    %265 = vector.broadcast %cst_55 : f32 to vector<128x128xf32>
    %266 = arith.maximumf %259, %265 : vector<128x128xf32>
    %267 = math.log %266 : vector<128x128xf32>
    %268 = arith.mulf %259, %267 : vector<128x128xf32>
    %269 = arith.addf %246, %268 : vector<128x128xf32>
    %cst_56 = arith.constant 1.000000e-30 : f32
    %270 = vector.broadcast %cst_56 : f32 to vector<128x128xf32>
    %271 = arith.maximumf %264, %270 : vector<128x128xf32>
    %272 = math.log %271 : vector<128x128xf32>
    %273 = arith.mulf %264, %272 : vector<128x128xf32>
    %274 = arith.addf %251, %273 : vector<128x128xf32>
    %275 = vector.shape_cast %78 : vector<128x128xf32> to vector<1x128x128xf32>
    %cst_57 = arith.constant dense<0.000000e+00> : vector<1xf32>
    %276 = vector.multi_reduction <add>, %275, %cst_57 [1, 2] : vector<1x128x128xf32> to vector<1xf32>
    %277 = vector.shape_cast %276 : vector<1xf32> to vector<1x1x1xf32>
    %278 = vector.extract %277[0, 0, 0] : f32 from vector<1x1x1xf32>
    %279 = vector.shape_cast %88 : vector<128x128xf32> to vector<1x128x128xf32>
    %cst_58 = arith.constant dense<0.000000e+00> : vector<1xf32>
    %280 = vector.multi_reduction <add>, %279, %cst_58 [1, 2] : vector<1x128x128xf32> to vector<1xf32>
    %281 = vector.shape_cast %280 : vector<1xf32> to vector<1x1x1xf32>
    %282 = vector.extract %281[0, 0, 0] : f32 from vector<1x1x1xf32>
    %cst_59 = arith.constant dense<0.000000e+00> : vector<128xf32>
    %283 = vector.multi_reduction <add>, %78, %cst_59 [1] : vector<128x128xf32> to vector<128xf32>
    %284 = vector.shape_cast %283 : vector<128xf32> to vector<128x1xf32>
    %cst_60 = arith.constant dense<0.000000e+00> : vector<128xf32>
    %285 = vector.multi_reduction <add>, %78, %cst_60 [0] : vector<128x128xf32> to vector<128xf32>
    %286 = vector.shape_cast %285 : vector<128xf32> to vector<1x128xf32>
    %287 = arith.mulf %23, %284 : vector<128x1xf32>
    %288 = vector.shape_cast %287 : vector<128x1xf32> to vector<1x128x1xf32>
    %cst_61 = arith.constant dense<0.000000e+00> : vector<1xf32>
    %289 = vector.multi_reduction <add>, %288, %cst_61 [1, 2] : vector<1x128x1xf32> to vector<1xf32>
    %290 = vector.shape_cast %289 : vector<1xf32> to vector<1x1x1xf32>
    %291 = vector.extract %290[0, 0, 0] : f32 from vector<1x1x1xf32>
    %292 = arith.mulf %60, %286 : vector<1x128xf32>
    %293 = vector.shape_cast %292 : vector<1x128xf32> to vector<1x1x128xf32>
    %cst_62 = arith.constant dense<0.000000e+00> : vector<1xf32>
    %294 = vector.multi_reduction <add>, %293, %cst_62 [1, 2] : vector<1x1x128xf32> to vector<1xf32>
    %295 = vector.shape_cast %294 : vector<1xf32> to vector<1x1x1xf32>
    %296 = vector.extract %295[0, 0, 0] : f32 from vector<1x1x1xf32>
    %297 = arith.addf %291, %296 : f32
    %cst_63 = arith.constant 5.000000e-01 : f32
    %298 = arith.mulf %cst_63, %297 : f32
    %299 = arith.mulf %78, %269 : vector<128x128xf32>
    %300 = vector.shape_cast %299 : vector<128x128xf32> to vector<1x128x128xf32>
    %cst_64 = arith.constant dense<0.000000e+00> : vector<1xf32>
    %301 = vector.multi_reduction <add>, %300, %cst_64 [1, 2] : vector<1x128x128xf32> to vector<1xf32>
    %302 = vector.shape_cast %301 : vector<1xf32> to vector<1x1x1xf32>
    %303 = vector.extract %302[0, 0, 0] : f32 from vector<1x1x1xf32>
    %304 = arith.subf %298, %303 : f32
    %305 = tpu.iota {dimensions = array<i32: 0>} : vector<128x1xi32>
    %c4_i32_65 = arith.constant 4 : i32
    %306 = vector.broadcast %c4_i32_65 : i32 to vector<128x1xi32>
    %307 = arith.cmpi slt, %305, %306 : vector<128x1xi32>
    %308 = arith.extui %307 : vector<128x1xi1> to vector<128x1xi32>
    %309 = arith.sitofp %308 : vector<128x1xi32> to vector<128x1xf32>
    %cst_66 = arith.constant dense<0.000000e+00> : vector<128xf32>
    %310 = vector.multi_reduction <add>, %84, %cst_66 [1] : vector<128x128xf32> to vector<128xf32>
    %311 = vector.shape_cast %310 : vector<128xf32> to vector<128x1xf32>
    %312 = arith.mulf %309, %23 : vector<128x1xf32>
    %cst_67 = arith.constant 1.000000e+00 : f32
    %313 = vector.broadcast %cst_67 : f32 to vector<128x1xf32>
    %314 = arith.subf %311, %313 : vector<128x1xf32>
    %315 = arith.mulf %312, %314 : vector<128x1xf32>
    %316 = vector.shape_cast %315 : vector<128x1xf32> to vector<1x128x1xf32>
    %cst_68 = arith.constant dense<0.000000e+00> : vector<1xf32>
    %317 = vector.multi_reduction <add>, %316, %cst_68 [1, 2] : vector<1x128x1xf32> to vector<1xf32>
    %318 = vector.shape_cast %317 : vector<1xf32> to vector<1x1x1xf32>
    %319 = vector.extract %318[0, 0, 0] : f32 from vector<1x1x1xf32>
    %cst_69 = arith.constant 5.000000e-01 : f32
    %320 = arith.mulf %cst_69, %319 : f32
    %321 = arith.mulf %88, %274 : vector<128x128xf32>
    %322 = vector.shape_cast %321 : vector<128x128xf32> to vector<1x128x128xf32>
    %cst_70 = arith.constant dense<0.000000e+00> : vector<1xf32>
    %323 = vector.multi_reduction <add>, %322, %cst_70 [1, 2] : vector<1x128x128xf32> to vector<1xf32>
    %324 = vector.shape_cast %323 : vector<1xf32> to vector<1x1x1xf32>
    %325 = vector.extract %324[0, 0, 0] : f32 from vector<1x1x1xf32>
    %326 = arith.subf %320, %325 : f32
    %cst_71 = arith.constant 0.000000e+00 : f32
    %327 = arith.cmpf ogt, %278, %cst_71 : f32
    %cst_72 = arith.constant 1.000000e+00 : f32
    %328 = arith.maximumf %278, %cst_72 : f32
    %329 = arith.divf %304, %328 : f32
    %cst_73 = arith.constant 0.000000e+00 : f32
    %330 = arith.select %327, %329, %cst_73 : f32
    %cst_74 = arith.constant 0.000000e+00 : f32
    %331 = arith.cmpf ogt, %282, %cst_74 : f32
    %cst_75 = arith.constant 1.000000e+00 : f32
    %332 = arith.maximumf %282, %cst_75 : f32
    %333 = arith.divf %326, %332 : f32
    %cst_76 = arith.constant 0.000000e+00 : f32
    %334 = arith.select %331, %333, %cst_76 : f32
    %335 = arith.addf %330, %334 : f32
    %cst_77 = arith.constant 1.000000e+02 : f32
    %336 = arith.mulf %cst_77, %335 : f32
    %c0_78 = arith.constant 0 : index
    %c0_79 = arith.constant 0 : index
    %337 = memref.load %arg5[%c0_78, %c0_79] : memref<1x1xf32, #tpu.memory_space<smem>>
    memref.store %336, %arg5[%c0_78, %c0_79] : memref<1x1xf32, #tpu.memory_space<smem>>
    return
  }
}

</mosaic_0001>

<llo_original>
// kernel: adversarial_loss_pdd.1
$region0: #{adversarial_loss_pdd.1}
  #allocation0 [shape = 'u32[]', space=smem, size = 0x4, offset = 0x4, fixed_abs, tag = 'smem constant byte address 0x4 - core index']
  #allocation1 [shape = 'u32[144,128]{1,0:T(1,128)}', space=vmem, size = 0x12000, scoped, tag = 'internal scratch']
  %s0 = inlined_call_operand.vmem [shape: f32[256,32], index: 0, kind: input, shape index: {}]
  %s1 = inlined_call_operand.vmem [shape: f32[32,128], index: 1, kind: input, shape index: {}]
  %s2 = inlined_call_operand.vmem [shape: f32[1,128], index: 2, kind: input, shape index: {}]
  %s3 = inlined_call_operand.vmem [shape: s32[128,1], index: 3, kind: input, shape index: {}]
  %s4 = inlined_call_operand.vmem [shape: s32[1,128], index: 4, kind: input, shape index: {}]
  %s5 = inlined_call_operand.hbm [shape: f32[1,1], index: 5, kind: output, shape index: {}]
  %s6 = sld [smem:[#allocation0]]
  $region30: #{adversarial_loss_pdd.1} parent=0
    _
  %s8 = ssub.s32 1, %s6
  %s9 = scalar_select 0, %s8, %s6
  $region1: #{adversarial_loss_pdd.1} parent=0
    #allocation2 [shape = 'u8[512]{0}', space=smem, size = 0x200, scoped, tag = 'output window, operand 0, single buffered']
    #allocation3 [shape = 's32[1]{0}', space=sflag, size = 0x4, scoped, tag = 'scoped memory for adversarial_loss_pdd.1']
    %10 = vsyncpa [#allocation3], 0
    // Predicated region
    $region2: #{adversarial_loss_pdd.1} parent=1 // pred_check
      _
    $region3: #{adversarial_loss_pdd.1} parent=1 // pred_check_branch
      %12 = sbr.rel (0) target = $region5
    $region4: #{adversarial_loss_pdd.1} parent=1 // pred_region
      _
    $region5: #{adversarial_loss_pdd.1} parent=1 // pred_fallthru
      _
    // Predicated region
    $region6: #{adversarial_loss_pdd.1} parent=1 // pred_check
      _
    $region7: #{adversarial_loss_pdd.1} parent=1 // pred_check_branch
      %14 = sbr.rel (0) target = $region9
    $region8: #{adversarial_loss_pdd.1} parent=1 // pred_region
      _
    $region9: #{adversarial_loss_pdd.1} parent=1 // pred_fallthru
      _
    // Predicated region
    $region10: #{adversarial_loss_pdd.1} parent=1 // pred_check
      _
    $region11: #{adversarial_loss_pdd.1} parent=1 // pred_check_branch
      %16 = sbr.rel (0) target = $region13
    $region12: #{adversarial_loss_pdd.1} parent=1 // pred_region
      _
    $region13: #{adversarial_loss_pdd.1} parent=1 // pred_fallthru
      _
    // Predicated region
    $region14: #{adversarial_loss_pdd.1} parent=1 // pred_check
      _
    $region15: #{adversarial_loss_pdd.1} parent=1 // pred_check_branch
      %18 = sbr.rel (0) target = $region17
    $region16: #{adversarial_loss_pdd.1} parent=1 // pred_region
      _
    $region17: #{adversarial_loss_pdd.1} parent=1 // pred_fallthru
      _
    // Predicated region
    $region18: #{adversarial_loss_pdd.1} parent=1 // pred_check
      _
    $region19: #{adversarial_loss_pdd.1} parent=1 // pred_check_branch
      %20 = sbr.rel (0) target = $region21
    $region20: #{adversarial_loss_pdd.1} parent=1 // pred_region
      _
    $region21: #{adversarial_loss_pdd.1} parent=1 // pred_fallthru
      _
    %v21 = vld [vmem:[%s0] sm:$0xff]
    %v22 = vld [vmem:[%s0 + $0x8] sm:$0xff]
    %v23 = vld [vmem:[%s0 + $0x10] sm:$0xff]
    %v24 = vld [vmem:[%s0 + $0x18] sm:$0xff]
    %v25 = vld [vmem:[%s0 + $0x20] sm:$0xff]
    %v26 = vld [vmem:[%s0 + $0x28] sm:$0xff]
    %v27 = vld [vmem:[%s0 + $0x30] sm:$0xff]
    %v28 = vld [vmem:[%s0 + $0x38] sm:$0xff]
    %v29 = vld [vmem:[%s0 + $0x40] sm:$0xff]
    %v30 = vld [vmem:[%s0 + $0x48] sm:$0xff]
    %v31 = vld [vmem:[%s0 + $0x50] sm:$0xff]
    %v32 = vld [vmem:[%s0 + $0x58] sm:$0xff]
    %v33 = vld [vmem:[%s0 + $0x60] sm:$0xff]
    %v34 = vld [vmem:[%s0 + $0x68] sm:$0xff]
    %v35 = vld [vmem:[%s0 + $0x70] sm:$0xff]
    %v36 = vld [vmem:[%s0 + $0x78] sm:$0xff]
    %v37 = vld [vmem:[%s0 + $0x80] sm:$0xff]
    %v38 = vld [vmem:[%s0 + $0x88] sm:$0xff]
    %v39 = vld [vmem:[%s0 + $0x90] sm:$0xff]
    %v40 = vld [vmem:[%s0 + $0x98] sm:$0xff]
    %v41 = vld [vmem:[%s0 + $0xa0] sm:$0xff]
    %v42 = vld [vmem:[%s0 + $0xa8] sm:$0xff]
    %v43 = vld [vmem:[%s0 + $0xb0] sm:$0xff]
    %v44 = vld [vmem:[%s0 + $0xb8] sm:$0xff]
    %v45 = vld [vmem:[%s0 + $0xc0] sm:$0xff]
    %v46 = vld [vmem:[%s0 + $0xc8] sm:$0xff]
    %v47 = vld [vmem:[%s0 + $0xd0] sm:$0xff]
    %v48 = vld [vmem:[%s0 + $0xd8] sm:$0xff]
    %v49 = vld [vmem:[%s0 + $0xe0] sm:$0xff]
    %v50 = vld [vmem:[%s0 + $0xe8] sm:$0xff]
    %v51 = vld [vmem:[%s0 + $0xf0] sm:$0xff]
    %v52 = vld [vmem:[%s0 + $0xf8] sm:$0xff]
    %v53 = vld [vmem:[%s1] sm:$0xff]
    %v54 = vld [vmem:[%s1 + $0x8] sm:$0xff]
    %v55 = vld [vmem:[%s1 + $0x10] sm:$0xff]
    %v56 = vld [vmem:[%s1 + $0x18] sm:$0xff]
    %v57 = vld [vmem:[%s2] sm:$0x1]
    %v59 = vlaneseq
    %v60 = vshrl.u32 %v59, 7
    %v61 = vsub.s32 0, %v60
    %v62 = vrot.slane %v57, %v61
    %vm64 = vcmask 261120
    %v66 = vsel %vm64, %v21, 0
    %v69 = vsel %vm64, %v22, 0
    %v72 = vsel %vm64, %v23, 0
    %v75 = vsel %vm64, %v24, 0
    %v78 = vsel %vm64, %v25, 0
    %v81 = vsel %vm64, %v26, 0
    %v84 = vsel %vm64, %v27, 0
    %v87 = vsel %vm64, %v28, 0
    %v90 = vsel %vm64, %v29, 0
    %v93 = vsel %vm64, %v30, 0
    %v96 = vsel %vm64, %v31, 0
    %v99 = vsel %vm64, %v32, 0
    %v102 = vsel %vm64, %v33, 0
    %v105 = vsel %vm64, %v34, 0
    %v108 = vsel %vm64, %v35, 0
    %v111 = vsel %vm64, %v36, 0
    %v114 = vsel %vm64, %v37, 0
    %v117 = vsel %vm64, %v38, 0
    %v120 = vsel %vm64, %v39, 0
    %v123 = vsel %vm64, %v40, 0
    %v126 = vsel %vm64, %v41, 0
    %v129 = vsel %vm64, %v42, 0
    %v132 = vsel %vm64, %v43, 0
    %v135 = vsel %vm64, %v44, 0
    %v138 = vsel %vm64, %v45, 0
    %v141 = vsel %vm64, %v46, 0
    %v144 = vsel %vm64, %v47, 0
    %v147 = vsel %vm64, %v48, 0
    %v150 = vsel %vm64, %v49, 0
    %v153 = vsel %vm64, %v50, 0
    %v156 = vsel %vm64, %v51, 0
    %v159 = vsel %vm64, %v52, 0
    %161 = vmatprep.subr.mxu0 0.0
    %162 = vmatpush1.msra.mxu0 %v53
    %163 = vmatprep.subr.mxu0 0.0
    %164 = vmatpush1.msra.mxu0 %v54
    %165 = vmatprep.subr.mxu0 0.0
    %166 = vmatpush1.msra.mxu0 %v55
    %167 = vmatprep.subr.mxu0 0.0
    %168 = vmatpush1.msra.mxu0 %v56
    %169 = vmatprep.subr.mxu0 0.0
    %170 = vmatpush1.msra.mxu0 0.0
    %171 = vmatprep.subr.mxu0 0.0
    %172 = vmatpush1.msra.mxu0 0.0
    %173 = vmatprep.subr.mxu0 0.0
    %174 = vmatpush1.msra.mxu0 0.0
    %175 = vmatprep.subr.mxu0 0.0
    %176 = vmatpush1.msra.mxu0 0.0
    %177 = vmatprep.subr.mxu0 0.0
    %178 = vmatpush1.msra.mxu0 0.0
    %179 = vmatprep.subr.mxu0 0.0
    %180 = vmatpush1.msra.mxu0 0.0
    %181 = vmatprep.subr.mxu0 0.0
    %182 = vmatpush1.msra.mxu0 0.0
    %183 = vmatprep.subr.mxu0 0.0
    %184 = vmatpush1.msra.mxu0 0.0
    %185 = vmatprep.subr.mxu0 0.0
    %186 = vmatpush1.msra.mxu0 0.0
    %187 = vmatprep.subr.mxu0 0.0
    %188 = vmatpush1.msra.mxu0 0.0
    %189 = vmatprep.subr.mxu0 0.0
    %190 = vmatpush1.msra.mxu0 0.0
    %191 = vmatprep.subr.mxu0 0.0
    %192 = vmatpush1.msra.mxu0 0.0
    %193 = vmatprep.subr.mxu0 0.0
    %194 = vmatpush1.msra.mxu0 0.0
    %195 = vmatprep.subr.mxu0 0.0
    %196 = vmatpush1.msra.mxu0 0.0
    %197 = vmatprep.subr.mxu0 0.0
    %198 = vmatpush1.msra.mxu0 0.0
    %199 = vmatprep.subr.mxu0 0.0
    %200 = vmatpush1.msra.mxu0 0.0
    %201 = vmatprep.subr.mxu0 0.0
    %202 = vmatpush1.msra.mxu0 0.0
    %203 = vmatprep.subr.mxu0 0.0
    %204 = vmatpush1.msra.mxu0 0.0
    %205 = vmatprep.subr.mxu0 0.0
    %206 = vmatpush1.msra.mxu0 0.0
    %207 = vmatprep.subr.mxu0 0.0
    %208 = vmatpush1.msra.mxu0 0.0
    %209 = vmatprep.subr.mxu0 0.0
    %210 = vmatpush1.msra.mxu0 0.0
    %211 = vmatprep.subr.mxu0 0.0
    %212 = vmatpush1.msra.mxu0 0.0
    %213 = vmatprep.subr.mxu0 0.0
    %214 = vmatpush1.msra.mxu0 0.0
    %215 = vmatprep.subr.mxu0 0.0
    %216 = vmatpush1.msra.mxu0 0.0
    %217 = vmatprep.subr.mxu0 0.0
    %218 = vmatpush1.msra.mxu0 0.0
    %219 = vmatprep.subr.mxu0 0.0
    %220 = vmatpush1.msra.mxu0 0.0
    %221 = vmatprep.subr.mxu0 0.0
    %222 = vmatpush1.msra.mxu0 0.0
    %223 = vmatprep.subr.mxu0 0.0
    %224 = vmatpush1.msra.mxu0 0.0
    %225 = vmatprep.mubr.f32.mxu0 0.0
    %226 = vmatmul.mubr.f32.gmra.mrb[0].mxu0 %v66
    %v227 = vpop.f32.mrb[0].mxu0
    %v228 = vadd.f32 %v62, %v227
    %v229 = vpop.f32.mrb[0].mxu0
    %230 = vmatprep.mubr.f32.mxu0 0.0
    %231 = vmatmul.mubr.f32.gmra.mrb[0].mxu0 %v69
    %v232 = vpop.f32.mrb[0].mxu0
    %v233 = vadd.f32 %v62, %v232
    %v234 = vpop.f32.mrb[0].mxu0
    %235 = vmatprep.mubr.f32.mxu0 0.0
    %236 = vmatmul.mubr.f32.gmra.mrb[0].mxu0 %v72
    %v237 = vpop.f32.mrb[0].mxu0
    %v238 = vadd.f32 %v62, %v237
    %v239 = vpop.f32.mrb[0].mxu0
    %240 = vmatprep.mubr.f32.mxu0 0.0
    %241 = vmatmul.mubr.f32.gmra.mrb[0].mxu0 %v75
    %v242 = vpop.f32.mrb[0].mxu0
    %v243 = vadd.f32 %v62, %v242
    %v244 = vpop.f32.mrb[0].mxu0
    %245 = vmatprep.mubr.f32.mxu0 0.0
    %246 = vmatmul.mubr.f32.gmra.mrb[0].mxu0 %v78
    %v247 = vpop.f32.mrb[0].mxu0
    %v248 = vadd.f32 %v62, %v247
    %v249 = vpop.f32.mrb[0].mxu0
    %250 = vmatprep.mubr.f32.mxu0 0.0
    %251 = vmatmul.mubr.f32.gmra.mrb[0].mxu0 %v81
    %v252 = vpop.f32.mrb[0].mxu0
    %v253 = vadd.f32 %v62, %v252
    %v254 = vpop.f32.mrb[0].mxu0
    %255 = vmatprep.mubr.f32.mxu0 0.0
    %256 = vmatmul.mubr.f32.gmra.mrb[0].mxu0 %v84
    %v257 = vpop.f32.mrb[0].mxu0
    %v258 = vadd.f32 %v62, %v257
    %v259 = vpop.f32.mrb[0].mxu0
    %260 = vmatprep.mubr.f32.mxu0 0.0
    %261 = vmatmul.mubr.f32.gmra.mrb[0].mxu0 %v87
    %v262 = vpop.f32.mrb[0].mxu0
    %v263 = vadd.f32 %v62, %v262
    %v264 = vpop.f32.mrb[0].mxu0
    %265 = vmatprep.mubr.f32.mxu0 0.0
    %266 = vmatmul.mubr.f32.gmra.mrb[0].mxu0 %v90
    %v267 = vpop.f32.mrb[0].mxu0
    %v268 = vadd.f32 %v62, %v267
    %v269 = vpop.f32.mrb[0].mxu0
    %270 = vmatprep.mubr.f32.mxu0 0.0
    %271 = vmatmul.mubr.f32.gmra.mrb[0].mxu0 %v93
    %v272 = vpop.f32.mrb[0].mxu0
    %v273 = vadd.f32 %v62, %v272
    %v274 = vpop.f32.mrb[0].mxu0
    %275 = vmatprep.mubr.f32.mxu0 0.0
    %276 = vmatmul.mubr.f32.gmra.mrb[0].mxu0 %v96
    %v277 = vpop.f32.mrb[0].mxu0
    %v278 = vadd.f32 %v62, %v277
    %v279 = vpop.f32.mrb[0].mxu0
    %280 = vmatprep.mubr.f32.mxu0 0.0
    %281 = vmatmul.mubr.f32.gmra.mrb[0].mxu0 %v99
    %v282 = vpop.f32.mrb[0].mxu0
    %v283 = vadd.f32 %v62, %v282
    %v284 = vpop.f32.mrb[0].mxu0
    %285 = vmatprep.mubr.f32.mxu0 0.0
    %286 = vmatmul.mubr.f32.gmra.mrb[0].mxu0 %v102
    %v287 = vpop.f32.mrb[0].mxu0
    %v288 = vadd.f32 %v62, %v287
    %v289 = vpop.f32.mrb[0].mxu0
    %290 = vmatprep.mubr.f32.mxu0 0.0
    %291 = vmatmul.mubr.f32.gmra.mrb[0].mxu0 %v105
    %v292 = vpop.f32.mrb[0].mxu0
    %v293 = vadd.f32 %v62, %v292
    %v294 = vpop.f32.mrb[0].mxu0
    %295 = vmatprep.mubr.f32.mxu0 0.0
    %296 = vmatmul.mubr.f32.gmra.mrb[0].mxu0 %v108
    %v297 = vpop.f32.mrb[0].mxu0
    %v298 = vadd.f32 %v62, %v297
    %v299 = vpop.f32.mrb[0].mxu0
    %300 = vmatprep.mubr.f32.mxu0 0.0
    %301 = vmatmul.mubr.f32.gmra.mrb[0].mxu0 %v111
    %v302 = vpop.f32.mrb[0].mxu0
    %v303 = vadd.f32 %v62, %v302
    %v304 = vpop.f32.mrb[0].mxu0
    %305 = vmatprep.mubr.f32.mxu0 0.0
    %306 = vmatmul.mubr.f32.gmra.mrb[0].mxu0 %v114
    %v307 = vpop.f32.mrb[0].mxu0
    %v308 = vadd.f32 %v62, %v307
    %v309 = vpop.f32.mrb[0].mxu0
    %310 = vmatprep.mubr.f32.mxu0 0.0
    %311 = vmatmul.mubr.f32.gmra.mrb[0].mxu0 %v117
    %v312 = vpop.f32.mrb[0].mxu0
    %v313 = vadd.f32 %v62, %v312
    %v314 = vpop.f32.mrb[0].mxu0
    %315 = vmatprep.mubr.f32.mxu0 0.0
    %316 = vmatmul.mubr.f32.gmra.mrb[0].mxu0 %v120
    %v317 = vpop.f32.mrb[0].mxu0
    %v318 = vadd.f32 %v62, %v317
    %v319 = vpop.f32.mrb[0].mxu0
    %320 = vmatprep.mubr.f32.mxu0 0.0
    %321 = vmatmul.mubr.f32.gmra.mrb[0].mxu0 %v123
    %v322 = vpop.f32.mrb[0].mxu0
    %v323 = vadd.f32 %v62, %v322
    %v324 = vpop.f32.mrb[0].mxu0
    %325 = vmatprep.mubr.f32.mxu0 0.0
    %326 = vmatmul.mubr.f32.gmra.mrb[0].mxu0 %v126
    %v327 = vpop.f32.mrb[0].mxu0
    %v328 = vadd.f32 %v62, %v327
    %v329 = vpop.f32.mrb[0].mxu0
    %330 = vmatprep.mubr.f32.mxu0 0.0
    %331 = vmatmul.mubr.f32.gmra.mrb[0].mxu0 %v129
    %v332 = vpop.f32.mrb[0].mxu0
    %v333 = vadd.f32 %v62, %v332
    %v334 = vpop.f32.mrb[0].mxu0
    %335 = vmatprep.mubr.f32.mxu0 0.0
    %336 = vmatmul.mubr.f32.gmra.mrb[0].mxu0 %v132
    %v337 = vpop.f32.mrb[0].mxu0
    %v338 = vadd.f32 %v62, %v337
    %v339 = vpop.f32.mrb[0].mxu0
    %340 = vmatprep.mubr.f32.mxu0 0.0
    %341 = vmatmul.mubr.f32.gmra.mrb[0].mxu0 %v135
    %v342 = vpop.f32.mrb[0].mxu0
    %v343 = vadd.f32 %v62, %v342
    %v344 = vpop.f32.mrb[0].mxu0
    %345 = vmatprep.mubr.f32.mxu0 0.0
    %346 = vmatmul.mubr.f32.gmra.mrb[0].mxu0 %v138
    %v347 = vpop.f32.mrb[0].mxu0
    %v348 = vadd.f32 %v62, %v347
    %v349 = vpop.f32.mrb[0].mxu0
    %350 = vmatprep.mubr.f32.mxu0 0.0
    %351 = vmatmul.mubr.f32.gmra.mrb[0].mxu0 %v141
    %v352 = vpop.f32.mrb[0].mxu0
    %v353 = vadd.f32 %v62, %v352
    %v354 = vpop.f32.mrb[0].mxu0
    %355 = vmatprep.mubr.f32.mxu0 0.0
    %356 = vmatmul.mubr.f32.gmra.mrb[0].mxu0 %v144
    %v357 = vpop.f32.mrb[0].mxu0
    %v358 = vadd.f32 %v62, %v357
    %v359 = vpop.f32.mrb[0].mxu0
    %360 = vmatprep.mubr.f32.mxu0 0.0
    %361 = vmatmul.mubr.f32.gmra.mrb[0].mxu0 %v147
    %v362 = vpop.f32.mrb[0].mxu0
    %v363 = vadd.f32 %v62, %v362
    %v364 = vpop.f32.mrb[0].mxu0
    %365 = vmatprep.mubr.f32.mxu0 0.0
    %366 = vmatmul.mubr.f32.gmra.mrb[0].mxu0 %v150
    %v367 = vpop.f32.mrb[0].mxu0
    %v368 = vadd.f32 %v62, %v367
    %v369 = vpop.f32.mrb[0].mxu0
    %370 = vmatprep.mubr.f32.mxu0 0.0
    %371 = vmatmul.mubr.f32.gmra.mrb[0].mxu0 %v153
    %v372 = vpop.f32.mrb[0].mxu0
    %v373 = vadd.f32 %v62, %v372
    %v374 = vpop.f32.mrb[0].mxu0
    %375 = vmatprep.mubr.f32.mxu0 0.0
    %376 = vmatmul.mubr.f32.gmra.mrb[0].mxu0 %v156
    %v377 = vpop.f32.mrb[0].mxu0
    %v378 = vadd.f32 %v62, %v377
    %v379 = vpop.f32.mrb[0].mxu0
    %380 = vmatprep.mubr.f32.mxu0 0.0
    %381 = vmatmul.mubr.f32.gmra.mrb[0].mxu0 %v159
    %v382 = vpop.f32.mrb[0].mxu0
    %v383 = vadd.f32 %v62, %v382
    %v384 = vpop.f32.mrb[0].mxu0
    %385 = vdwg.mxu0
    %v386 = vmul.f32 %v228, 0.1
    %v387 = vmul.f32 %v233, 0.1
    %v388 = vmul.f32 %v238, 0.1
    %v389 = vmul.f32 %v243, 0.1
    %v390 = vmul.f32 %v248, 0.1
    %v391 = vmul.f32 %v253, 0.1
    %v392 = vmul.f32 %v258, 0.1
    %v393 = vmul.f32 %v263, 0.1
    %v394 = vmul.f32 %v268, 0.1
    %v395 = vmul.f32 %v273, 0.1
    %v396 = vmul.f32 %v278, 0.1
    %v397 = vmul.f32 %v283, 0.1
    %v398 = vmul.f32 %v288, 0.1
    %v399 = vmul.f32 %v293, 0.1
    %v400 = vmul.f32 %v298, 0.1
    %v401 = vmul.f32 %v303, 0.1
    %402 = vmax.xlane.f32.xlu0 %v386
    %v403 = vpop.xlane.xlu0 %402
    %404 = vmax.xlane.f32.xlu0 %v387
    %v405 = vpop.xlane.xlu0 %404
    %406 = vmax.xlane.f32.xlu0 %v388
    %v407 = vpop.xlane.xlu0 %406
    %408 = vmax.xlane.f32.xlu0 %v389
    %v409 = vpop.xlane.xlu0 %408
    %410 = vmax.xlane.f32.xlu0 %v390
    %v411 = vpop.xlane.xlu0 %410
    %412 = vmax.xlane.f32.xlu0 %v391
    %v413 = vpop.xlane.xlu0 %412
    %414 = vmax.xlane.f32.xlu0 %v392
    %v415 = vpop.xlane.xlu0 %414
    %416 = vmax.xlane.f32.xlu0 %v393
    %v417 = vpop.xlane.xlu0 %416
    %418 = vmax.xlane.f32.xlu0 %v394
    %v419 = vpop.xlane.xlu0 %418
    %420 = vmax.xlane.f32.xlu0 %v395
    %v421 = vpop.xlane.xlu0 %420
    %422 = vmax.xlane.f32.xlu0 %v396
    %v423 = vpop.xlane.xlu0 %422
    %424 = vmax.xlane.f32.xlu0 %v397
    %v425 = vpop.xlane.xlu0 %424
    %426 = vmax.xlane.f32.xlu0 %v398
    %v427 = vpop.xlane.xlu0 %426
    %428 = vmax.xlane.f32.xlu0 %v399
    %v429 = vpop.xlane.xlu0 %428
    %430 = vmax.xlane.f32.xlu0 %v400
    %v431 = vpop.xlane.xlu0 %430
    %432 = vmax.xlane.f32.xlu0 %v401
    %v433 = vpop.xlane.xlu0 %432
    %v434 = vsub.f32 %v386, %v403
    %v435 = vsub.f32 %v387, %v405
    %v436 = vsub.f32 %v388, %v407
    %v437 = vsub.f32 %v389, %v409
    %v438 = vsub.f32 %v390, %v411
    %v439 = vsub.f32 %v391, %v413
    %v440 = vsub.f32 %v392, %v415
    %v441 = vsub.f32 %v393, %v417
    %v442 = vsub.f32 %v394, %v419
    %v443 = vsub.f32 %v395, %v421
    %v444 = vsub.f32 %v396, %v423
    %v445 = vsub.f32 %v397, %v425
    %v446 = vsub.f32 %v398, %v427
    %v447 = vsub.f32 %v399, %v429
    %v448 = vsub.f32 %v400, %v431
    %v449 = vsub.f32 %v401, %v433
    %v450 = vmul.f32 %v434, 1.442695
    %v451 = vpow.pop %v450
    %v452 = vmul.f32 %v435, 1.442695
    %v453 = vpow.pop %v452
    %v454 = vmul.f32 %v436, 1.442695
    %v455 = vpow.pop %v454
    %v456 = vmul.f32 %v437, 1.442695
    %v457 = vpow.pop %v456
    %v458 = vmul.f32 %v438, 1.442695
    %v459 = vpow.pop %v458
    %v460 = vmul.f32 %v439, 1.442695
    %v461 = vpow.pop %v460
    %v462 = vmul.f32 %v440, 1.442695
    %v463 = vpow.pop %v462
    %v464 = vmul.f32 %v441, 1.442695
    %v465 = vpow.pop %v464
    %v466 = vmul.f32 %v442, 1.442695
    %v467 = vpow.pop %v466
    %v468 = vmul.f32 %v443, 1.442695
    %v469 = vpow.pop %v468
    %v470 = vmul.f32 %v444, 1.442695
    %v471 = vpow.pop %v470
    %v472 = vmul.f32 %v445, 1.442695
    %v473 = vpow.pop %v472
    %v474 = vmul.f32 %v446, 1.442695
    %v475 = vpow.pop %v474
    %v476 = vmul.f32 %v447, 1.442695
    %v477 = vpow.pop %v476
    %v478 = vmul.f32 %v448, 1.442695
    %v479 = vpow.pop %v478
    %v480 = vmul.f32 %v449, 1.442695
    %v481 = vpow.pop %v480
    %482 = vadd.xlane.f32.xlu0 %v451
    %v483 = vpop.xlane.xlu0 %482
    %484 = vadd.xlane.f32.xlu0 %v453
    %v485 = vpop.xlane.xlu0 %484
    %486 = vadd.xlane.f32.xlu0 %v455
    %v487 = vpop.xlane.xlu0 %486
    %488 = vadd.xlane.f32.xlu0 %v457
    %v489 = vpop.xlane.xlu0 %488
    %490 = vadd.xlane.f32.xlu0 %v459
    %v491 = vpop.xlane.xlu0 %490
    %492 = vadd.xlane.f32.xlu0 %v461
    %v493 = vpop.xlane.xlu0 %492
    %494 = vadd.xlane.f32.xlu0 %v463
    %v495 = vpop.xlane.xlu0 %494
    %496 = vadd.xlane.f32.xlu0 %v465
    %v497 = vpop.xlane.xlu0 %496
    %498 = vadd.xlane.f32.xlu0 %v467
    %v499 = vpop.xlane.xlu0 %498
    %500 = vadd.xlane.f32.xlu0 %v469
    %v501 = vpop.xlane.xlu0 %500
    %502 = vadd.xlane.f32.xlu0 %v471
    %v503 = vpop.xlane.xlu0 %502
    %504 = vadd.xlane.f32.xlu0 %v473
    %v505 = vpop.xlane.xlu0 %504
    %506 = vadd.xlane.f32.xlu0 %v475
    %v507 = vpop.xlane.xlu0 %506
    %508 = vadd.xlane.f32.xlu0 %v477
    %v509 = vpop.xlane.xlu0 %508
    %510 = vadd.xlane.f32.xlu0 %v479
    %v511 = vpop.xlane.xlu0 %510
    %512 = vadd.xlane.f32.xlu0 %v481
    %v513 = vpop.xlane.xlu0 %512
    %v514 = vlog2.pop %v483
    %v515 = vmul.f32 %v514, 0.6931472
    %v516 = vlog2.pop %v485
    %v517 = vmul.f32 %v516, 0.6931472
    %v518 = vlog2.pop %v487
    %v519 = vmul.f32 %v518, 0.6931472
    %v520 = vlog2.pop %v489
    %v521 = vmul.f32 %v520, 0.6931472
    %v522 = vlog2.pop %v491
    %v523 = vmul.f32 %v522, 0.6931472
    %v524 = vlog2.pop %v493
    %v525 = vmul.f32 %v524, 0.6931472
    %v526 = vlog2.pop %v495
    %v527 = vmul.f32 %v526, 0.6931472
    %v528 = vlog2.pop %v497
    %v529 = vmul.f32 %v528, 0.6931472
    %v530 = vlog2.pop %v499
    %v531 = vmul.f32 %v530, 0.6931472
    %v532 = vlog2.pop %v501
    %v533 = vmul.f32 %v532, 0.6931472
    %v534 = vlog2.pop %v503
    %v535 = vmul.f32 %v534, 0.6931472
    %v536 = vlog2.pop %v505
    %v537 = vmul.f32 %v536, 0.6931472
    %v538 = vlog2.pop %v507
    %v539 = vmul.f32 %v538, 0.6931472
    %v540 = vlog2.pop %v509
    %v541 = vmul.f32 %v540, 0.6931472
    %v542 = vlog2.pop %v511
    %v543 = vmul.f32 %v542, 0.6931472
    %v544 = vlog2.pop %v513
    %v545 = vmul.f32 %v544, 0.6931472
    %v546 = vsub.f32 %v434, %v515
    %v547 = vsub.f32 %v435, %v517
    %v548 = vsub.f32 %v436, %v519
    %v549 = vsub.f32 %v437, %v521
    %v550 = vsub.f32 %v438, %v523
    %v551 = vsub.f32 %v439, %v525
    %v552 = vsub.f32 %v440, %v527
    %v553 = vsub.f32 %v441, %v529
    %v554 = vsub.f32 %v442, %v531
    %v555 = vsub.f32 %v443, %v533
    %v556 = vsub.f32 %v444, %v535
    %v557 = vsub.f32 %v445, %v537
    %v558 = vsub.f32 %v446, %v539
    %v559 = vsub.f32 %v447, %v541
    %v560 = vsub.f32 %v448, %v543
    %v561 = vsub.f32 %v449, %v545
    %v562 = vmul.f32 %v546, 1.442695
    %v563 = vpow.pop %v562
    %v564 = vmul.f32 %v547, 1.442695
    %v565 = vpow.pop %v564
    %v566 = vmul.f32 %v548, 1.442695
    %v567 = vpow.pop %v566
    %v568 = vmul.f32 %v549, 1.442695
    %v569 = vpow.pop %v568
    %v570 = vmul.f32 %v550, 1.442695
    %v571 = vpow.pop %v570
    %v572 = vmul.f32 %v551, 1.442695
    %v573 = vpow.pop %v572
    %v574 = vmul.f32 %v552, 1.442695
    %v575 = vpow.pop %v574
    %v576 = vmul.f32 %v553, 1.442695
    %v577 = vpow.pop %v576
    %v578 = vmul.f32 %v554, 1.442695
    %v579 = vpow.pop %v578
    %v580 = vmul.f32 %v555, 1.442695
    %v581 = vpow.pop %v580
    %v582 = vmul.f32 %v556, 1.442695
    %v583 = vpow.pop %v582
    %v584 = vmul.f32 %v557, 1.442695
    %v585 = vpow.pop %v584
    %v586 = vmul.f32 %v558, 1.442695
    %v587 = vpow.pop %v586
    %v588 = vmul.f32 %v559, 1.442695
    %v589 = vpow.pop %v588
    %v590 = vmul.f32 %v560, 1.442695
    %v591 = vpow.pop %v590
    %v592 = vmul.f32 %v561, 1.442695
    %v593 = vpow.pop %v592
    %v594 = vmul.f32 %v563, %v546
    %v595 = vmul.f32 %v565, %v547
    %v596 = vmul.f32 %v567, %v548
    %v597 = vmul.f32 %v569, %v549
    %v598 = vmul.f32 %v571, %v550
    %v599 = vmul.f32 %v573, %v551
    %v600 = vmul.f32 %v575, %v552
    %v601 = vmul.f32 %v577, %v553
    %v602 = vmul.f32 %v579, %v554
    %v603 = vmul.f32 %v581, %v555
    %v604 = vmul.f32 %v583, %v556
    %v605 = vmul.f32 %v585, %v557
    %v606 = vmul.f32 %v587, %v558
    %v607 = vmul.f32 %v589, %v559
    %v608 = vmul.f32 %v591, %v560
    %v609 = vmul.f32 %v593, %v561
    %610 = vadd.xlane.f32.xlu0 %v594
    %v611 = vpop.xlane.xlu0 %610
    %612 = vadd.xlane.f32.xlu0 %v595
    %v613 = vpop.xlane.xlu0 %612
    %614 = vadd.xlane.f32.xlu0 %v596
    %v615 = vpop.xlane.xlu0 %614
    %616 = vadd.xlane.f32.xlu0 %v597
    %v617 = vpop.xlane.xlu0 %616
    %618 = vadd.xlane.f32.xlu0 %v598
    %v619 = vpop.xlane.xlu0 %618
    %620 = vadd.xlane.f32.xlu0 %v599
    %v621 = vpop.xlane.xlu0 %620
    %622 = vadd.xlane.f32.xlu0 %v600
    %v623 = vpop.xlane.xlu0 %622
    %624 = vadd.xlane.f32.xlu0 %v601
    %v625 = vpop.xlane.xlu0 %624
    %626 = vadd.xlane.f32.xlu0 %v602
    %v627 = vpop.xlane.xlu0 %626
    %628 = vadd.xlane.f32.xlu0 %v603
    %v629 = vpop.xlane.xlu0 %628
    %630 = vadd.xlane.f32.xlu0 %v604
    %v631 = vpop.xlane.xlu0 %630
    %632 = vadd.xlane.f32.xlu0 %v605
    %v633 = vpop.xlane.xlu0 %632
    %634 = vadd.xlane.f32.xlu0 %v606
    %v635 = vpop.xlane.xlu0 %634
    %636 = vadd.xlane.f32.xlu0 %v607
    %v637 = vpop.xlane.xlu0 %636
    %638 = vadd.xlane.f32.xlu0 %v608
    %v639 = vpop.xlane.xlu0 %638
    %640 = vadd.xlane.f32.xlu0 %v609
    %v641 = vpop.xlane.xlu0 %640
    %642 = vxpose.xlu0.b32.start [1/16] %v308, 128
    %643 = vxpose.xlu0.b32.cont [2/16] %v313, 128
    %644 = vxpose.xlu0.b32.cont [3/16] %v318, 128
    %645 = vxpose.xlu0.b32.cont [4/16] %v323, 128
    %646 = vxpose.xlu0.b32.cont [5/16] %v328, 128
    %647 = vxpose.xlu0.b32.cont [6/16] %v333, 128
    %648 = vxpose.xlu0.b32.cont [7/16] %v338, 128
    %649 = vxpose.xlu0.b32.cont [8/16] %v343, 128
    %650 = vxpose.xlu0.b32.cont [9/16] %v348, 128
    %651 = vxpose.xlu0.b32.cont [10/16] %v353, 128
    %652 = vxpose.xlu0.b32.cont [11/16] %v358, 128
    %653 = vxpose.xlu0.b32.cont [12/16] %v363, 128
    %654 = vxpose.xlu0.b32.cont [13/16] %v368, 128
    %655 = vxpose.xlu0.b32.cont [14/16] %v373, 128
    %656 = vxpose.xlu0.b32.cont [15/16] %v378, 128
    %657 = vxpose.xlu0.b32.end [16/16] %v383, 128
    %v658 = vpop.trf.xlu0
    %v659 = vpop.trf.xlu0
    %v660 = vpop.trf.xlu0
    %v661 = vpop.trf.xlu0
    %v662 = vpop.trf.xlu0
    %v663 = vpop.trf.xlu0
    %v664 = vpop.trf.xlu0
    %v665 = vpop.trf.xlu0
    %v666 = vpop.trf.xlu0
    %v667 = vpop.trf.xlu0
    %v668 = vpop.trf.xlu0
    %v669 = vpop.trf.xlu0
    %v670 = vpop.trf.xlu0
    %v671 = vpop.trf.xlu0
    %v672 = vpop.trf.xlu0
    %v673 = vpop.trf.xlu0
    %v674 = vmax.f32 %v658, %v662
    %v675 = vmax.f32 %v659, %v663
    %v676 = vmax.f32 %v660, %v664
    %v677 = vmax.f32 %v661, %v665
    %v678 = vmax.f32 %v674, %v666
    %v679 = vmax.f32 %v675, %v667
    %v680 = vmax.f32 %v676, %v668
    %v681 = vmax.f32 %v677, %v669
    %v682 = vmax.f32 %v678, %v670
    %v683 = vmax.f32 %v679, %v671
    %v684 = vmax.f32 %v680, %v672
    %v685 = vmax.f32 %v681, %v673
    %v686 = vmax.f32 %v682, %v683
    %v687 = vmax.f32 %v684, %v685
    %v688 = vmax.f32 %v686, %v687
    %v689 = vrot.slane %v688, 4
    %v690 = vmax.f32 %v688, %v689
    %v691 = vrot.slane %v690, 2
    %v692 = vmax.f32 %v690, %v691
    %v693 = vrot.slane %v692, 1
    %v694 = vmax.f32 %v692, %v693
    %v695 = vsub.f32 %v658, %v694
    %v696 = vsub.f32 %v659, %v694
    %v697 = vsub.f32 %v660, %v694
    %v698 = vsub.f32 %v661, %v694
    %v699 = vsub.f32 %v662, %v694
    %v700 = vsub.f32 %v663, %v694
    %v701 = vsub.f32 %v664, %v694
    %v702 = vsub.f32 %v665, %v694
    %v703 = vsub.f32 %v666, %v694
    %v704 = vsub.f32 %v667, %v694
    %v705 = vsub.f32 %v668, %v694
    %v706 = vsub.f32 %v669, %v694
    %v707 = vsub.f32 %v670, %v694
    %v708 = vsub.f32 %v671, %v694
    %v709 = vsub.f32 %v672, %v694
    %v710 = vsub.f32 %v673, %v694
    %v711 = vmul.f32 %v695, 1.442695
    %v712 = vpow.pop %v711
    %v713 = vmul.f32 %v696, 1.442695
    %v714 = vpow.pop %v713
    %v715 = vmul.f32 %v697, 1.442695
    %v716 = vpow.pop %v715
    %v717 = vmul.f32 %v698, 1.442695
    %v718 = vpow.pop %v717
    %v719 = vmul.f32 %v699, 1.442695
    %v720 = vpow.pop %v719
    %v721 = vmul.f32 %v700, 1.442695
    %v722 = vpow.pop %v721
    %v723 = vmul.f32 %v701, 1.442695
    %v724 = vpow.pop %v723
    %v725 = vmul.f32 %v702, 1.442695
    %v726 = vpow.pop %v725
    %v727 = vmul.f32 %v703, 1.442695
    %v728 = vpow.pop %v727
    %v729 = vmul.f32 %v704, 1.442695
    %v730 = vpow.pop %v729
    %v731 = vmul.f32 %v705, 1.442695
    %v732 = vpow.pop %v731
    %v733 = vmul.f32 %v706, 1.442695
    %v734 = vpow.pop %v733
    %v735 = vmul.f32 %v707, 1.442695
    %v736 = vpow.pop %v735
    %v737 = vmul.f32 %v708, 1.442695
    %v738 = vpow.pop %v737
    %v739 = vmul.f32 %v709, 1.442695
    %v740 = vpow.pop %v739
    %v741 = vmul.f32 %v710, 1.442695
    %v742 = vpow.pop %v741
    %v743 = vadd.f32 %v712, %v714
    %v744 = vadd.f32 %v743, %v716
    %v745 = vadd.f32 %v744, %v718
    %v746 = vadd.f32 %v745, %v720
    %v747 = vadd.f32 %v746, %v722
    %v748 = vadd.f32 %v747, %v724
    %v749 = vadd.f32 %v748, %v726
    %v750 = vadd.f32 %v749, %v728
    %v751 = vadd.f32 %v750, %v730
    %v752 = vadd.f32 %v751, %v732
    %v753 = vadd.f32 %v752, %v734
    %v754 = vadd.f32 %v753, %v736
    %v755 = vadd.f32 %v754, %v738
    %v756 = vadd.f32 %v755, %v740
    %v757 = vadd.f32 %v756, %v742
    %v758 = vrot.slane %v757, 4
    %v759 = vadd.f32 %v757, %v758
    %v760 = vrot.slane %v759, 2
    %v761 = vadd.f32 %v759, %v760
    %v762 = vrot.slane %v761, 1
    %v763 = vadd.f32 %v761, %v762
    %vm764 = vcmp.le.f32.partialorder %v763, 1.25
    %v765 = vsel %vm764, 1, 0
    %v766 = vcvt.s32.f32 %v765
    %v767 = vlaneseq
    %v768 = vshrl.u32 %v767, 7
    %v769 = vadd.s32 %v768, 8
    %v770 = vadd.s32 %v768, 16
    %v771 = vadd.s32 %v768, 24
    %v772 = vadd.s32 %v768, 32
    %v773 = vadd.s32 %v768, 40
    %v774 = vadd.s32 %v768, 48
    %v775 = vadd.s32 %v768, 56
    %v776 = vadd.s32 %v768, 64
    %v777 = vadd.s32 %v768, 72
    %v778 = vadd.s32 %v768, 80
    %v779 = vadd.s32 %v768, 88
    %v780 = vadd.s32 %v768, 96
    %v781 = vadd.s32 %v768, 104
    %v782 = vadd.s32 %v768, 112
    %v783 = vadd.s32 %v768, 120
    %v784 = vcvt.s32.f32 %v768
    %v785 = vcvt.s32.f32 %v769
    %v786 = vcvt.s32.f32 %v770
    %v787 = vcvt.s32.f32 %v771
    %v788 = vcvt.s32.f32 %v772
    %v789 = vcvt.s32.f32 %v773
    %v790 = vcvt.s32.f32 %v774
    %v791 = vcvt.s32.f32 %v775
    %v792 = vcvt.s32.f32 %v776
    %v793 = vcvt.s32.f32 %v777
    %v794 = vcvt.s32.f32 %v778
    %v795 = vcvt.s32.f32 %v779
    %v796 = vcvt.s32.f32 %v780
    %v797 = vcvt.s32.f32 %v781
    %v798 = vcvt.s32.f32 %v782
    %v799 = vcvt.s32.f32 %v783
    %vm800 = vcmp.ge.f32.partialorder %v658, %v694
    %vm801 = vcmp.ge.f32.partialorder %v659, %v694
    %vm802 = vcmp.ge.f32.partialorder %v660, %v694
    %vm803 = vcmp.ge.f32.partialorder %v661, %v694
    %vm804 = vcmp.ge.f32.partialorder %v662, %v694
    %vm805 = vcmp.ge.f32.partialorder %v663, %v694
    %vm806 = vcmp.ge.f32.partialorder %v664, %v694
    %vm807 = vcmp.ge.f32.partialorder %v665, %v694
    %vm808 = vcmp.ge.f32.partialorder %v666, %v694
    %vm809 = vcmp.ge.f32.partialorder %v667, %v694
    %vm810 = vcmp.ge.f32.partialorder %v668, %v694
    %vm811 = vcmp.ge.f32.partialorder %v669, %v694
    %vm812 = vcmp.ge.f32.partialorder %v670, %v694
    %vm813 = vcmp.ge.f32.partialorder %v671, %v694
    %vm814 = vcmp.ge.f32.partialorder %v672, %v694
    %vm815 = vcmp.ge.f32.partialorder %v673, %v694
    %v816 = vsel %vm800, %v784, 128.0
    %v817 = vsel %vm801, %v785, 128.0
    %v818 = vsel %vm802, %v786, 128.0
    %v819 = vsel %vm803, %v787, 128.0
    %v820 = vsel %vm804, %v788, 128.0
    %v821 = vsel %vm805, %v789, 128.0
    %v822 = vsel %vm806, %v790, 128.0
    %v823 = vsel %vm807, %v791, 128.0
    %v824 = vsel %vm808, %v792, 128.0
    %v825 = vsel %vm809, %v793, 128.0
    %v826 = vsel %vm810, %v794, 128.0
    %v827 = vsel %vm811, %v795, 128.0
    %v828 = vsel %vm812, %v796, 128.0
    %v829 = vsel %vm813, %v797, 128.0
    %v830 = vsel %vm814, %v798, 128.0
    %v831 = vsel %vm815, %v799, 128.0
    %v832 = vmin.f32 %v816, %v820
    %v833 = vmin.f32 %v817, %v821
    %v834 = vmin.f32 %v818, %v822
    %v835 = vmin.f32 %v819, %v823
    %v836 = vmin.f32 %v832, %v824
    %v837 = vmin.f32 %v833, %v825
    %v838 = vmin.f32 %v834, %v826
    %v839 = vmin.f32 %v835, %v827
    %v840 = vmin.f32 %v836, %v828
    %v841 = vmin.f32 %v837, %v829
    %v842 = vmin.f32 %v838, %v830
    %v843 = vmin.f32 %v839, %v831
    %v844 = vmin.f32 %v840, %v841
    %v845 = vmin.f32 %v842, %v843
    %v846 = vmin.f32 %v844, %v845
    %v847 = vrot.slane %v846, 4
    %v848 = vmin.f32 %v846, %v847
    %v849 = vrot.slane %v848, 2
    %v850 = vmin.f32 %v848, %v849
    %v851 = vrot.slane %v850, 1
    %v852 = vmin.f32 %v850, %v851
    %v853 = vcvt.f32.s32.to.zero.pseudo %v852
    %v854 = vmul.f32 %v658, 0.1
    %v855 = vmul.f32 %v659, 0.1
    %v856 = vmul.f32 %v660, 0.1
    %v857 = vmul.f32 %v661, 0.1
    %v858 = vmul.f32 %v662, 0.1
    %v859 = vmul.f32 %v663, 0.1
    %v860 = vmul.f32 %v664, 0.1
    %v861 = vmul.f32 %v665, 0.1
    %v862 = vmul.f32 %v666, 0.1
    %v863 = vmul.f32 %v667, 0.1
    %v864 = vmul.f32 %v668, 0.1
    %v865 = vmul.f32 %v669, 0.1
    %v866 = vmul.f32 %v670, 0.1
    %v867 = vmul.f32 %v671, 0.1
    %v868 = vmul.f32 %v672, 0.1
    %v869 = vmul.f32 %v673, 0.1
    %v870 = vmax.f32 %v854, %v858
    %v871 = vmax.f32 %v855, %v859
    %v872 = vmax.f32 %v856, %v860
    %v873 = vmax.f32 %v857, %v861
    %v874 = vmax.f32 %v870, %v862
    %v875 = vmax.f32 %v871, %v863
    %v876 = vmax.f32 %v872, %v864
    %v877 = vmax.f32 %v873, %v865
    %v878 = vmax.f32 %v874, %v866
    %v879 = vmax.f32 %v875, %v867
    %v880 = vmax.f32 %v876, %v868
    %v881 = vmax.f32 %v877, %v869
    %v882 = vmax.f32 %v878, %v879
    %v883 = vmax.f32 %v880, %v881
    %v884 = vmax.f32 %v882, %v883
    %v885 = vrot.slane %v884, 4
    %v886 = vmax.f32 %v884, %v885
    %v887 = vrot.slane %v886, 2
    %v888 = vmax.f32 %v886, %v887
    %v889 = vrot.slane %v888, 1
    %v890 = vmax.f32 %v888, %v889
    %v891 = vsub.f32 %v854, %v890
    %v892 = vsub.f32 %v855, %v890
    %v893 = vsub.f32 %v856, %v890
    %v894 = vsub.f32 %v857, %v890
    %v895 = vsub.f32 %v858, %v890
    %v896 = vsub.f32 %v859, %v890
    %v897 = vsub.f32 %v860, %v890
    %v898 = vsub.f32 %v861, %v890
    %v899 = vsub.f32 %v862, %v890
    %v900 = vsub.f32 %v863, %v890
    %v901 = vsub.f32 %v864, %v890
    %v902 = vsub.f32 %v865, %v890
    %v903 = vsub.f32 %v866, %v890
    %v904 = vsub.f32 %v867, %v890
    %v905 = vsub.f32 %v868, %v890
    %v906 = vsub.f32 %v869, %v890
    %v907 = vmul.f32 %v891, 1.442695
    %v908 = vpow.pop %v907
    %v909 = vmul.f32 %v892, 1.442695
    %v910 = vpow.pop %v909
    %v911 = vmul.f32 %v893, 1.442695
    %v912 = vpow.pop %v911
    %v913 = vmul.f32 %v894, 1.442695
    %v914 = vpow.pop %v913
    %v915 = vmul.f32 %v895, 1.442695
    %v916 = vpow.pop %v915
    %v917 = vmul.f32 %v896, 1.442695
    %v918 = vpow.pop %v917
    %v919 = vmul.f32 %v897, 1.442695
    %v920 = vpow.pop %v919
    %v921 = vmul.f32 %v898, 1.442695
    %v922 = vpow.pop %v921
    %v923 = vmul.f32 %v899, 1.442695
    %v924 = vpow.pop %v923
    %v925 = vmul.f32 %v900, 1.442695
    %v926 = vpow.pop %v925
    %v927 = vmul.f32 %v901, 1.442695
    %v928 = vpow.pop %v927
    %v929 = vmul.f32 %v902, 1.442695
    %v930 = vpow.pop %v929
    %v931 = vmul.f32 %v903, 1.442695
    %v932 = vpow.pop %v931
    %v933 = vmul.f32 %v904, 1.442695
    %v934 = vpow.pop %v933
    %v935 = vmul.f32 %v905, 1.442695
    %v936 = vpow.pop %v935
    %v937 = vmul.f32 %v906, 1.442695
    %v938 = vpow.pop %v937
    %v939 = vadd.f32 %v908, %v910
    %v940 = vadd.f32 %v939, %v912
    %v941 = vadd.f32 %v940, %v914
    %v942 = vadd.f32 %v941, %v916
    %v943 = vadd.f32 %v942, %v918
    %v944 = vadd.f32 %v943, %v920
    %v945 = vadd.f32 %v944, %v922
    %v946 = vadd.f32 %v945, %v924
    %v947 = vadd.f32 %v946, %v926
    %v948 = vadd.f32 %v947, %v928
    %v949 = vadd.f32 %v948, %v930
    %v950 = vadd.f32 %v949, %v932
    %v951 = vadd.f32 %v950, %v934
    %v952 = vadd.f32 %v951, %v936
    %v953 = vadd.f32 %v952, %v938
    %v954 = vrot.slane %v953, 4
    %v955 = vadd.f32 %v953, %v954
    %v956 = vrot.slane %v955, 2
    %v957 = vadd.f32 %v955, %v956
    %v958 = vrot.slane %v957, 1
    %v959 = vadd.f32 %v957, %v958
    %v960 = vlog2.pop %v959
    %v961 = vmul.f32 %v960, 0.6931472
    %v962 = vsub.f32 %v891, %v961
    %v963 = vsub.f32 %v892, %v961
    %v964 = vsub.f32 %v893, %v961
    %v965 = vsub.f32 %v894, %v961
    %v966 = vsub.f32 %v895, %v961
    %v967 = vsub.f32 %v896, %v961
    %v968 = vsub.f32 %v897, %v961
    %v969 = vsub.f32 %v898, %v961
    %v970 = vsub.f32 %v899, %v961
    %v971 = vsub.f32 %v900, %v961
    %v972 = vsub.f32 %v901, %v961
    %v973 = vsub.f32 %v902, %v961
    %v974 = vsub.f32 %v903, %v961
    %v975 = vsub.f32 %v904, %v961
    %v976 = vsub.f32 %v905, %v961
    %v977 = vsub.f32 %v906, %v961
    %v978 = vmul.f32 %v962, 1.442695
    %v979 = vpow.pop %v978
    %v980 = vmul.f32 %v963, 1.442695
    %v981 = vpow.pop %v980
    %v982 = vmul.f32 %v964, 1.442695
    %v983 = vpow.pop %v982
    %v984 = vmul.f32 %v965, 1.442695
    %v985 = vpow.pop %v984
    %v986 = vmul.f32 %v966, 1.442695
    %v987 = vpow.pop %v986
    %v988 = vmul.f32 %v967, 1.442695
    %v989 = vpow.pop %v988
    %v990 = vmul.f32 %v968, 1.442695
    %v991 = vpow.pop %v990
    %v992 = vmul.f32 %v969, 1.442695
    %v993 = vpow.pop %v992
    %v994 = vmul.f32 %v970, 1.442695
    %v995 = vpow.pop %v994
    %v996 = vmul.f32 %v971, 1.442695
    %v997 = vpow.pop %v996
    %v998 = vmul.f32 %v972, 1.442695
    %v999 = vpow.pop %v998
    %v1000 = vmul.f32 %v973, 1.442695
    %v1001 = vpow.pop %v1000
    %v1002 = vmul.f32 %v974, 1.442695
    %v1003 = vpow.pop %v1002
    %v1004 = vmul.f32 %v975, 1.442695
    %v1005 = vpow.pop %v1004
    %v1006 = vmul.f32 %v976, 1.442695
    %v1007 = vpow.pop %v1006
    %v1008 = vmul.f32 %v977, 1.442695
    %v1009 = vpow.pop %v1008
    %v1010 = vmul.f32 %v979, %v962
    %v1011 = vmul.f32 %v981, %v963
    %v1012 = vmul.f32 %v983, %v964
    %v1013 = vmul.f32 %v985, %v965
    %v1014 = vmul.f32 %v987, %v966
    %v1015 = vmul.f32 %v989, %v967
    %v1016 = vmul.f32 %v991, %v968
    %v1017 = vmul.f32 %v993, %v969
    %v1018 = vmul.f32 %v995, %v970
    %v1019 = vmul.f32 %v997, %v971
    %v1020 = vmul.f32 %v999, %v972
    %v1021 = vmul.f32 %v1001, %v973
    %v1022 = vmul.f32 %v1003, %v974
    %v1023 = vmul.f32 %v1005, %v975
    %v1024 = vmul.f32 %v1007, %v976
    %v1025 = vmul.f32 %v1009, %v977
    %v1026 = vadd.f32 %v1010, %v1011
    %v1027 = vadd.f32 %v1026, %v1012
    %v1028 = vadd.f32 %v1027, %v1013
    %v1029 = vadd.f32 %v1028, %v1014
    %v1030 = vadd.f32 %v1029, %v1015
    %v1031 = vadd.f32 %v1030, %v1016
    %v1032 = vadd.f32 %v1031, %v1017
    %v1033 = vadd.f32 %v1032, %v1018
    %v1034 = vadd.f32 %v1033, %v1019
    %v1035 = vadd.f32 %v1034, %v1020
    %v1036 = vadd.f32 %v1035, %v1021
    %v1037 = vadd.f32 %v1036, %v1022
    %v1038 = vadd.f32 %v1037, %v1023
    %v1039 = vadd.f32 %v1038, %v1024
    %v1040 = vadd.f32 %v1039, %v1025
    %v1041 = vrot.slane %v1040, 4
    %v1042 = vadd.f32 %v1040, %v1041
    %v1043 = vrot.slane %v1042, 2
    %v1044 = vadd.f32 %v1042, %v1043
    %v1045 = vrot.slane %v1044, 1
    %v1046 = vadd.f32 %v1044, %v1045
    %1047 = vxpose.xlu0.b32.start [1/16] %v563, 128
    %1048 = vxpose.xlu0.b32.cont [2/16] %v565, 128
    %1049 = vxpose.xlu0.b32.cont [3/16] %v567, 128
    %1050 = vxpose.xlu0.b32.cont [4/16] %v569, 128
    %1051 = vxpose.xlu0.b32.cont [5/16] %v571, 128
    %1052 = vxpose.xlu0.b32.cont [6/16] %v573, 128
    %1053 = vxpose.xlu0.b32.cont [7/16] %v575, 128
    %1054 = vxpose.xlu0.b32.cont [8/16] %v577, 128
    %1055 = vxpose.xlu0.b32.cont [9/16] %v579, 128
    %1056 = vxpose.xlu0.b32.cont [10/16] %v581, 128
    %1057 = vxpose.xlu0.b32.cont [11/16] %v583, 128
    %1058 = vxpose.xlu0.b32.cont [12/16] %v585, 128
    %1059 = vxpose.xlu0.b32.cont [13/16] %v587, 128
    %1060 = vxpose.xlu0.b32.cont [14/16] %v589, 128
    %1061 = vxpose.xlu0.b32.cont [15/16] %v591, 128
    %1062 = vxpose.xlu0.b32.end [16/16] %v593, 128
    %v1063 = vpop.trf.xlu0
    %v1064 = vpop.trf.xlu0
    %v1065 = vpop.trf.xlu0
    %v1066 = vpop.trf.xlu0
    %v1067 = vpop.trf.xlu0
    %v1068 = vpop.trf.xlu0
    %v1069 = vpop.trf.xlu0
    %v1070 = vpop.trf.xlu0
    %v1071 = vpop.trf.xlu0
    %v1072 = vpop.trf.xlu0
    %v1073 = vpop.trf.xlu0
    %v1074 = vpop.trf.xlu0
    %v1075 = vpop.trf.xlu0
    %v1076 = vpop.trf.xlu0
    %v1077 = vpop.trf.xlu0
    %v1078 = vpop.trf.xlu0
    %v1079 = vld [vmem:[%s3] sm:$0xff]
    %v1080 = vld [vmem:[%s3 + $0x8] sm:$0xff]
    %v1081 = vld [vmem:[%s3 + $0x10] sm:$0xff]
    %v1082 = vld [vmem:[%s3 + $0x18] sm:$0xff]
    %v1083 = vld [vmem:[%s3 + $0x20] sm:$0xff]
    %v1084 = vld [vmem:[%s3 + $0x28] sm:$0xff]
    %v1085 = vld [vmem:[%s3 + $0x30] sm:$0xff]
    %v1086 = vld [vmem:[%s3 + $0x38] sm:$0xff]
    %v1087 = vld [vmem:[%s3 + $0x40] sm:$0xff]
    %v1088 = vld [vmem:[%s3 + $0x48] sm:$0xff]
    %v1089 = vld [vmem:[%s3 + $0x50] sm:$0xff]
    %v1090 = vld [vmem:[%s3 + $0x58] sm:$0xff]
    %v1091 = vld [vmem:[%s3 + $0x60] sm:$0xff]
    %v1092 = vld [vmem:[%s3 + $0x68] sm:$0xff]
    %v1093 = vld [vmem:[%s3 + $0x70] sm:$0xff]
    %v1094 = vld [vmem:[%s3 + $0x78] sm:$0xff]
    %v1095 = vld [vmem:[%s4] sm:$0x1]
    %v1096 = vlaneseq
    %v1097 = vand.u32 %v1096, 127
    %vm1098 = vcmp.lt.s32.totalorder %v768, 4
    %vm1099 = vcmp.lt.s32.totalorder %v769, 4
    %vm1100 = vcmp.lt.s32.totalorder %v770, 4
    %vm1101 = vcmp.lt.s32.totalorder %v771, 4
    %vm1102 = vcmp.lt.s32.totalorder %v772, 4
    %vm1103 = vcmp.lt.s32.totalorder %v773, 4
    %vm1104 = vcmp.lt.s32.totalorder %v774, 4
    %vm1105 = vcmp.lt.s32.totalorder %v775, 4
    %vm1106 = vcmp.lt.s32.totalorder %v776, 4
    %vm1107 = vcmp.lt.s32.totalorder %v777, 4
    %vm1108 = vcmp.lt.s32.totalorder %v778, 4
    %vm1109 = vcmp.lt.s32.totalorder %v779, 4
    %vm1110 = vcmp.lt.s32.totalorder %v780, 4
    %vm1111 = vcmp.lt.s32.totalorder %v781, 4
    %vm1112 = vcmp.lt.s32.totalorder %v782, 4
    %vm1113 = vcmp.lt.s32.totalorder %v783, 4
    %vm1114 = vcmp.lt.s32.totalorder %v1097, 4
    %vm1115 = vmand %vm1098, %vm1114
    %vm1116 = vmand %vm1099, %vm1114
    %vm1117 = vmand %vm1100, %vm1114
    %vm1118 = vmand %vm1101, %vm1114
    %vm1119 = vmand %vm1102, %vm1114
    %vm1120 = vmand %vm1103, %vm1114
    %vm1121 = vmand %vm1104, %vm1114
    %vm1122 = vmand %vm1105, %vm1114
    %vm1123 = vmand %vm1106, %vm1114
    %vm1124 = vmand %vm1107, %vm1114
    %vm1125 = vmand %vm1108, %vm1114
    %vm1126 = vmand %vm1109, %vm1114
    %vm1127 = vmand %vm1110, %vm1114
    %vm1128 = vmand %vm1111, %vm1114
    %vm1129 = vmand %vm1112, %vm1114
    %vm1130 = vmand %vm1113, %vm1114
    %1131 = vset.pattern.permute.xlu0 0
    %1132 = vperm.xlu0 %1131, %v1079
    %v1133 = vpop.permute.xlu0 %1132
    %1134 = vset.pattern.permute.xlu0 0
    %1135 = vperm.xlu0 %1134, %v1080
    %v1136 = vpop.permute.xlu0 %1135
    %1137 = vset.pattern.permute.xlu0 0
    %1138 = vperm.xlu0 %1137, %v1081
    %v1139 = vpop.permute.xlu0 %1138
    %1140 = vset.pattern.permute.xlu0 0
    %1141 = vperm.xlu0 %1140, %v1082
    %v1142 = vpop.permute.xlu0 %1141
    %1143 = vset.pattern.permute.xlu0 0
    %1144 = vperm.xlu0 %1143, %v1083
    %v1145 = vpop.permute.xlu0 %1144
    %1146 = vset.pattern.permute.xlu0 0
    %1147 = vperm.xlu0 %1146, %v1084
    %v1148 = vpop.permute.xlu0 %1147
    %1149 = vset.pattern.permute.xlu0 0
    %1150 = vperm.xlu0 %1149, %v1085
    %v1151 = vpop.permute.xlu0 %1150
    %1152 = vset.pattern.permute.xlu0 0
    %1153 = vperm.xlu0 %1152, %v1086
    %v1154 = vpop.permute.xlu0 %1153
    %1155 = vset.pattern.permute.xlu0 0
    %1156 = vperm.xlu0 %1155, %v1087
    %v1157 = vpop.permute.xlu0 %1156
    %1158 = vset.pattern.permute.xlu0 0
    %1159 = vperm.xlu0 %1158, %v1088
    %v1160 = vpop.permute.xlu0 %1159
    %1161 = vset.pattern.permute.xlu0 0
    %1162 = vperm.xlu0 %1161, %v1089
    %v1163 = vpop.permute.xlu0 %1162
    %1164 = vset.pattern.permute.xlu0 0
    %1165 = vperm.xlu0 %1164, %v1090
    %v1166 = vpop.permute.xlu0 %1165
    %1167 = vset.pattern.permute.xlu0 0
    %1168 = vperm.xlu0 %1167, %v1091
    %v1169 = vpop.permute.xlu0 %1168
    %1170 = vset.pattern.permute.xlu0 0
    %1171 = vperm.xlu0 %1170, %v1092
    %v1172 = vpop.permute.xlu0 %1171
    %1173 = vset.pattern.permute.xlu0 0
    %1174 = vperm.xlu0 %1173, %v1093
    %v1175 = vpop.permute.xlu0 %1174
    %1176 = vset.pattern.permute.xlu0 0
    %1177 = vperm.xlu0 %1176, %v1094
    %v1178 = vpop.permute.xlu0 %1177
    %vm1179 = vcmp.eq.s32.totalorder %v1133, %v853
    %vm1180 = vcmp.eq.s32.totalorder %v1136, %v853
    %vm1181 = vcmp.eq.s32.totalorder %v1139, %v853
    %vm1182 = vcmp.eq.s32.totalorder %v1142, %v853
    %vm1183 = vcmp.eq.s32.totalorder %v1145, %v853
    %vm1184 = vcmp.eq.s32.totalorder %v1148, %v853
    %vm1185 = vcmp.eq.s32.totalorder %v1151, %v853
    %vm1186 = vcmp.eq.s32.totalorder %v1154, %v853
    %vm1187 = vcmp.eq.s32.totalorder %v1157, %v853
    %vm1188 = vcmp.eq.s32.totalorder %v1160, %v853
    %vm1189 = vcmp.eq.s32.totalorder %v1163, %v853
    %vm1190 = vcmp.eq.s32.totalorder %v1166, %v853
    %vm1191 = vcmp.eq.s32.totalorder %v1169, %v853
    %vm1192 = vcmp.eq.s32.totalorder %v1172, %v853
    %vm1193 = vcmp.eq.s32.totalorder %v1175, %v853
    %vm1194 = vcmp.eq.s32.totalorder %v1178, %v853
    %vm1195 = vmand %vm1179, %vm1115
    %vm1196 = vmand %vm1180, %vm1116
    %vm1197 = vmand %vm1181, %vm1117
    %vm1198 = vmand %vm1182, %vm1118
    %vm1199 = vmand %vm1183, %vm1119
    %vm1200 = vmand %vm1184, %vm1120
    %vm1201 = vmand %vm1185, %vm1121
    %vm1202 = vmand %vm1186, %vm1122
    %vm1203 = vmand %vm1187, %vm1123
    %vm1204 = vmand %vm1188, %vm1124
    %vm1205 = vmand %vm1189, %vm1125
    %vm1206 = vmand %vm1190, %vm1126
    %vm1207 = vmand %vm1191, %vm1127
    %vm1208 = vmand %vm1192, %vm1128
    %vm1209 = vmand %vm1193, %vm1129
    %vm1210 = vmand %vm1194, %vm1130
    %v1211 = vsel %vm1195, 1, 0
    %v1212 = vsel %vm1196, 1, 0
    %v1213 = vsel %vm1197, 1, 0
    %v1214 = vsel %vm1198, 1, 0
    %v1215 = vsel %vm1199, 1, 0
    %v1216 = vsel %vm1200, 1, 0
    %v1217 = vsel %vm1201, 1, 0
    %v1218 = vsel %vm1202, 1, 0
    %v1219 = vsel %vm1203, 1, 0
    %v1220 = vsel %vm1204, 1, 0
    %v1221 = vsel %vm1205, 1, 0
    %v1222 = vsel %vm1206, 1, 0
    %v1223 = vsel %vm1207, 1, 0
    %v1224 = vsel %vm1208, 1, 0
    %v1225 = vsel %vm1209, 1, 0
    %v1226 = vsel %vm1210, 1, 0
    %v1227 = vcvt.s32.f32 %v1211
    %v1228 = vcvt.s32.f32 %v1212
    %v1229 = vcvt.s32.f32 %v1213
    %v1230 = vcvt.s32.f32 %v1214
    %v1231 = vcvt.s32.f32 %v1215
    %v1232 = vcvt.s32.f32 %v1216
    %v1233 = vcvt.s32.f32 %v1217
    %v1234 = vcvt.s32.f32 %v1218
    %v1235 = vcvt.s32.f32 %v1219
    %v1236 = vcvt.s32.f32 %v1220
    %v1237 = vcvt.s32.f32 %v1221
    %v1238 = vcvt.s32.f32 %v1222
    %v1239 = vcvt.s32.f32 %v1223
    %v1240 = vcvt.s32.f32 %v1224
    %v1241 = vcvt.s32.f32 %v1225
    %v1242 = vcvt.s32.f32 %v1226
    %v1243 = vmul.f32 %v1227, %v766
    %v1244 = vmul.f32 %v1228, %v766
    %v1245 = vmul.f32 %v1229, %v766
    %v1246 = vmul.f32 %v1230, %v766
    %v1247 = vmul.f32 %v1231, %v766
    %v1248 = vmul.f32 %v1232, %v766
    %v1249 = vmul.f32 %v1233, %v766
    %v1250 = vmul.f32 %v1234, %v766
    %v1251 = vmul.f32 %v1235, %v766
    %v1252 = vmul.f32 %v1236, %v766
    %v1253 = vmul.f32 %v1237, %v766
    %v1254 = vmul.f32 %v1238, %v766
    %v1255 = vmul.f32 %v1239, %v766
    %v1256 = vmul.f32 %v1240, %v766
    %v1257 = vmul.f32 %v1241, %v766
    %v1258 = vmul.f32 %v1242, %v766
    %v1259 = vlaneseq
    %v1260 = vshrl.u32 %v1259, 7
    %v1261 = vsub.s32 0, %v1260
    %v1262 = vrot.slane %v1095, %v1261
    %vm1263 = vcmp.eq.s32.totalorder %v1133, %v1262
    %vm1264 = vcmp.eq.s32.totalorder %v1136, %v1262
    %vm1265 = vcmp.eq.s32.totalorder %v1139, %v1262
    %vm1266 = vcmp.eq.s32.totalorder %v1142, %v1262
    %vm1267 = vcmp.eq.s32.totalorder %v1145, %v1262
    %vm1268 = vcmp.eq.s32.totalorder %v1148, %v1262
    %vm1269 = vcmp.eq.s32.totalorder %v1151, %v1262
    %vm1270 = vcmp.eq.s32.totalorder %v1154, %v1262
    %vm1271 = vcmp.eq.s32.totalorder %v1157, %v1262
    %vm1272 = vcmp.eq.s32.totalorder %v1160, %v1262
    %vm1273 = vcmp.eq.s32.totalorder %v1163, %v1262
    %vm1274 = vcmp.eq.s32.totalorder %v1166, %v1262
    %vm1275 = vcmp.eq.s32.totalorder %v1169, %v1262
    %vm1276 = vcmp.eq.s32.totalorder %v1172, %v1262
    %vm1277 = vcmp.eq.s32.totalorder %v1175, %v1262
    %vm1278 = vcmp.eq.s32.totalorder %v1178, %v1262
    %vm1279 = vmand %vm1263, %vm1115
    %vm1280 = vmand %vm1264, %vm1116
    %vm1281 = vmand %vm1265, %vm1117
    %vm1282 = vmand %vm1266, %vm1118
    %vm1283 = vmand %vm1267, %vm1119
    %vm1284 = vmand %vm1268, %vm1120
    %vm1285 = vmand %vm1269, %vm1121
    %vm1286 = vmand %vm1270, %vm1122
    %vm1287 = vmand %vm1271, %vm1123
    %vm1288 = vmand %vm1272, %vm1124
    %vm1289 = vmand %vm1273, %vm1125
    %vm1290 = vmand %vm1274, %vm1126
    %vm1291 = vmand %vm1275, %vm1127
    %vm1292 = vmand %vm1276, %vm1128
    %vm1293 = vmand %vm1277, %vm1129
    %vm1294 = vmand %vm1278, %vm1130
    %v1295 = vsel %vm1279, 1, 0
    %v1296 = vsel %vm1280, 1, 0
    %v1297 = vsel %vm1281, 1, 0
    %v1298 = vsel %vm1282, 1, 0
    %v1299 = vsel %vm1283, 1, 0
    %v1300 = vsel %vm1284, 1, 0
    %v1301 = vsel %vm1285, 1, 0
    %v1302 = vsel %vm1286, 1, 0
    %v1303 = vsel %vm1287, 1, 0
    %v1304 = vsel %vm1288, 1, 0
    %v1305 = vsel %vm1289, 1, 0
    %v1306 = vsel %vm1290, 1, 0
    %v1307 = vsel %vm1291, 1, 0
    %v1308 = vsel %vm1292, 1, 0
    %v1309 = vsel %vm1293, 1, 0
    %v1310 = vsel %vm1294, 1, 0
    %v1311 = vcvt.s32.f32 %v1295
    %v1312 = vcvt.s32.f32 %v1296
    %v1313 = vcvt.s32.f32 %v1297
    %v1314 = vcvt.s32.f32 %v1298
    %v1315 = vcvt.s32.f32 %v1299
    %v1316 = vcvt.s32.f32 %v1300
    %v1317 = vcvt.s32.f32 %v1301
    %v1318 = vcvt.s32.f32 %v1302
    %v1319 = vcvt.s32.f32 %v1303
    %v1320 = vcvt.s32.f32 %v1304
    %v1321 = vcvt.s32.f32 %v1305
    %v1322 = vcvt.s32.f32 %v1306
    %v1323 = vcvt.s32.f32 %v1307
    %v1324 = vcvt.s32.f32 %v1308
    %v1325 = vcvt.s32.f32 %v1309
    %v1326 = vcvt.s32.f32 %v1310
    %vm1327 = vcmp.gt.s32.totalorder %v1097, %v768
    %vm1328 = vcmp.gt.s32.totalorder %v1097, %v769
    %vm1329 = vcmp.gt.s32.totalorder %v1097, %v770
    %vm1330 = vcmp.gt.s32.totalorder %v1097, %v771
    %vm1331 = vcmp.gt.s32.totalorder %v1097, %v772
    %vm1332 = vcmp.gt.s32.totalorder %v1097, %v773
    %vm1333 = vcmp.gt.s32.totalorder %v1097, %v774
    %vm1334 = vcmp.gt.s32.totalorder %v1097, %v775
    %vm1335 = vcmp.gt.s32.totalorder %v1097, %v776
    %vm1336 = vcmp.gt.s32.totalorder %v1097, %v777
    %vm1337 = vcmp.gt.s32.totalorder %v1097, %v778
    %vm1338 = vcmp.gt.s32.totalorder %v1097, %v779
    %vm1339 = vcmp.gt.s32.totalorder %v1097, %v780
    %vm1340 = vcmp.gt.s32.totalorder %v1097, %v781
    %vm1341 = vcmp.gt.s32.totalorder %v1097, %v782
    %vm1342 = vcmp.gt.s32.totalorder %v1097, %v783
    %v1343 = vsel %vm1327, 1, 0
    %v1344 = vsel %vm1328, 1, 0
    %v1345 = vsel %vm1329, 1, 0
    %v1346 = vsel %vm1330, 1, 0
    %v1347 = vsel %vm1331, 1, 0
    %v1348 = vsel %vm1332, 1, 0
    %v1349 = vsel %vm1333, 1, 0
    %v1350 = vsel %vm1334, 1, 0
    %v1351 = vsel %vm1335, 1, 0
    %v1352 = vsel %vm1336, 1, 0
    %v1353 = vsel %vm1337, 1, 0
    %v1354 = vsel %vm1338, 1, 0
    %v1355 = vsel %vm1339, 1, 0
    %v1356 = vsel %vm1340, 1, 0
    %v1357 = vsel %vm1341, 1, 0
    %v1358 = vsel %vm1342, 1, 0
    %v1359 = vcvt.s32.f32 %v1343
    %v1360 = vcvt.s32.f32 %v1344
    %v1361 = vcvt.s32.f32 %v1345
    %v1362 = vcvt.s32.f32 %v1346
    %v1363 = vcvt.s32.f32 %v1347
    %v1364 = vcvt.s32.f32 %v1348
    %v1365 = vcvt.s32.f32 %v1349
    %v1366 = vcvt.s32.f32 %v1350
    %v1367 = vcvt.s32.f32 %v1351
    %v1368 = vcvt.s32.f32 %v1352
    %v1369 = vcvt.s32.f32 %v1353
    %v1370 = vcvt.s32.f32 %v1354
    %v1371 = vcvt.s32.f32 %v1355
    %v1372 = vcvt.s32.f32 %v1356
    %v1373 = vcvt.s32.f32 %v1357
    %v1374 = vcvt.s32.f32 %v1358
    %v1375 = vmul.f32 %v1311, %v1359
    %v1376 = vmul.f32 %v1312, %v1360
    %v1377 = vmul.f32 %v1313, %v1361
    %v1378 = vmul.f32 %v1314, %v1362
    %v1379 = vmul.f32 %v1315, %v1363
    %v1380 = vmul.f32 %v1316, %v1364
    %v1381 = vmul.f32 %v1317, %v1365
    %v1382 = vmul.f32 %v1318, %v1366
    %v1383 = vmul.f32 %v1319, %v1367
    %v1384 = vmul.f32 %v1320, %v1368
    %v1385 = vmul.f32 %v1321, %v1369
    %v1386 = vmul.f32 %v1322, %v1370
    %v1387 = vmul.f32 %v1323, %v1371
    %v1388 = vmul.f32 %v1324, %v1372
    %v1389 = vmul.f32 %v1325, %v1373
    %v1390 = vmul.f32 %v1326, %v1374
    %1392 = vset.pattern.permute.xlu0 0
    %1393 = vperm.xlu0 %1392, %v563
    %v1394 = vpop.permute.xlu0 %1393
    %1397 = vset.pattern.permute.xlu0 0
    %1398 = vperm.xlu0 %1397, %v565
    %v1399 = vpop.permute.xlu0 %1398
    %1402 = vset.pattern.permute.xlu0 0
    %1403 = vperm.xlu0 %1402, %v567
    %v1404 = vpop.permute.xlu0 %1403
    %1407 = vset.pattern.permute.xlu0 0
    %1408 = vperm.xlu0 %1407, %v569
    %v1409 = vpop.permute.xlu0 %1408
    %1412 = vset.pattern.permute.xlu0 0
    %1413 = vperm.xlu0 %1412, %v571
    %v1414 = vpop.permute.xlu0 %1413
    %1417 = vset.pattern.permute.xlu0 0
    %1418 = vperm.xlu0 %1417, %v573
    %v1419 = vpop.permute.xlu0 %1418
    %1422 = vset.pattern.permute.xlu0 0
    %1423 = vperm.xlu0 %1422, %v575
    %v1424 = vpop.permute.xlu0 %1423
    %1427 = vset.pattern.permute.xlu0 0
    %1428 = vperm.xlu0 %1427, %v577
    %v1429 = vpop.permute.xlu0 %1428
    %1432 = vset.pattern.permute.xlu0 0
    %1433 = vperm.xlu0 %1432, %v579
    %v1434 = vpop.permute.xlu0 %1433
    %1437 = vset.pattern.permute.xlu0 0
    %1438 = vperm.xlu0 %1437, %v581
    %v1439 = vpop.permute.xlu0 %1438
    %1442 = vset.pattern.permute.xlu0 0
    %1443 = vperm.xlu0 %1442, %v583
    %v1444 = vpop.permute.xlu0 %1443
    %1447 = vset.pattern.permute.xlu0 0
    %1448 = vperm.xlu0 %1447, %v585
    %v1449 = vpop.permute.xlu0 %1448
    %1452 = vset.pattern.permute.xlu0 0
    %1453 = vperm.xlu0 %1452, %v587
    %v1454 = vpop.permute.xlu0 %1453
    %1457 = vset.pattern.permute.xlu0 0
    %1458 = vperm.xlu0 %1457, %v589
    %v1459 = vpop.permute.xlu0 %1458
    %1462 = vset.pattern.permute.xlu0 0
    %1463 = vperm.xlu0 %1462, %v591
    %v1464 = vpop.permute.xlu0 %1463
    %1467 = vset.pattern.permute.xlu0 0
    %1468 = vperm.xlu0 %1467, %v593
    %v1469 = vpop.permute.xlu0 %1468
    %v1471 = vlaneseq
    %v1472 = vshrl.u32 %v1471, 7
    %v1473 = vsub.s32 0, %v1472
    %v1474 = vrot.slane %v979, %v1473
    %v1475 = vadd.f32 %v1394, %v1474
    %v1476 = vadd.f32 %v1399, %v1474
    %v1477 = vadd.f32 %v1404, %v1474
    %v1478 = vadd.f32 %v1409, %v1474
    %v1479 = vadd.f32 %v1414, %v1474
    %v1480 = vadd.f32 %v1419, %v1474
    %v1481 = vadd.f32 %v1424, %v1474
    %v1482 = vadd.f32 %v1429, %v1474
    %v1483 = vadd.f32 %v1434, %v1474
    %v1484 = vadd.f32 %v1439, %v1474
    %v1485 = vadd.f32 %v1444, %v1474
    %v1486 = vadd.f32 %v1449, %v1474
    %v1487 = vadd.f32 %v1454, %v1474
    %v1488 = vadd.f32 %v1459, %v1474
    %v1489 = vadd.f32 %v1464, %v1474
    %v1490 = vadd.f32 %v1469, %v1474
    %v1491 = vmul.f32 %v1475, 0.5
    %v1492 = vmul.f32 %v1476, 0.5
    %v1493 = vmul.f32 %v1477, 0.5
    %v1494 = vmul.f32 %v1478, 0.5
    %v1495 = vmul.f32 %v1479, 0.5
    %v1496 = vmul.f32 %v1480, 0.5
    %v1497 = vmul.f32 %v1481, 0.5
    %v1498 = vmul.f32 %v1482, 0.5
    %v1499 = vmul.f32 %v1483, 0.5
    %v1500 = vmul.f32 %v1484, 0.5
    %v1501 = vmul.f32 %v1485, 0.5
    %v1502 = vmul.f32 %v1486, 0.5
    %v1503 = vmul.f32 %v1487, 0.5
    %v1504 = vmul.f32 %v1488, 0.5
    %v1505 = vmul.f32 %v1489, 0.5
    %v1506 = vmul.f32 %v1490, 0.5
    %v1507 = vlaneseq
    %v1508 = vshrl.u32 %v1507, 7
    %v1509 = vsub.s32 0, %v1508
    %v1510 = vrot.slane %v1063, %v1509
    %v1511 = vadd.f32 %v1394, %v1510
    %v1512 = vadd.f32 %v1399, %v1510
    %v1513 = vadd.f32 %v1404, %v1510
    %v1514 = vadd.f32 %v1409, %v1510
    %v1515 = vadd.f32 %v1414, %v1510
    %v1516 = vadd.f32 %v1419, %v1510
    %v1517 = vadd.f32 %v1424, %v1510
    %v1518 = vadd.f32 %v1429, %v1510
    %v1519 = vadd.f32 %v1434, %v1510
    %v1520 = vadd.f32 %v1439, %v1510
    %v1521 = vadd.f32 %v1444, %v1510
    %v1522 = vadd.f32 %v1449, %v1510
    %v1523 = vadd.f32 %v1454, %v1510
    %v1524 = vadd.f32 %v1459, %v1510
    %v1525 = vadd.f32 %v1464, %v1510
    %v1526 = vadd.f32 %v1469, %v1510
    %v1527 = vmul.f32 %v1511, 0.5
    %v1528 = vmul.f32 %v1512, 0.5
    %v1529 = vmul.f32 %v1513, 0.5
    %v1530 = vmul.f32 %v1514, 0.5
    %v1531 = vmul.f32 %v1515, 0.5
    %v1532 = vmul.f32 %v1516, 0.5
    %v1533 = vmul.f32 %v1517, 0.5
    %v1534 = vmul.f32 %v1518, 0.5
    %v1535 = vmul.f32 %v1519, 0.5
    %v1536 = vmul.f32 %v1520, 0.5
    %v1537 = vmul.f32 %v1521, 0.5
    %v1538 = vmul.f32 %v1522, 0.5
    %v1539 = vmul.f32 %v1523, 0.5
    %v1540 = vmul.f32 %v1524, 0.5
    %v1541 = vmul.f32 %v1525, 0.5
    %v1542 = vmul.f32 %v1526, 0.5
    %v1543 = vmax.f32 %v1491, 1e-30
    %v1544 = vmax.f32 %v1492, 1e-30
    %v1545 = vmax.f32 %v1493, 1e-30
    %v1546 = vmax.f32 %v1494, 1e-30
    %v1547 = vmax.f32 %v1495, 1e-30
    %v1548 = vmax.f32 %v1496, 1e-30
    %v1549 = vmax.f32 %v1497, 1e-30
    %v1550 = vmax.f32 %v1498, 1e-30
    %v1551 = vmax.f32 %v1499, 1e-30
    %v1552 = vmax.f32 %v1500, 1e-30
    %v1553 = vmax.f32 %v1501, 1e-30
    %v1554 = vmax.f32 %v1502, 1e-30
    %v1555 = vmax.f32 %v1503, 1e-30
    %v1556 = vmax.f32 %v1504, 1e-30
    %v1557 = vmax.f32 %v1505, 1e-30
    %v1558 = vmax.f32 %v1506, 1e-30
    %v1559 = vlog2.pop %v1543
    %v1560 = vmul.f32 %v1559, 0.6931472
    %v1561 = vlog2.pop %v1544
    %v1562 = vmul.f32 %v1561, 0.6931472
    %v1563 = vlog2.pop %v1545
    %v1564 = vmul.f32 %v1563, 0.6931472
    %v1565 = vlog2.pop %v1546
    %v1566 = vmul.f32 %v1565, 0.6931472
    %v1567 = vlog2.pop %v1547
    %v1568 = vmul.f32 %v1567, 0.6931472
    %v1569 = vlog2.pop %v1548
    %v1570 = vmul.f32 %v1569, 0.6931472
    %v1571 = vlog2.pop %v1549
    %v1572 = vmul.f32 %v1571, 0.6931472
    %v1573 = vlog2.pop %v1550
    %v1574 = vmul.f32 %v1573, 0.6931472
    %v1575 = vlog2.pop %v1551
    %v1576 = vmul.f32 %v1575, 0.6931472
    %v1577 = vlog2.pop %v1552
    %v1578 = vmul.f32 %v1577, 0.6931472
    %v1579 = vlog2.pop %v1553
    %v1580 = vmul.f32 %v1579, 0.6931472
    %v1581 = vlog2.pop %v1554
    %v1582 = vmul.f32 %v1581, 0.6931472
    %v1583 = vlog2.pop %v1555
    %v1584 = vmul.f32 %v1583, 0.6931472
    %v1585 = vlog2.pop %v1556
    %v1586 = vmul.f32 %v1585, 0.6931472
    %v1587 = vlog2.pop %v1557
    %v1588 = vmul.f32 %v1587, 0.6931472
    %v1589 = vlog2.pop %v1558
    %v1590 = vmul.f32 %v1589, 0.6931472
    %v1591 = vmul.f32 %v1491, %v1560
    %v1592 = vmul.f32 %v1492, %v1562
    %v1593 = vmul.f32 %v1493, %v1564
    %v1594 = vmul.f32 %v1494, %v1566
    %v1595 = vmul.f32 %v1495, %v1568
    %v1596 = vmul.f32 %v1496, %v1570
    %v1597 = vmul.f32 %v1497, %v1572
    %v1598 = vmul.f32 %v1498, %v1574
    %v1599 = vmul.f32 %v1499, %v1576
    %v1600 = vmul.f32 %v1500, %v1578
    %v1601 = vmul.f32 %v1501, %v1580
    %v1602 = vmul.f32 %v1502, %v1582
    %v1603 = vmul.f32 %v1503, %v1584
    %v1604 = vmul.f32 %v1504, %v1586
    %v1605 = vmul.f32 %v1505, %v1588
    %v1606 = vmul.f32 %v1506, %v1590
    %v1607 = vadd.f32 %v1591, 0.0
    %v1608 = vadd.f32 %v1592, 0.0
    %v1609 = vadd.f32 %v1593, 0.0
    %v1610 = vadd.f32 %v1594, 0.0
    %v1611 = vadd.f32 %v1595, 0.0
    %v1612 = vadd.f32 %v1596, 0.0
    %v1613 = vadd.f32 %v1597, 0.0
    %v1614 = vadd.f32 %v1598, 0.0
    %v1615 = vadd.f32 %v1599, 0.0
    %v1616 = vadd.f32 %v1600, 0.0
    %v1617 = vadd.f32 %v1601, 0.0
    %v1618 = vadd.f32 %v1602, 0.0
    %v1619 = vadd.f32 %v1603, 0.0
    %v1620 = vadd.f32 %v1604, 0.0
    %v1621 = vadd.f32 %v1605, 0.0
    %v1622 = vadd.f32 %v1606, 0.0
    %v1623 = vmax.f32 %v1527, 1e-30
    %v1624 = vmax.f32 %v1528, 1e-30
    %v1625 = vmax.f32 %v1529, 1e-30
    %v1626 = vmax.f32 %v1530, 1e-30
    %v1627 = vmax.f32 %v1531, 1e-30
    %v1628 = vmax.f32 %v1532, 1e-30
    %v1629 = vmax.f32 %v1533, 1e-30
    %v1630 = vmax.f32 %v1534, 1e-30
    %v1631 = vmax.f32 %v1535, 1e-30
    %v1632 = vmax.f32 %v1536, 1e-30
    %v1633 = vmax.f32 %v1537, 1e-30
    %v1634 = vmax.f32 %v1538, 1e-30
    %v1635 = vmax.f32 %v1539, 1e-30
    %v1636 = vmax.f32 %v1540, 1e-30
    %v1637 = vmax.f32 %v1541, 1e-30
    %v1638 = vmax.f32 %v1542, 1e-30
    %v1639 = vlog2.pop %v1623
    %v1640 = vmul.f32 %v1639, 0.6931472
    %v1641 = vlog2.pop %v1624
    %v1642 = vmul.f32 %v1641, 0.6931472
    %v1643 = vlog2.pop %v1625
    %v1644 = vmul.f32 %v1643, 0.6931472
    %v1645 = vlog2.pop %v1626
    %v1646 = vmul.f32 %v1645, 0.6931472
    %v1647 = vlog2.pop %v1627
    %v1648 = vmul.f32 %v1647, 0.6931472
    %v1649 = vlog2.pop %v1628
    %v1650 = vmul.f32 %v1649, 0.6931472
    %v1651 = vlog2.pop %v1629
    %v1652 = vmul.f32 %v1651, 0.6931472
    %v1653 = vlog2.pop %v1630
    %v1654 = vmul.f32 %v1653, 0.6931472
    %v1655 = vlog2.pop %v1631
    %v1656 = vmul.f32 %v1655, 0.6931472
    %v1657 = vlog2.pop %v1632
    %v1658 = vmul.f32 %v1657, 0.6931472
    %v1659 = vlog2.pop %v1633
    %v1660 = vmul.f32 %v1659, 0.6931472
    %v1661 = vlog2.pop %v1634
    %v1662 = vmul.f32 %v1661, 0.6931472
    %v1663 = vlog2.pop %v1635
    %v1664 = vmul.f32 %v1663, 0.6931472
    %v1665 = vlog2.pop %v1636
    %v1666 = vmul.f32 %v1665, 0.6931472
    %v1667 = vlog2.pop %v1637
    %v1668 = vmul.f32 %v1667, 0.6931472
    %v1669 = vlog2.pop %v1638
    %v1670 = vmul.f32 %v1669, 0.6931472
    %v1671 = vmul.f32 %v1527, %v1640
    %v1672 = vmul.f32 %v1528, %v1642
    %v1673 = vmul.f32 %v1529, %v1644
    %v1674 = vmul.f32 %v1530, %v1646
    %v1675 = vmul.f32 %v1531, %v1648
    %v1676 = vmul.f32 %v1532, %v1650
    %v1677 = vmul.f32 %v1533, %v1652
    %v1678 = vmul.f32 %v1534, %v1654
    %v1679 = vmul.f32 %v1535, %v1656
    %v1680 = vmul.f32 %v1536, %v1658
    %v1681 = vmul.f32 %v1537, %v1660
    %v1682 = vmul.f32 %v1538, %v1662
    %v1683 = vmul.f32 %v1539, %v1664
    %v1684 = vmul.f32 %v1540, %v1666
    %v1685 = vmul.f32 %v1541, %v1668
    %v1686 = vmul.f32 %v1542, %v1670
    %v1687 = vadd.f32 %v1671, 0.0
    %v1688 = vadd.f32 %v1672, 0.0
    %v1689 = vadd.f32 %v1673, 0.0
    %v1690 = vadd.f32 %v1674, 0.0
    %v1691 = vadd.f32 %v1675, 0.0
    %v1692 = vadd.f32 %v1676, 0.0
    %v1693 = vadd.f32 %v1677, 0.0
    %v1694 = vadd.f32 %v1678, 0.0
    %v1695 = vadd.f32 %v1679, 0.0
    %v1696 = vadd.f32 %v1680, 0.0
    %v1697 = vadd.f32 %v1681, 0.0
    %v1698 = vadd.f32 %v1682, 0.0
    %v1699 = vadd.f32 %v1683, 0.0
    %v1700 = vadd.f32 %v1684, 0.0
    %v1701 = vadd.f32 %v1685, 0.0
    %v1702 = vadd.f32 %v1686, 0.0
    %1703 = vset.pattern.permute.xlu0 1
    %1704 = vperm.xlu0 %1703, %v563
    %v1705 = vpop.permute.xlu0 %1704
    %1707 = vset.pattern.permute.xlu0 1
    %1708 = vperm.xlu0 %1707, %v565
    %v1709 = vpop.permute.xlu0 %1708
    %1711 = vset.pattern.permute.xlu0 1
    %1712 = vperm.xlu0 %1711, %v567
    %v1713 = vpop.permute.xlu0 %1712
    %1715 = vset.pattern.permute.xlu0 1
    %1716 = vperm.xlu0 %1715, %v569
    %v1717 = vpop.permute.xlu0 %1716
    %1719 = vset.pattern.permute.xlu0 1
    %1720 = vperm.xlu0 %1719, %v571
    %v1721 = vpop.permute.xlu0 %1720
    %1723 = vset.pattern.permute.xlu0 1
    %1724 = vperm.xlu0 %1723, %v573
    %v1725 = vpop.permute.xlu0 %1724
    %1727 = vset.pattern.permute.xlu0 1
    %1728 = vperm.xlu0 %1727, %v575
    %v1729 = vpop.permute.xlu0 %1728
    %1731 = vset.pattern.permute.xlu0 1
    %1732 = vperm.xlu0 %1731, %v577
    %v1733 = vpop.permute.xlu0 %1732
    %1735 = vset.pattern.permute.xlu0 1
    %1736 = vperm.xlu0 %1735, %v579
    %v1737 = vpop.permute.xlu0 %1736
    %1739 = vset.pattern.permute.xlu0 1
    %1740 = vperm.xlu0 %1739, %v581
    %v1741 = vpop.permute.xlu0 %1740
    %1743 = vset.pattern.permute.xlu0 1
    %1744 = vperm.xlu0 %1743, %v583
    %v1745 = vpop.permute.xlu0 %1744
    %1747 = vset.pattern.permute.xlu0 1
    %1748 = vperm.xlu0 %1747, %v585
    %v1749 = vpop.permute.xlu0 %1748
    %1751 = vset.pattern.permute.xlu0 1
    %1752 = vperm.xlu0 %1751, %v587
    %v1753 = vpop.permute.xlu0 %1752
    %1755 = vset.pattern.permute.xlu0 1
    %1756 = vperm.xlu0 %1755, %v589
    %v1757 = vpop.permute.xlu0 %1756
    %1759 = vset.pattern.permute.xlu0 1
    %1760 = vperm.xlu0 %1759, %v591
    %v1761 = vpop.permute.xlu0 %1760
    %1763 = vset.pattern.permute.xlu0 1
    %1764 = vperm.xlu0 %1763, %v593
    %v1765 = vpop.permute.xlu0 %1764
    %v1767 = vlaneseq
    %v1768 = vshrl.u32 %v1767, 7
    %v1769 = vsub.s32 1, %v1768
    %v1770 = vrot.slane %v979, %v1769
    %v1771 = vadd.f32 %v1705, %v1770
    %v1772 = vadd.f32 %v1709, %v1770
    %v1773 = vadd.f32 %v1713, %v1770
    %v1774 = vadd.f32 %v1717, %v1770
    %v1775 = vadd.f32 %v1721, %v1770
    %v1776 = vadd.f32 %v1725, %v1770
    %v1777 = vadd.f32 %v1729, %v1770
    %v1778 = vadd.f32 %v1733, %v1770
    %v1779 = vadd.f32 %v1737, %v1770
    %v1780 = vadd.f32 %v1741, %v1770
    %v1781 = vadd.f32 %v1745, %v1770
    %v1782 = vadd.f32 %v1749, %v1770
    %v1783 = vadd.f32 %v1753, %v1770
    %v1784 = vadd.f32 %v1757, %v1770
    %v1785 = vadd.f32 %v1761, %v1770
    %v1786 = vadd.f32 %v1765, %v1770
    %v1787 = vmul.f32 %v1771, 0.5
    %v1788 = vmul.f32 %v1772, 0.5
    %v1789 = vmul.f32 %v1773, 0.5
    %v1790 = vmul.f32 %v1774, 0.5
    %v1791 = vmul.f32 %v1775, 0.5
    %v1792 = vmul.f32 %v1776, 0.5
    %v1793 = vmul.f32 %v1777, 0.5
    %v1794 = vmul.f32 %v1778, 0.5
    %v1795 = vmul.f32 %v1779, 0.5
    %v1796 = vmul.f32 %v1780, 0.5
    %v1797 = vmul.f32 %v1781, 0.5
    %v1798 = vmul.f32 %v1782, 0.5
    %v1799 = vmul.f32 %v1783, 0.5
    %v1800 = vmul.f32 %v1784, 0.5
    %v1801 = vmul.f32 %v1785, 0.5
    %v1802 = vmul.f32 %v1786, 0.5
    %v1803 = vlaneseq
    %v1804 = vshrl.u32 %v1803, 7
    %v1805 = vsub.s32 1, %v1804
    %v1806 = vrot.slane %v1063, %v1805
    %v1807 = vadd.f32 %v1705, %v1806
    %v1808 = vadd.f32 %v1709, %v1806
    %v1809 = vadd.f32 %v1713, %v1806
    %v1810 = vadd.f32 %v1717, %v1806
    %v1811 = vadd.f32 %v1721, %v1806
    %v1812 = vadd.f32 %v1725, %v1806
    %v1813 = vadd.f32 %v1729, %v1806
    %v1814 = vadd.f32 %v1733, %v1806
    %v1815 = vadd.f32 %v1737, %v1806
    %v1816 = vadd.f32 %v1741, %v1806
    %v1817 = vadd.f32 %v1745, %v1806
    %v1818 = vadd.f32 %v1749, %v1806
    %v1819 = vadd.f32 %v1753, %v1806
    %v1820 = vadd.f32 %v1757, %v1806
    %v1821 = vadd.f32 %v1761, %v1806
    %v1822 = vadd.f32 %v1765, %v1806
    %v1823 = vmul.f32 %v1807, 0.5
    %v1824 = vmul.f32 %v1808, 0.5
    %v1825 = vmul.f32 %v1809, 0.5
    %v1826 = vmul.f32 %v1810, 0.5
    %v1827 = vmul.f32 %v1811, 0.5
    %v1828 = vmul.f32 %v1812, 0.5
    %v1829 = vmul.f32 %v1813, 0.5
    %v1830 = vmul.f32 %v1814, 0.5
    %v1831 = vmul.f32 %v1815, 0.5
    %v1832 = vmul.f32 %v1816, 0.5
    %v1833 = vmul.f32 %v1817, 0.5
    %v1834 = vmul.f32 %v1818, 0.5
    %v1835 = vmul.f32 %v1819, 0.5
    %v1836 = vmul.f32 %v1820, 0.5
    %v1837 = vmul.f32 %v1821, 0.5
    %v1838 = vmul.f32 %v1822, 0.5
    %v1839 = vmax.f32 %v1787, 1e-30
    %v1840 = vmax.f32 %v1788, 1e-30
    %v1841 = vmax.f32 %v1789, 1e-30
    %v1842 = vmax.f32 %v1790, 1e-30
    %v1843 = vmax.f32 %v1791, 1e-30
    %v1844 = vmax.f32 %v1792, 1e-30
    %v1845 = vmax.f32 %v1793, 1e-30
    %v1846 = vmax.f32 %v1794, 1e-30
    %v1847 = vmax.f32 %v1795, 1e-30
    %v1848 = vmax.f32 %v1796, 1e-30
    %v1849 = vmax.f32 %v1797, 1e-30
    %v1850 = vmax.f32 %v1798, 1e-30
    %v1851 = vmax.f32 %v1799, 1e-30
    %v1852 = vmax.f32 %v1800, 1e-30
    %v1853 = vmax.f32 %v1801, 1e-30
    %v1854 = vmax.f32 %v1802, 1e-30
    %v1855 = vlog2.pop %v1839
    %v1856 = vmul.f32 %v1855, 0.6931472
    %v1857 = vlog2.pop %v1840
    %v1858 = vmul.f32 %v1857, 0.6931472
    %v1859 = vlog2.pop %v1841
    %v1860 = vmul.f32 %v1859, 0.6931472
    %v1861 = vlog2.pop %v1842
    %v1862 = vmul.f32 %v1861, 0.6931472
    %v1863 = vlog2.pop %v1843
    %v1864 = vmul.f32 %v1863, 0.6931472
    %v1865 = vlog2.pop %v1844
    %v1866 = vmul.f32 %v1865, 0.6931472
    %v1867 = vlog2.pop %v1845
    %v1868 = vmul.f32 %v1867, 0.6931472
    %v1869 = vlog2.pop %v1846
    %v1870 = vmul.f32 %v1869, 0.6931472
    %v1871 = vlog2.pop %v1847
    %v1872 = vmul.f32 %v1871, 0.6931472
    %v1873 = vlog2.pop %v1848
    %v1874 = vmul.f32 %v1873, 0.6931472
    %v1875 = vlog2.pop %v1849
    %v1876 = vmul.f32 %v1875, 0.6931472
    %v1877 = vlog2.pop %v1850
    %v1878 = vmul.f32 %v1877, 0.6931472
    %v1879 = vlog2.pop %v1851
    %v1880 = vmul.f32 %v1879, 0.6931472
    %v1881 = vlog2.pop %v1852
    %v1882 = vmul.f32 %v1881, 0.6931472
    %v1883 = vlog2.pop %v1853
    %v1884 = vmul.f32 %v1883, 0.6931472
    %v1885 = vlog2.pop %v1854
    %v1886 = vmul.f32 %v1885, 0.6931472
    %v1887 = vmul.f32 %v1787, %v1856
    %v1888 = vmul.f32 %v1788, %v1858
    %v1889 = vmul.f32 %v1789, %v1860
    %v1890 = vmul.f32 %v1790, %v1862
    %v1891 = vmul.f32 %v1791, %v1864
    %v1892 = vmul.f32 %v1792, %v1866
    %v1893 = vmul.f32 %v1793, %v1868
    %v1894 = vmul.f32 %v1794, %v1870
    %v1895 = vmul.f32 %v1795, %v1872
    %v1896 = vmul.f32 %v1796, %v1874
    %v1897 = vmul.f32 %v1797, %v1876
    %v1898 = vmul.f32 %v1798, %v1878
    %v1899 = vmul.f32 %v1799, %v1880
    %v1900 = vmul.f32 %v1800, %v1882
    %v1901 = vmul.f32 %v1801, %v1884
    %v1902 = vmul.f32 %v1802, %v1886
    %v1903 = vadd.f32 %v1607, %v1887
    %v1904 = vadd.f32 %v1608, %v1888
    %v1905 = vadd.f32 %v1609, %v1889
    %v1906 = vadd.f32 %v1610, %v1890
    %v1907 = vadd.f32 %v1611, %v1891
    %v1908 = vadd.f32 %v1612, %v1892
    %v1909 = vadd.f32 %v1613, %v1893
    %v1910 = vadd.f32 %v1614, %v1894
    %v1911 = vadd.f32 %v1615, %v1895
    %v1912 = vadd.f32 %v1616, %v1896
    %v1913 = vadd.f32 %v1617, %v1897
    %v1914 = vadd.f32 %v1618, %v1898
    %v1915 = vadd.f32 %v1619, %v1899
    %v1916 = vadd.f32 %v1620, %v1900
    %v1917 = vadd.f32 %v1621, %v1901
    %v1918 = vadd.f32 %v1622, %v1902
    %v1919 = vmax.f32 %v1823, 1e-30
    %v1920 = vmax.f32 %v1824, 1e-30
    %v1921 = vmax.f32 %v1825, 1e-30
    %v1922 = vmax.f32 %v1826, 1e-30
    %v1923 = vmax.f32 %v1827, 1e-30
    %v1924 = vmax.f32 %v1828, 1e-30
    %v1925 = vmax.f32 %v1829, 1e-30
    %v1926 = vmax.f32 %v1830, 1e-30
    %v1927 = vmax.f32 %v1831, 1e-30
    %v1928 = vmax.f32 %v1832, 1e-30
    %v1929 = vmax.f32 %v1833, 1e-30
    %v1930 = vmax.f32 %v1834, 1e-30
    %v1931 = vmax.f32 %v1835, 1e-30
    %v1932 = vmax.f32 %v1836, 1e-30
    %v1933 = vmax.f32 %v1837, 1e-30
    %v1934 = vmax.f32 %v1838, 1e-30
    %v1935 = vlog2.pop %v1919
    %v1936 = vmul.f32 %v1935, 0.6931472
    %v1937 = vlog2.pop %v1920
    %v1938 = vmul.f32 %v1937, 0.6931472
    %v1939 = vlog2.pop %v1921
    %v1940 = vmul.f32 %v1939, 0.6931472
    %v1941 = vlog2.pop %v1922
    %v1942 = vmul.f32 %v1941, 0.6931472
    %v1943 = vlog2.pop %v1923
    %v1944 = vmul.f32 %v1943, 0.6931472
    %v1945 = vlog2.pop %v1924
    %v1946 = vmul.f32 %v1945, 0.6931472
    %v1947 = vlog2.pop %v1925
    %v1948 = vmul.f32 %v1947, 0.6931472
    %v1949 = vlog2.pop %v1926
    %v1950 = vmul.f32 %v1949, 0.6931472
    %v1951 = vlog2.pop %v1927
    %v1952 = vmul.f32 %v1951, 0.6931472
    %v1953 = vlog2.pop %v1928
    %v1954 = vmul.f32 %v1953, 0.6931472
    %v1955 = vlog2.pop %v1929
    %v1956 = vmul.f32 %v1955, 0.6931472
    %v1957 = vlog2.pop %v1930
    %v1958 = vmul.f32 %v1957, 0.6931472
    %v1959 = vlog2.pop %v1931
    %v1960 = vmul.f32 %v1959, 0.6931472
    %v1961 = vlog2.pop %v1932
    %v1962 = vmul.f32 %v1961, 0.6931472
    %v1963 = vlog2.pop %v1933
    %v1964 = vmul.f32 %v1963, 0.6931472
    %v1965 = vlog2.pop %v1934
    %v1966 = vmul.f32 %v1965, 0.6931472
    %v1967 = vmul.f32 %v1823, %v1936
    %v1968 = vmul.f32 %v1824, %v1938
    %v1969 = vmul.f32 %v1825, %v1940
    %v1970 = vmul.f32 %v1826, %v1942
    %v1971 = vmul.f32 %v1827, %v1944
    %v1972 = vmul.f32 %v1828, %v1946
    %v1973 = vmul.f32 %v1829, %v1948
    %v1974 = vmul.f32 %v1830, %v1950
    %v1975 = vmul.f32 %v1831, %v1952
    %v1976 = vmul.f32 %v1832, %v1954
    %v1977 = vmul.f32 %v1833, %v1956
    %v1978 = vmul.f32 %v1834, %v1958
    %v1979 = vmul.f32 %v1835, %v1960
    %v1980 = vmul.f32 %v1836, %v1962
    %v1981 = vmul.f32 %v1837, %v1964
    %v1982 = vmul.f32 %v1838, %v1966
    %v1983 = vadd.f32 %v1687, %v1967
    %v1984 = vadd.f32 %v1688, %v1968
    %v1985 = vadd.f32 %v1689, %v1969
    %v1986 = vadd.f32 %v1690, %v1970
    %v1987 = vadd.f32 %v1691, %v1971
    %v1988 = vadd.f32 %v1692, %v1972
    %v1989 = vadd.f32 %v1693, %v1973
    %v1990 = vadd.f32 %v1694, %v1974
    %v1991 = vadd.f32 %v1695, %v1975
    %v1992 = vadd.f32 %v1696, %v1976
    %v1993 = vadd.f32 %v1697, %v1977
    %v1994 = vadd.f32 %v1698, %v1978
    %v1995 = vadd.f32 %v1699, %v1979
    %v1996 = vadd.f32 %v1700, %v1980
    %v1997 = vadd.f32 %v1701, %v1981
    %v1998 = vadd.f32 %v1702, %v1982
    %1999 = vset.pattern.permute.xlu0 2
    %2000 = vperm.xlu0 %1999, %v563
    %v2001 = vpop.permute.xlu0 %2000
    %2003 = vset.pattern.permute.xlu0 2
    %2004 = vperm.xlu0 %2003, %v565
    %v2005 = vpop.permute.xlu0 %2004
    %2007 = vset.pattern.permute.xlu0 2
    %2008 = vperm.xlu0 %2007, %v567
    %v2009 = vpop.permute.xlu0 %2008
    %2011 = vset.pattern.permute.xlu0 2
    %2012 = vperm.xlu0 %2011, %v569
    %v2013 = vpop.permute.xlu0 %2012
    %2015 = vset.pattern.permute.xlu0 2
    %2016 = vperm.xlu0 %2015, %v571
    %v2017 = vpop.permute.xlu0 %2016
    %2019 = vset.pattern.permute.xlu0 2
    %2020 = vperm.xlu0 %2019, %v573
    %v2021 = vpop.permute.xlu0 %2020
    %2023 = vset.pattern.permute.xlu0 2
    %2024 = vperm.xlu0 %2023, %v575
    %v2025 = vpop.permute.xlu0 %2024
    %2027 = vset.pattern.permute.xlu0 2
    %2028 = vperm.xlu0 %2027, %v577
    %v2029 = vpop.permute.xlu0 %2028
    %2031 = vset.pattern.permute.xlu0 2
    %2032 = vperm.xlu0 %2031, %v579
    %v2033 = vpop.permute.xlu0 %2032
    %2035 = vset.pattern.permute.xlu0 2
    %2036 = vperm.xlu0 %2035, %v581
    %v2037 = vpop.permute.xlu0 %2036
    %2039 = vset.pattern.permute.xlu0 2
    %2040 = vperm.xlu0 %2039, %v583
    %v2041 = vpop.permute.xlu0 %2040
    %2043 = vset.pattern.permute.xlu0 2
    %2044 = vperm.xlu0 %2043, %v585
    %v2045 = vpop.permute.xlu0 %2044
    %2047 = vset.pattern.permute.xlu0 2
    %2048 = vperm.xlu0 %2047, %v587
    %v2049 = vpop.permute.xlu0 %2048
    %2051 = vset.pattern.permute.xlu0 2
    %2052 = vperm.xlu0 %2051, %v589
    %v2053 = vpop.permute.xlu0 %2052
    %2055 = vset.pattern.permute.xlu0 2
    %2056 = vperm.xlu0 %2055, %v591
    %v2057 = vpop.permute.xlu0 %2056
    %2059 = vset.pattern.permute.xlu0 2
    %2060 = vperm.xlu0 %2059, %v593
    %v2061 = vpop.permute.xlu0 %2060
    %v2063 = vlaneseq
    %v2064 = vshrl.u32 %v2063, 7
    %v2065 = vsub.s32 2, %v2064
    %v2066 = vrot.slane %v979, %v2065
    %v2067 = vadd.f32 %v2001, %v2066
    %v2068 = vadd.f32 %v2005, %v2066
    %v2069 = vadd.f32 %v2009, %v2066
    %v2070 = vadd.f32 %v2013, %v2066
    %v2071 = vadd.f32 %v2017, %v2066
    %v2072 = vadd.f32 %v2021, %v2066
    %v2073 = vadd.f32 %v2025, %v2066
    %v2074 = vadd.f32 %v2029, %v2066
    %v2075 = vadd.f32 %v2033, %v2066
    %v2076 = vadd.f32 %v2037, %v2066
    %v2077 = vadd.f32 %v2041, %v2066
    %v2078 = vadd.f32 %v2045, %v2066
    %v2079 = vadd.f32 %v2049, %v2066
    %v2080 = vadd.f32 %v2053, %v2066
    %v2081 = vadd.f32 %v2057, %v2066
    %v2082 = vadd.f32 %v2061, %v2066
    %v2083 = vmul.f32 %v2067, 0.5
    %v2084 = vmul.f32 %v2068, 0.5
    %v2085 = vmul.f32 %v2069, 0.5
    %v2086 = vmul.f32 %v2070, 0.5
    %v2087 = vmul.f32 %v2071, 0.5
    %v2088 = vmul.f32 %v2072, 0.5
    %v2089 = vmul.f32 %v2073, 0.5
    %v2090 = vmul.f32 %v2074, 0.5
    %v2091 = vmul.f32 %v2075, 0.5
    %v2092 = vmul.f32 %v2076, 0.5
    %v2093 = vmul.f32 %v2077, 0.5
    %v2094 = vmul.f32 %v2078, 0.5
    %v2095 = vmul.f32 %v2079, 0.5
    %v2096 = vmul.f32 %v2080, 0.5
    %v2097 = vmul.f32 %v2081, 0.5
    %v2098 = vmul.f32 %v2082, 0.5
    %v2099 = vlaneseq
    %v2100 = vshrl.u32 %v2099, 7
    %v2101 = vsub.s32 2, %v2100
    %v2102 = vrot.slane %v1063, %v2101
    %v2103 = vadd.f32 %v2001, %v2102
    %v2104 = vadd.f32 %v2005, %v2102
    %v2105 = vadd.f32 %v2009, %v2102
    %v2106 = vadd.f32 %v2013, %v2102
    %v2107 = vadd.f32 %v2017, %v2102
    %v2108 = vadd.f32 %v2021, %v2102
    %v2109 = vadd.f32 %v2025, %v2102
    %v2110 = vadd.f32 %v2029, %v2102
    %v2111 = vadd.f32 %v2033, %v2102
    %v2112 = vadd.f32 %v2037, %v2102
    %v2113 = vadd.f32 %v2041, %v2102
    %v2114 = vadd.f32 %v2045, %v2102
    %v2115 = vadd.f32 %v2049, %v2102
    %v2116 = vadd.f32 %v2053, %v2102
    %v2117 = vadd.f32 %v2057, %v2102
    %v2118 = vadd.f32 %v2061, %v2102
    %v2119 = vmul.f32 %v2103, 0.5
    %v2120 = vmul.f32 %v2104, 0.5
    %v2121 = vmul.f32 %v2105, 0.5
    %v2122 = vmul.f32 %v2106, 0.5
    %v2123 = vmul.f32 %v2107, 0.5
    %v2124 = vmul.f32 %v2108, 0.5
    %v2125 = vmul.f32 %v2109, 0.5
    %v2126 = vmul.f32 %v2110, 0.5
    %v2127 = vmul.f32 %v2111, 0.5
    %v2128 = vmul.f32 %v2112, 0.5
    %v2129 = vmul.f32 %v2113, 0.5
    %v2130 = vmul.f32 %v2114, 0.5
    %v2131 = vmul.f32 %v2115, 0.5
    %v2132 = vmul.f32 %v2116, 0.5
    %v2133 = vmul.f32 %v2117, 0.5
    %v2134 = vmul.f32 %v2118, 0.5
    %v2135 = vmax.f32 %v2083, 1e-30
    %v2136 = vmax.f32 %v2084, 1e-30
    %v2137 = vmax.f32 %v2085, 1e-30
    %v2138 = vmax.f32 %v2086, 1e-30
    %v2139 = vmax.f32 %v2087, 1e-30
    %v2140 = vmax.f32 %v2088, 1e-30
    %v2141 = vmax.f32 %v2089, 1e-30
    %v2142 = vmax.f32 %v2090, 1e-30
    %v2143 = vmax.f32 %v2091, 1e-30
    %v2144 = vmax.f32 %v2092, 1e-30
    %v2145 = vmax.f32 %v2093, 1e-30
    %v2146 = vmax.f32 %v2094, 1e-30
    %v2147 = vmax.f32 %v2095, 1e-30
    %v2148 = vmax.f32 %v2096, 1e-30
    %v2149 = vmax.f32 %v2097, 1e-30
    %v2150 = vmax.f32 %v2098, 1e-30
    %v2151 = vlog2.pop %v2135
    %v2152 = vmul.f32 %v2151, 0.6931472
    %v2153 = vlog2.pop %v2136
    %v2154 = vmul.f32 %v2153, 0.6931472
    %v2155 = vlog2.pop %v2137
    %v2156 = vmul.f32 %v2155, 0.6931472
    %v2157 = vlog2.pop %v2138
    %v2158 = vmul.f32 %v2157, 0.6931472
    %v2159 = vlog2.pop %v2139
    %v2160 = vmul.f32 %v2159, 0.6931472
    %v2161 = vlog2.pop %v2140
    %v2162 = vmul.f32 %v2161, 0.6931472
    %v2163 = vlog2.pop %v2141
    %v2164 = vmul.f32 %v2163, 0.6931472
    %v2165 = vlog2.pop %v2142
    %v2166 = vmul.f32 %v2165, 0.6931472
    %v2167 = vlog2.pop %v2143
    %v2168 = vmul.f32 %v2167, 0.6931472
    %v2169 = vlog2.pop %v2144
    %v2170 = vmul.f32 %v2169, 0.6931472
    %v2171 = vlog2.pop %v2145
    %v2172 = vmul.f32 %v2171, 0.6931472
    %v2173 = vlog2.pop %v2146
    %v2174 = vmul.f32 %v2173, 0.6931472
    %v2175 = vlog2.pop %v2147
    %v2176 = vmul.f32 %v2175, 0.6931472
    %v2177 = vlog2.pop %v2148
    %v2178 = vmul.f32 %v2177, 0.6931472
    %v2179 = vlog2.pop %v2149
    %v2180 = vmul.f32 %v2179, 0.6931472
    %v2181 = vlog2.pop %v2150
    %v2182 = vmul.f32 %v2181, 0.6931472
    %v2183 = vmul.f32 %v2083, %v2152
    %v2184 = vmul.f32 %v2084, %v2154
    %v2185 = vmul.f32 %v2085, %v2156
    %v2186 = vmul.f32 %v2086, %v2158
    %v2187 = vmul.f32 %v2087, %v2160
    %v2188 = vmul.f32 %v2088, %v2162
    %v2189 = vmul.f32 %v2089, %v2164
    %v2190 = vmul.f32 %v2090, %v2166
    %v2191 = vmul.f32 %v2091, %v2168
    %v2192 = vmul.f32 %v2092, %v2170
    %v2193 = vmul.f32 %v2093, %v2172
    %v2194 = vmul.f32 %v2094, %v2174
    %v2195 = vmul.f32 %v2095, %v2176
    %v2196 = vmul.f32 %v2096, %v2178
    %v2197 = vmul.f32 %v2097, %v2180
    %v2198 = vmul.f32 %v2098, %v2182
    %v2199 = vadd.f32 %v1903, %v2183
    %v2200 = vadd.f32 %v1904, %v2184
    %v2201 = vadd.f32 %v1905, %v2185
    %v2202 = vadd.f32 %v1906, %v2186
    %v2203 = vadd.f32 %v1907, %v2187
    %v2204 = vadd.f32 %v1908, %v2188
    %v2205 = vadd.f32 %v1909, %v2189
    %v2206 = vadd.f32 %v1910, %v2190
    %v2207 = vadd.f32 %v1911, %v2191
    %v2208 = vadd.f32 %v1912, %v2192
    %v2209 = vadd.f32 %v1913, %v2193
    %v2210 = vadd.f32 %v1914, %v2194
    %v2211 = vadd.f32 %v1915, %v2195
    %v2212 = vadd.f32 %v1916, %v2196
    %v2213 = vadd.f32 %v1917, %v2197
    %v2214 = vadd.f32 %v1918, %v2198
    %v2215 = vmax.f32 %v2119, 1e-30
    %v2216 = vmax.f32 %v2120, 1e-30
    %v2217 = vmax.f32 %v2121, 1e-30
    %v2218 = vmax.f32 %v2122, 1e-30
    %v2219 = vmax.f32 %v2123, 1e-30
    %v2220 = vmax.f32 %v2124, 1e-30
    %v2221 = vmax.f32 %v2125, 1e-30
    %v2222 = vmax.f32 %v2126, 1e-30
    %v2223 = vmax.f32 %v2127, 1e-30
    %v2224 = vmax.f32 %v2128, 1e-30
    %v2225 = vmax.f32 %v2129, 1e-30
    %v2226 = vmax.f32 %v2130, 1e-30
    %v2227 = vmax.f32 %v2131, 1e-30
    %v2228 = vmax.f32 %v2132, 1e-30
    %v2229 = vmax.f32 %v2133, 1e-30
    %v2230 = vmax.f32 %v2134, 1e-30
    %v2231 = vlog2.pop %v2215
    %v2232 = vmul.f32 %v2231, 0.6931472
    %v2233 = vlog2.pop %v2216
    %v2234 = vmul.f32 %v2233, 0.6931472
    %v2235 = vlog2.pop %v2217
    %v2236 = vmul.f32 %v2235, 0.6931472
    %v2237 = vlog2.pop %v2218
    %v2238 = vmul.f32 %v2237, 0.6931472
    %v2239 = vlog2.pop %v2219
    %v2240 = vmul.f32 %v2239, 0.6931472
    %v2241 = vlog2.pop %v2220
    %v2242 = vmul.f32 %v2241, 0.6931472
    %v2243 = vlog2.pop %v2221
    %v2244 = vmul.f32 %v2243, 0.6931472
    %v2245 = vlog2.pop %v2222
    %v2246 = vmul.f32 %v2245, 0.6931472
    %v2247 = vlog2.pop %v2223
    %v2248 = vmul.f32 %v2247, 0.6931472
    %v2249 = vlog2.pop %v2224
    %v2250 = vmul.f32 %v2249, 0.6931472
    %v2251 = vlog2.pop %v2225
    %v2252 = vmul.f32 %v2251, 0.6931472
    %v2253 = vlog2.pop %v2226
    %v2254 = vmul.f32 %v2253, 0.6931472
    %v2255 = vlog2.pop %v2227
    %v2256 = vmul.f32 %v2255, 0.6931472
    %v2257 = vlog2.pop %v2228
    %v2258 = vmul.f32 %v2257, 0.6931472
    %v2259 = vlog2.pop %v2229
    %v2260 = vmul.f32 %v2259, 0.6931472
    %v2261 = vlog2.pop %v2230
    %v2262 = vmul.f32 %v2261, 0.6931472
    %v2263 = vmul.f32 %v2119, %v2232
    %v2264 = vmul.f32 %v2120, %v2234
    %v2265 = vmul.f32 %v2121, %v2236
    %v2266 = vmul.f32 %v2122, %v2238
    %v2267 = vmul.f32 %v2123, %v2240
    %v2268 = vmul.f32 %v2124, %v2242
    %v2269 = vmul.f32 %v2125, %v2244
    %v2270 = vmul.f32 %v2126, %v2246
    %v2271 = vmul.f32 %v2127, %v2248
    %v2272 = vmul.f32 %v2128, %v2250
    %v2273 = vmul.f32 %v2129, %v2252
    %v2274 = vmul.f32 %v2130, %v2254
    %v2275 = vmul.f32 %v2131, %v2256
    %v2276 = vmul.f32 %v2132, %v2258
    %v2277 = vmul.f32 %v2133, %v2260
    %v2278 = vmul.f32 %v2134, %v2262
    %v2279 = vadd.f32 %v1983, %v2263
    %v2280 = vadd.f32 %v1984, %v2264
    %v2281 = vadd.f32 %v1985, %v2265
    %v2282 = vadd.f32 %v1986, %v2266
    %v2283 = vadd.f32 %v1987, %v2267
    %v2284 = vadd.f32 %v1988, %v2268
    %v2285 = vadd.f32 %v1989, %v2269
    %v2286 = vadd.f32 %v1990, %v2270
    %v2287 = vadd.f32 %v1991, %v2271
    %v2288 = vadd.f32 %v1992, %v2272
    %v2289 = vadd.f32 %v1993, %v2273
    %v2290 = vadd.f32 %v1994, %v2274
    %v2291 = vadd.f32 %v1995, %v2275
    %v2292 = vadd.f32 %v1996, %v2276
    %v2293 = vadd.f32 %v1997, %v2277
    %v2294 = vadd.f32 %v1998, %v2278
    %2295 = vset.pattern.permute.xlu0 3
    %2296 = vperm.xlu0 %2295, %v563
    %v2297 = vpop.permute.xlu0 %2296
    %2299 = vset.pattern.permute.xlu0 3
    %2300 = vperm.xlu0 %2299, %v565
    %v2301 = vpop.permute.xlu0 %2300
    %2303 = vset.pattern.permute.xlu0 3
    %2304 = vperm.xlu0 %2303, %v567
    %v2305 = vpop.permute.xlu0 %2304
    %2307 = vset.pattern.permute.xlu0 3
    %2308 = vperm.xlu0 %2307, %v569
    %v2309 = vpop.permute.xlu0 %2308
    %2311 = vset.pattern.permute.xlu0 3
    %2312 = vperm.xlu0 %2311, %v571
    %v2313 = vpop.permute.xlu0 %2312
    %2315 = vset.pattern.permute.xlu0 3
    %2316 = vperm.xlu0 %2315, %v573
    %v2317 = vpop.permute.xlu0 %2316
    %2319 = vset.pattern.permute.xlu0 3
    %2320 = vperm.xlu0 %2319, %v575
    %v2321 = vpop.permute.xlu0 %2320
    %2323 = vset.pattern.permute.xlu0 3
    %2324 = vperm.xlu0 %2323, %v577
    %v2325 = vpop.permute.xlu0 %2324
    %2327 = vset.pattern.permute.xlu0 3
    %2328 = vperm.xlu0 %2327, %v579
    %v2329 = vpop.permute.xlu0 %2328
    %2331 = vset.pattern.permute.xlu0 3
    %2332 = vperm.xlu0 %2331, %v581
    %v2333 = vpop.permute.xlu0 %2332
    %2335 = vset.pattern.permute.xlu0 3
    %2336 = vperm.xlu0 %2335, %v583
    %v2337 = vpop.permute.xlu0 %2336
    %2339 = vset.pattern.permute.xlu0 3
    %2340 = vperm.xlu0 %2339, %v585
    %v2341 = vpop.permute.xlu0 %2340
    %2343 = vset.pattern.permute.xlu0 3
    %2344 = vperm.xlu0 %2343, %v587
    %v2345 = vpop.permute.xlu0 %2344
    %2347 = vset.pattern.permute.xlu0 3
    %2348 = vperm.xlu0 %2347, %v589
    %v2349 = vpop.permute.xlu0 %2348
    %2351 = vset.pattern.permute.xlu0 3
    %2352 = vperm.xlu0 %2351, %v591
    %v2353 = vpop.permute.xlu0 %2352
    %2355 = vset.pattern.permute.xlu0 3
    %2356 = vperm.xlu0 %2355, %v593
    %v2357 = vpop.permute.xlu0 %2356
    %v2359 = vlaneseq
    %v2360 = vshrl.u32 %v2359, 7
    %v2361 = vsub.s32 3, %v2360
    %v2362 = vrot.slane %v979, %v2361
    %v2363 = vadd.f32 %v2297, %v2362
    %v2364 = vadd.f32 %v2301, %v2362
    %v2365 = vadd.f32 %v2305, %v2362
    %v2366 = vadd.f32 %v2309, %v2362
    %v2367 = vadd.f32 %v2313, %v2362
    %v2368 = vadd.f32 %v2317, %v2362
    %v2369 = vadd.f32 %v2321, %v2362
    %v2370 = vadd.f32 %v2325, %v2362
    %v2371 = vadd.f32 %v2329, %v2362
    %v2372 = vadd.f32 %v2333, %v2362
    %v2373 = vadd.f32 %v2337, %v2362
    %v2374 = vadd.f32 %v2341, %v2362
    %v2375 = vadd.f32 %v2345, %v2362
    %v2376 = vadd.f32 %v2349, %v2362
    %v2377 = vadd.f32 %v2353, %v2362
    %v2378 = vadd.f32 %v2357, %v2362
    %v2379 = vmul.f32 %v2363, 0.5
    %v2380 = vmul.f32 %v2364, 0.5
    %v2381 = vmul.f32 %v2365, 0.5
    %v2382 = vmul.f32 %v2366, 0.5
    %v2383 = vmul.f32 %v2367, 0.5
    %v2384 = vmul.f32 %v2368, 0.5
    %v2385 = vmul.f32 %v2369, 0.5
    %v2386 = vmul.f32 %v2370, 0.5
    %v2387 = vmul.f32 %v2371, 0.5
    %v2388 = vmul.f32 %v2372, 0.5
    %v2389 = vmul.f32 %v2373, 0.5
    %v2390 = vmul.f32 %v2374, 0.5
    %v2391 = vmul.f32 %v2375, 0.5
    %v2392 = vmul.f32 %v2376, 0.5
    %v2393 = vmul.f32 %v2377, 0.5
    %v2394 = vmul.f32 %v2378, 0.5
    %v2395 = vlaneseq
    %v2396 = vshrl.u32 %v2395, 7
    %v2397 = vsub.s32 3, %v2396
    %v2398 = vrot.slane %v1063, %v2397
    %v2399 = vadd.f32 %v2297, %v2398
    %v2400 = vadd.f32 %v2301, %v2398
    %v2401 = vadd.f32 %v2305, %v2398
    %v2402 = vadd.f32 %v2309, %v2398
    %v2403 = vadd.f32 %v2313, %v2398
    %v2404 = vadd.f32 %v2317, %v2398
    %v2405 = vadd.f32 %v2321, %v2398
    %v2406 = vadd.f32 %v2325, %v2398
    %v2407 = vadd.f32 %v2329, %v2398
    %v2408 = vadd.f32 %v2333, %v2398
    %v2409 = vadd.f32 %v2337, %v2398
    %v2410 = vadd.f32 %v2341, %v2398
    %v2411 = vadd.f32 %v2345, %v2398
    %v2412 = vadd.f32 %v2349, %v2398
    %v2413 = vadd.f32 %v2353, %v2398
    %v2414 = vadd.f32 %v2357, %v2398
    %v2415 = vmul.f32 %v2399, 0.5
    %v2416 = vmul.f32 %v2400, 0.5
    %v2417 = vmul.f32 %v2401, 0.5
    %v2418 = vmul.f32 %v2402, 0.5
    %v2419 = vmul.f32 %v2403, 0.5
    %v2420 = vmul.f32 %v2404, 0.5
    %v2421 = vmul.f32 %v2405, 0.5
    %v2422 = vmul.f32 %v2406, 0.5
    %v2423 = vmul.f32 %v2407, 0.5
    %v2424 = vmul.f32 %v2408, 0.5
    %v2425 = vmul.f32 %v2409, 0.5
    %v2426 = vmul.f32 %v2410, 0.5
    %v2427 = vmul.f32 %v2411, 0.5
    %v2428 = vmul.f32 %v2412, 0.5
    %v2429 = vmul.f32 %v2413, 0.5
    %v2430 = vmul.f32 %v2414, 0.5
    %v2431 = vmax.f32 %v2379, 1e-30
    %v2432 = vmax.f32 %v2380, 1e-30
    %v2433 = vmax.f32 %v2381, 1e-30
    %v2434 = vmax.f32 %v2382, 1e-30
    %v2435 = vmax.f32 %v2383, 1e-30
    %v2436 = vmax.f32 %v2384, 1e-30
    %v2437 = vmax.f32 %v2385, 1e-30
    %v2438 = vmax.f32 %v2386, 1e-30
    %v2439 = vmax.f32 %v2387, 1e-30
    %v2440 = vmax.f32 %v2388, 1e-30
    %v2441 = vmax.f32 %v2389, 1e-30
    %v2442 = vmax.f32 %v2390, 1e-30
    %v2443 = vmax.f32 %v2391, 1e-30
    %v2444 = vmax.f32 %v2392, 1e-30
    %v2445 = vmax.f32 %v2393, 1e-30
    %v2446 = vmax.f32 %v2394, 1e-30
    %v2447 = vlog2.pop %v2431
    %v2448 = vmul.f32 %v2447, 0.6931472
    %v2449 = vlog2.pop %v2432
    %v2450 = vmul.f32 %v2449, 0.6931472
    %v2451 = vlog2.pop %v2433
    %v2452 = vmul.f32 %v2451, 0.6931472
    %v2453 = vlog2.pop %v2434
    %v2454 = vmul.f32 %v2453, 0.6931472
    %v2455 = vlog2.pop %v2435
    %v2456 = vmul.f32 %v2455, 0.6931472
    %v2457 = vlog2.pop %v2436
    %v2458 = vmul.f32 %v2457, 0.6931472
    %v2459 = vlog2.pop %v2437
    %v2460 = vmul.f32 %v2459, 0.6931472
    %v2461 = vlog2.pop %v2438
    %v2462 = vmul.f32 %v2461, 0.6931472
    %v2463 = vlog2.pop %v2439
    %v2464 = vmul.f32 %v2463, 0.6931472
    %v2465 = vlog2.pop %v2440
    %v2466 = vmul.f32 %v2465, 0.6931472
    %v2467 = vlog2.pop %v2441
    %v2468 = vmul.f32 %v2467, 0.6931472
    %v2469 = vlog2.pop %v2442
    %v2470 = vmul.f32 %v2469, 0.6931472
    %v2471 = vlog2.pop %v2443
    %v2472 = vmul.f32 %v2471, 0.6931472
    %v2473 = vlog2.pop %v2444
    %v2474 = vmul.f32 %v2473, 0.6931472
    %v2475 = vlog2.pop %v2445
    %v2476 = vmul.f32 %v2475, 0.6931472
    %v2477 = vlog2.pop %v2446
    %v2478 = vmul.f32 %v2477, 0.6931472
    %v2479 = vmul.f32 %v2379, %v2448
    %v2480 = vmul.f32 %v2380, %v2450
    %v2481 = vmul.f32 %v2381, %v2452
    %v2482 = vmul.f32 %v2382, %v2454
    %v2483 = vmul.f32 %v2383, %v2456
    %v2484 = vmul.f32 %v2384, %v2458
    %v2485 = vmul.f32 %v2385, %v2460
    %v2486 = vmul.f32 %v2386, %v2462
    %v2487 = vmul.f32 %v2387, %v2464
    %v2488 = vmul.f32 %v2388, %v2466
    %v2489 = vmul.f32 %v2389, %v2468
    %v2490 = vmul.f32 %v2390, %v2470
    %v2491 = vmul.f32 %v2391, %v2472
    %v2492 = vmul.f32 %v2392, %v2474
    %v2493 = vmul.f32 %v2393, %v2476
    %v2494 = vmul.f32 %v2394, %v2478
    %v2495 = vadd.f32 %v2199, %v2479
    %v2496 = vadd.f32 %v2200, %v2480
    %v2497 = vadd.f32 %v2201, %v2481
    %v2498 = vadd.f32 %v2202, %v2482
    %v2499 = vadd.f32 %v2203, %v2483
    %v2500 = vadd.f32 %v2204, %v2484
    %v2501 = vadd.f32 %v2205, %v2485
    %v2502 = vadd.f32 %v2206, %v2486
    %v2503 = vadd.f32 %v2207, %v2487
    %v2504 = vadd.f32 %v2208, %v2488
    %v2505 = vadd.f32 %v2209, %v2489
    %v2506 = vadd.f32 %v2210, %v2490
    %v2507 = vadd.f32 %v2211, %v2491
    %v2508 = vadd.f32 %v2212, %v2492
    %v2509 = vadd.f32 %v2213, %v2493
    %v2510 = vadd.f32 %v2214, %v2494
    %v2511 = vmax.f32 %v2415, 1e-30
    %v2512 = vmax.f32 %v2416, 1e-30
    %v2513 = vmax.f32 %v2417, 1e-30
    %v2514 = vmax.f32 %v2418, 1e-30
    %v2515 = vmax.f32 %v2419, 1e-30
    %v2516 = vmax.f32 %v2420, 1e-30
    %v2517 = vmax.f32 %v2421, 1e-30
    %v2518 = vmax.f32 %v2422, 1e-30
    %v2519 = vmax.f32 %v2423, 1e-30
    %v2520 = vmax.f32 %v2424, 1e-30
    %v2521 = vmax.f32 %v2425, 1e-30
    %v2522 = vmax.f32 %v2426, 1e-30
    %v2523 = vmax.f32 %v2427, 1e-30
    %v2524 = vmax.f32 %v2428, 1e-30
    %v2525 = vmax.f32 %v2429, 1e-30
    %v2526 = vmax.f32 %v2430, 1e-30
    %v2527 = vlog2.pop %v2511
    %v2528 = vmul.f32 %v2527, 0.6931472
    %v2529 = vlog2.pop %v2512
    %v2530 = vmul.f32 %v2529, 0.6931472
    %v2531 = vlog2.pop %v2513
    %v2532 = vmul.f32 %v2531, 0.6931472
    %v2533 = vlog2.pop %v2514
    %v2534 = vmul.f32 %v2533, 0.6931472
    %v2535 = vlog2.pop %v2515
    %v2536 = vmul.f32 %v2535, 0.6931472
    %v2537 = vlog2.pop %v2516
    %v2538 = vmul.f32 %v2537, 0.6931472
    %v2539 = vlog2.pop %v2517
    %v2540 = vmul.f32 %v2539, 0.6931472
    %v2541 = vlog2.pop %v2518
    %v2542 = vmul.f32 %v2541, 0.6931472
    %v2543 = vlog2.pop %v2519
    %v2544 = vmul.f32 %v2543, 0.6931472
    %v2545 = vlog2.pop %v2520
    %v2546 = vmul.f32 %v2545, 0.6931472
    %v2547 = vlog2.pop %v2521
    %v2548 = vmul.f32 %v2547, 0.6931472
    %v2549 = vlog2.pop %v2522
    %v2550 = vmul.f32 %v2549, 0.6931472
    %v2551 = vlog2.pop %v2523
    %v2552 = vmul.f32 %v2551, 0.6931472
    %v2553 = vlog2.pop %v2524
    %v2554 = vmul.f32 %v2553, 0.6931472
    %v2555 = vlog2.pop %v2525
    %v2556 = vmul.f32 %v2555, 0.6931472
    %v2557 = vlog2.pop %v2526
    %v2558 = vmul.f32 %v2557, 0.6931472
    %v2559 = vmul.f32 %v2415, %v2528
    %v2560 = vmul.f32 %v2416, %v2530
    %v2561 = vmul.f32 %v2417, %v2532
    %v2562 = vmul.f32 %v2418, %v2534
    %v2563 = vmul.f32 %v2419, %v2536
    %v2564 = vmul.f32 %v2420, %v2538
    %v2565 = vmul.f32 %v2421, %v2540
    %v2566 = vmul.f32 %v2422, %v2542
    %v2567 = vmul.f32 %v2423, %v2544
    %v2568 = vmul.f32 %v2424, %v2546
    %v2569 = vmul.f32 %v2425, %v2548
    %v2570 = vmul.f32 %v2426, %v2550
    %v2571 = vmul.f32 %v2427, %v2552
    %v2572 = vmul.f32 %v2428, %v2554
    %v2573 = vmul.f32 %v2429, %v2556
    %v2574 = vmul.f32 %v2430, %v2558
    %v2575 = vadd.f32 %v2279, %v2559
    %v2576 = vadd.f32 %v2280, %v2560
    %v2577 = vadd.f32 %v2281, %v2561
    %v2578 = vadd.f32 %v2282, %v2562
    %v2579 = vadd.f32 %v2283, %v2563
    %v2580 = vadd.f32 %v2284, %v2564
    %v2581 = vadd.f32 %v2285, %v2565
    %v2582 = vadd.f32 %v2286, %v2566
    %v2583 = vadd.f32 %v2287, %v2567
    %v2584 = vadd.f32 %v2288, %v2568
    %v2585 = vadd.f32 %v2289, %v2569
    %v2586 = vadd.f32 %v2290, %v2570
    %v2587 = vadd.f32 %v2291, %v2571
    %v2588 = vadd.f32 %v2292, %v2572
    %v2589 = vadd.f32 %v2293, %v2573
    %v2590 = vadd.f32 %v2294, %v2574
    %2591 = vset.pattern.permute.xlu0 4
    %2592 = vperm.xlu0 %2591, %v563
    %v2593 = vpop.permute.xlu0 %2592
    %2595 = vset.pattern.permute.xlu0 4
    %2596 = vperm.xlu0 %2595, %v565
    %v2597 = vpop.permute.xlu0 %2596
    %2599 = vset.pattern.permute.xlu0 4
    %2600 = vperm.xlu0 %2599, %v567
    %v2601 = vpop.permute.xlu0 %2600
    %2603 = vset.pattern.permute.xlu0 4
    %2604 = vperm.xlu0 %2603, %v569
    %v2605 = vpop.permute.xlu0 %2604
    %2607 = vset.pattern.permute.xlu0 4
    %2608 = vperm.xlu0 %2607, %v571
    %v2609 = vpop.permute.xlu0 %2608
    %2611 = vset.pattern.permute.xlu0 4
    %2612 = vperm.xlu0 %2611, %v573
    %v2613 = vpop.permute.xlu0 %2612
    %2615 = vset.pattern.permute.xlu0 4
    %2616 = vperm.xlu0 %2615, %v575
    %v2617 = vpop.permute.xlu0 %2616
    %2619 = vset.pattern.permute.xlu0 4
    %2620 = vperm.xlu0 %2619, %v577
    %v2621 = vpop.permute.xlu0 %2620
    %2623 = vset.pattern.permute.xlu0 4
    %2624 = vperm.xlu0 %2623, %v579
    %v2625 = vpop.permute.xlu0 %2624
    %2627 = vset.pattern.permute.xlu0 4
    %2628 = vperm.xlu0 %2627, %v581
    %v2629 = vpop.permute.xlu0 %2628
    %2631 = vset.pattern.permute.xlu0 4
    %2632 = vperm.xlu0 %2631, %v583
    %v2633 = vpop.permute.xlu0 %2632
    %2635 = vset.pattern.permute.xlu0 4
    %2636 = vperm.xlu0 %2635, %v585
    %v2637 = vpop.permute.xlu0 %2636
    %2639 = vset.pattern.permute.xlu0 4
    %2640 = vperm.xlu0 %2639, %v587
    %v2641 = vpop.permute.xlu0 %2640
    %2643 = vset.pattern.permute.xlu0 4
    %2644 = vperm.xlu0 %2643, %v589
    %v2645 = vpop.permute.xlu0 %2644
    %2647 = vset.pattern.permute.xlu0 4
    %2648 = vperm.xlu0 %2647, %v591
    %v2649 = vpop.permute.xlu0 %2648
    %2651 = vset.pattern.permute.xlu0 4
    %2652 = vperm.xlu0 %2651, %v593
    %v2653 = vpop.permute.xlu0 %2652
    %v2655 = vlaneseq
    %v2656 = vshrl.u32 %v2655, 7
    %v2657 = vsub.s32 4, %v2656
    %v2658 = vrot.slane %v979, %v2657
    %v2659 = vadd.f32 %v2593, %v2658
    %v2660 = vadd.f32 %v2597, %v2658
    %v2661 = vadd.f32 %v2601, %v2658
    %v2662 = vadd.f32 %v2605, %v2658
    %v2663 = vadd.f32 %v2609, %v2658
    %v2664 = vadd.f32 %v2613, %v2658
    %v2665 = vadd.f32 %v2617, %v2658
    %v2666 = vadd.f32 %v2621, %v2658
    %v2667 = vadd.f32 %v2625, %v2658
    %v2668 = vadd.f32 %v2629, %v2658
    %v2669 = vadd.f32 %v2633, %v2658
    %v2670 = vadd.f32 %v2637, %v2658
    %v2671 = vadd.f32 %v2641, %v2658
    %v2672 = vadd.f32 %v2645, %v2658
    %v2673 = vadd.f32 %v2649, %v2658
    %v2674 = vadd.f32 %v2653, %v2658
    %v2675 = vmul.f32 %v2659, 0.5
    %v2676 = vmul.f32 %v2660, 0.5
    %v2677 = vmul.f32 %v2661, 0.5
    %v2678 = vmul.f32 %v2662, 0.5
    %v2679 = vmul.f32 %v2663, 0.5
    %v2680 = vmul.f32 %v2664, 0.5
    %v2681 = vmul.f32 %v2665, 0.5
    %v2682 = vmul.f32 %v2666, 0.5
    %v2683 = vmul.f32 %v2667, 0.5
    %v2684 = vmul.f32 %v2668, 0.5
    %v2685 = vmul.f32 %v2669, 0.5
    %v2686 = vmul.f32 %v2670, 0.5
    %v2687 = vmul.f32 %v2671, 0.5
    %v2688 = vmul.f32 %v2672, 0.5
    %v2689 = vmul.f32 %v2673, 0.5
    %v2690 = vmul.f32 %v2674, 0.5
    %v2691 = vlaneseq
    %v2692 = vshrl.u32 %v2691, 7
    %v2693 = vsub.s32 4, %v2692
    %v2694 = vrot.slane %v1063, %v2693
    %v2695 = vadd.f32 %v2593, %v2694
    %v2696 = vadd.f32 %v2597, %v2694
    %v2697 = vadd.f32 %v2601, %v2694
    %v2698 = vadd.f32 %v2605, %v2694
    %v2699 = vadd.f32 %v2609, %v2694
    %v2700 = vadd.f32 %v2613, %v2694
    %v2701 = vadd.f32 %v2617, %v2694
    %v2702 = vadd.f32 %v2621, %v2694
    %v2703 = vadd.f32 %v2625, %v2694
    %v2704 = vadd.f32 %v2629, %v2694
    %v2705 = vadd.f32 %v2633, %v2694
    %v2706 = vadd.f32 %v2637, %v2694
    %v2707 = vadd.f32 %v2641, %v2694
    %v2708 = vadd.f32 %v2645, %v2694
    %v2709 = vadd.f32 %v2649, %v2694
    %v2710 = vadd.f32 %v2653, %v2694
    %v2711 = vmul.f32 %v2695, 0.5
    %v2712 = vmul.f32 %v2696, 0.5
    %v2713 = vmul.f32 %v2697, 0.5
    %v2714 = vmul.f32 %v2698, 0.5
    %v2715 = vmul.f32 %v2699, 0.5
    %v2716 = vmul.f32 %v2700, 0.5
    %v2717 = vmul.f32 %v2701, 0.5
    %v2718 = vmul.f32 %v2702, 0.5
    %v2719 = vmul.f32 %v2703, 0.5
    %v2720 = vmul.f32 %v2704, 0.5
    %v2721 = vmul.f32 %v2705, 0.5
    %v2722 = vmul.f32 %v2706, 0.5
    %v2723 = vmul.f32 %v2707, 0.5
    %v2724 = vmul.f32 %v2708, 0.5
    %v2725 = vmul.f32 %v2709, 0.5
    %v2726 = vmul.f32 %v2710, 0.5
    %v2727 = vmax.f32 %v2675, 1e-30
    %v2728 = vmax.f32 %v2676, 1e-30
    %v2729 = vmax.f32 %v2677, 1e-30
    %v2730 = vmax.f32 %v2678, 1e-30
    %v2731 = vmax.f32 %v2679, 1e-30
    %v2732 = vmax.f32 %v2680, 1e-30
    %v2733 = vmax.f32 %v2681, 1e-30
    %v2734 = vmax.f32 %v2682, 1e-30
    %v2735 = vmax.f32 %v2683, 1e-30
    %v2736 = vmax.f32 %v2684, 1e-30
    %v2737 = vmax.f32 %v2685, 1e-30
    %v2738 = vmax.f32 %v2686, 1e-30
    %v2739 = vmax.f32 %v2687, 1e-30
    %v2740 = vmax.f32 %v2688, 1e-30
    %v2741 = vmax.f32 %v2689, 1e-30
    %v2742 = vmax.f32 %v2690, 1e-30
    %v2743 = vlog2.pop %v2727
    %v2744 = vmul.f32 %v2743, 0.6931472
    %v2745 = vlog2.pop %v2728
    %v2746 = vmul.f32 %v2745, 0.6931472
    %v2747 = vlog2.pop %v2729
    %v2748 = vmul.f32 %v2747, 0.6931472
    %v2749 = vlog2.pop %v2730
    %v2750 = vmul.f32 %v2749, 0.6931472
    %v2751 = vlog2.pop %v2731
    %v2752 = vmul.f32 %v2751, 0.6931472
    %v2753 = vlog2.pop %v2732
    %v2754 = vmul.f32 %v2753, 0.6931472
    %v2755 = vlog2.pop %v2733
    %v2756 = vmul.f32 %v2755, 0.6931472
    %v2757 = vlog2.pop %v2734
    %v2758 = vmul.f32 %v2757, 0.6931472
    %v2759 = vlog2.pop %v2735
    %v2760 = vmul.f32 %v2759, 0.6931472
    %v2761 = vlog2.pop %v2736
    %v2762 = vmul.f32 %v2761, 0.6931472
    %v2763 = vlog2.pop %v2737
    %v2764 = vmul.f32 %v2763, 0.6931472
    %v2765 = vlog2.pop %v2738
    %v2766 = vmul.f32 %v2765, 0.6931472
    %v2767 = vlog2.pop %v2739
    %v2768 = vmul.f32 %v2767, 0.6931472
    %v2769 = vlog2.pop %v2740
    %v2770 = vmul.f32 %v2769, 0.6931472
    %v2771 = vlog2.pop %v2741
    %v2772 = vmul.f32 %v2771, 0.6931472
    %v2773 = vlog2.pop %v2742
    %v2774 = vmul.f32 %v2773, 0.6931472
    %v2775 = vmul.f32 %v2675, %v2744
    %v2776 = vmul.f32 %v2676, %v2746
    %v2777 = vmul.f32 %v2677, %v2748
    %v2778 = vmul.f32 %v2678, %v2750
    %v2779 = vmul.f32 %v2679, %v2752
    %v2780 = vmul.f32 %v2680, %v2754
    %v2781 = vmul.f32 %v2681, %v2756
    %v2782 = vmul.f32 %v2682, %v2758
    %v2783 = vmul.f32 %v2683, %v2760
    %v2784 = vmul.f32 %v2684, %v2762
    %v2785 = vmul.f32 %v2685, %v2764
    %v2786 = vmul.f32 %v2686, %v2766
    %v2787 = vmul.f32 %v2687, %v2768
    %v2788 = vmul.f32 %v2688, %v2770
    %v2789 = vmul.f32 %v2689, %v2772
    %v2790 = vmul.f32 %v2690, %v2774
    %v2791 = vadd.f32 %v2495, %v2775
    %v2792 = vadd.f32 %v2496, %v2776
    %v2793 = vadd.f32 %v2497, %v2777
    %v2794 = vadd.f32 %v2498, %v2778
    %v2795 = vadd.f32 %v2499, %v2779
    %v2796 = vadd.f32 %v2500, %v2780
    %v2797 = vadd.f32 %v2501, %v2781
    %v2798 = vadd.f32 %v2502, %v2782
    %v2799 = vadd.f32 %v2503, %v2783
    %v2800 = vadd.f32 %v2504, %v2784
    %v2801 = vadd.f32 %v2505, %v2785
    %v2802 = vadd.f32 %v2506, %v2786
    %v2803 = vadd.f32 %v2507, %v2787
    %v2804 = vadd.f32 %v2508, %v2788
    %v2805 = vadd.f32 %v2509, %v2789
    %v2806 = vadd.f32 %v2510, %v2790
    %v2807 = vmax.f32 %v2711, 1e-30
    %v2808 = vmax.f32 %v2712, 1e-30
    %v2809 = vmax.f32 %v2713, 1e-30
    %v2810 = vmax.f32 %v2714, 1e-30
    %v2811 = vmax.f32 %v2715, 1e-30
    %v2812 = vmax.f32 %v2716, 1e-30
    %v2813 = vmax.f32 %v2717, 1e-30
    %v2814 = vmax.f32 %v2718, 1e-30
    %v2815 = vmax.f32 %v2719, 1e-30
    %v2816 = vmax.f32 %v2720, 1e-30
    %v2817 = vmax.f32 %v2721, 1e-30
    %v2818 = vmax.f32 %v2722, 1e-30
    %v2819 = vmax.f32 %v2723, 1e-30
    %v2820 = vmax.f32 %v2724, 1e-30
    %v2821 = vmax.f32 %v2725, 1e-30
    %v2822 = vmax.f32 %v2726, 1e-30
    %v2823 = vlog2.pop %v2807
    %v2824 = vmul.f32 %v2823, 0.6931472
    %v2825 = vlog2.pop %v2808
    %v2826 = vmul.f32 %v2825, 0.6931472
    %v2827 = vlog2.pop %v2809
    %v2828 = vmul.f32 %v2827, 0.6931472
    %v2829 = vlog2.pop %v2810
    %v2830 = vmul.f32 %v2829, 0.6931472
    %v2831 = vlog2.pop %v2811
    %v2832 = vmul.f32 %v2831, 0.6931472
    %v2833 = vlog2.pop %v2812
    %v2834 = vmul.f32 %v2833, 0.6931472
    %v2835 = vlog2.pop %v2813
    %v2836 = vmul.f32 %v2835, 0.6931472
    %v2837 = vlog2.pop %v2814
    %v2838 = vmul.f32 %v2837, 0.6931472
    %v2839 = vlog2.pop %v2815
    %v2840 = vmul.f32 %v2839, 0.6931472
    %v2841 = vlog2.pop %v2816
    %v2842 = vmul.f32 %v2841, 0.6931472
    %v2843 = vlog2.pop %v2817
    %v2844 = vmul.f32 %v2843, 0.6931472
    %v2845 = vlog2.pop %v2818
    %v2846 = vmul.f32 %v2845, 0.6931472
    %v2847 = vlog2.pop %v2819
    %v2848 = vmul.f32 %v2847, 0.6931472
    %v2849 = vlog2.pop %v2820
    %v2850 = vmul.f32 %v2849, 0.6931472
    %v2851 = vlog2.pop %v2821
    %v2852 = vmul.f32 %v2851, 0.6931472
    %v2853 = vlog2.pop %v2822
    %v2854 = vmul.f32 %v2853, 0.6931472
    %v2855 = vmul.f32 %v2711, %v2824
    %v2856 = vmul.f32 %v2712, %v2826
    %v2857 = vmul.f32 %v2713, %v2828
    %v2858 = vmul.f32 %v2714, %v2830
    %v2859 = vmul.f32 %v2715, %v2832
    %v2860 = vmul.f32 %v2716, %v2834
    %v2861 = vmul.f32 %v2717, %v2836
    %v2862 = vmul.f32 %v2718, %v2838
    %v2863 = vmul.f32 %v2719, %v2840
    %v2864 = vmul.f32 %v2720, %v2842
    %v2865 = vmul.f32 %v2721, %v2844
    %v2866 = vmul.f32 %v2722, %v2846
    %v2867 = vmul.f32 %v2723, %v2848
    %v2868 = vmul.f32 %v2724, %v2850
    %v2869 = vmul.f32 %v2725, %v2852
    %v2870 = vmul.f32 %v2726, %v2854
    %v2871 = vadd.f32 %v2575, %v2855
    %v2872 = vadd.f32 %v2576, %v2856
    %v2873 = vadd.f32 %v2577, %v2857
    %v2874 = vadd.f32 %v2578, %v2858
    %v2875 = vadd.f32 %v2579, %v2859
    %v2876 = vadd.f32 %v2580, %v2860
    %v2877 = vadd.f32 %v2581, %v2861
    %v2878 = vadd.f32 %v2582, %v2862
    %v2879 = vadd.f32 %v2583, %v2863
    %v2880 = vadd.f32 %v2584, %v2864
    %v2881 = vadd.f32 %v2585, %v2865
    %v2882 = vadd.f32 %v2586, %v2866
    %v2883 = vadd.f32 %v2587, %v2867
    %v2884 = vadd.f32 %v2588, %v2868
    %v2885 = vadd.f32 %v2589, %v2869
    %v2886 = vadd.f32 %v2590, %v2870
    %2887 = vset.pattern.permute.xlu0 5
    %2888 = vperm.xlu0 %2887, %v563
    %v2889 = vpop.permute.xlu0 %2888
    %2891 = vset.pattern.permute.xlu0 5
    %2892 = vperm.xlu0 %2891, %v565
    %v2893 = vpop.permute.xlu0 %2892
    %2895 = vset.pattern.permute.xlu0 5
    %2896 = vperm.xlu0 %2895, %v567
    %v2897 = vpop.permute.xlu0 %2896
    %2899 = vset.pattern.permute.xlu0 5
    %2900 = vperm.xlu0 %2899, %v569
    %v2901 = vpop.permute.xlu0 %2900
    %2903 = vset.pattern.permute.xlu0 5
    %2904 = vperm.xlu0 %2903, %v571
    %v2905 = vpop.permute.xlu0 %2904
    %2907 = vset.pattern.permute.xlu0 5
    %2908 = vperm.xlu0 %2907, %v573
    %v2909 = vpop.permute.xlu0 %2908
    %2911 = vset.pattern.permute.xlu0 5
    %2912 = vperm.xlu0 %2911, %v575
    %v2913 = vpop.permute.xlu0 %2912
    %2915 = vset.pattern.permute.xlu0 5
    %2916 = vperm.xlu0 %2915, %v577
    %v2917 = vpop.permute.xlu0 %2916
    %2919 = vset.pattern.permute.xlu0 5
    %2920 = vperm.xlu0 %2919, %v579
    %v2921 = vpop.permute.xlu0 %2920
    %2923 = vset.pattern.permute.xlu0 5
    %2924 = vperm.xlu0 %2923, %v581
    %v2925 = vpop.permute.xlu0 %2924
    %2927 = vset.pattern.permute.xlu0 5
    %2928 = vperm.xlu0 %2927, %v583
    %v2929 = vpop.permute.xlu0 %2928
    %2931 = vset.pattern.permute.xlu0 5
    %2932 = vperm.xlu0 %2931, %v585
    %v2933 = vpop.permute.xlu0 %2932
    %2935 = vset.pattern.permute.xlu0 5
    %2936 = vperm.xlu0 %2935, %v587
    %v2937 = vpop.permute.xlu0 %2936
    %2939 = vset.pattern.permute.xlu0 5
    %2940 = vperm.xlu0 %2939, %v589
    %v2941 = vpop.permute.xlu0 %2940
    %2943 = vset.pattern.permute.xlu0 5
    %2944 = vperm.xlu0 %2943, %v591
    %v2945 = vpop.permute.xlu0 %2944
    %2947 = vset.pattern.permute.xlu0 5
    %2948 = vperm.xlu0 %2947, %v593
    %v2949 = vpop.permute.xlu0 %2948
    %v2951 = vlaneseq
    %v2952 = vshrl.u32 %v2951, 7
    %v2953 = vsub.s32 5, %v2952
    %v2954 = vrot.slane %v979, %v2953
    %v2955 = vadd.f32 %v2889, %v2954
    %v2956 = vadd.f32 %v2893, %v2954
    %v2957 = vadd.f32 %v2897, %v2954
    %v2958 = vadd.f32 %v2901, %v2954
    %v2959 = vadd.f32 %v2905, %v2954
    %v2960 = vadd.f32 %v2909, %v2954
    %v2961 = vadd.f32 %v2913, %v2954
    %v2962 = vadd.f32 %v2917, %v2954
    %v2963 = vadd.f32 %v2921, %v2954
    %v2964 = vadd.f32 %v2925, %v2954
    %v2965 = vadd.f32 %v2929, %v2954
    %v2966 = vadd.f32 %v2933, %v2954
    %v2967 = vadd.f32 %v2937, %v2954
    %v2968 = vadd.f32 %v2941, %v2954
    %v2969 = vadd.f32 %v2945, %v2954
    %v2970 = vadd.f32 %v2949, %v2954
    %v2971 = vmul.f32 %v2955, 0.5
    %v2972 = vmul.f32 %v2956, 0.5
    %v2973 = vmul.f32 %v2957, 0.5
    %v2974 = vmul.f32 %v2958, 0.5
    %v2975 = vmul.f32 %v2959, 0.5
    %v2976 = vmul.f32 %v2960, 0.5
    %v2977 = vmul.f32 %v2961, 0.5
    %v2978 = vmul.f32 %v2962, 0.5
    %v2979 = vmul.f32 %v2963, 0.5
    %v2980 = vmul.f32 %v2964, 0.5
    %v2981 = vmul.f32 %v2965, 0.5
    %v2982 = vmul.f32 %v2966, 0.5
    %v2983 = vmul.f32 %v2967, 0.5
    %v2984 = vmul.f32 %v2968, 0.5
    %v2985 = vmul.f32 %v2969, 0.5
    %v2986 = vmul.f32 %v2970, 0.5
    %v2987 = vlaneseq
    %v2988 = vshrl.u32 %v2987, 7
    %v2989 = vsub.s32 5, %v2988
    %v2990 = vrot.slane %v1063, %v2989
    %v2991 = vadd.f32 %v2889, %v2990
    %v2992 = vadd.f32 %v2893, %v2990
    %v2993 = vadd.f32 %v2897, %v2990
    %v2994 = vadd.f32 %v2901, %v2990
    %v2995 = vadd.f32 %v2905, %v2990
    %v2996 = vadd.f32 %v2909, %v2990
    %v2997 = vadd.f32 %v2913, %v2990
    %v2998 = vadd.f32 %v2917, %v2990
    %v2999 = vadd.f32 %v2921, %v2990
    %v3000 = vadd.f32 %v2925, %v2990
    %v3001 = vadd.f32 %v2929, %v2990
    %v3002 = vadd.f32 %v2933, %v2990
    %v3003 = vadd.f32 %v2937, %v2990
    %v3004 = vadd.f32 %v2941, %v2990
    %v3005 = vadd.f32 %v2945, %v2990
    %v3006 = vadd.f32 %v2949, %v2990
    %v3007 = vmul.f32 %v2991, 0.5
    %v3008 = vmul.f32 %v2992, 0.5
    %v3009 = vmul.f32 %v2993, 0.5
    %v3010 = vmul.f32 %v2994, 0.5
    %v3011 = vmul.f32 %v2995, 0.5
    %v3012 = vmul.f32 %v2996, 0.5
    %v3013 = vmul.f32 %v2997, 0.5
    %v3014 = vmul.f32 %v2998, 0.5
    %v3015 = vmul.f32 %v2999, 0.5
    %v3016 = vmul.f32 %v3000, 0.5
    %v3017 = vmul.f32 %v3001, 0.5
    %v3018 = vmul.f32 %v3002, 0.5
    %v3019 = vmul.f32 %v3003, 0.5
    %v3020 = vmul.f32 %v3004, 0.5
    %v3021 = vmul.f32 %v3005, 0.5
    %v3022 = vmul.f32 %v3006, 0.5
    %v3023 = vmax.f32 %v2971, 1e-30
    %v3024 = vmax.f32 %v2972, 1e-30
    %v3025 = vmax.f32 %v2973, 1e-30
    %v3026 = vmax.f32 %v2974, 1e-30
    %v3027 = vmax.f32 %v2975, 1e-30
    %v3028 = vmax.f32 %v2976, 1e-30
    %v3029 = vmax.f32 %v2977, 1e-30
    %v3030 = vmax.f32 %v2978, 1e-30
    %v3031 = vmax.f32 %v2979, 1e-30
    %v3032 = vmax.f32 %v2980, 1e-30
    %v3033 = vmax.f32 %v2981, 1e-30
    %v3034 = vmax.f32 %v2982, 1e-30
    %v3035 = vmax.f32 %v2983, 1e-30
    %v3036 = vmax.f32 %v2984, 1e-30
    %v3037 = vmax.f32 %v2985, 1e-30
    %v3038 = vmax.f32 %v2986, 1e-30
    %v3039 = vlog2.pop %v3023
    %v3040 = vmul.f32 %v3039, 0.6931472
    %v3041 = vlog2.pop %v3024
    %v3042 = vmul.f32 %v3041, 0.6931472
    %v3043 = vlog2.pop %v3025
    %v3044 = vmul.f32 %v3043, 0.6931472
    %v3045 = vlog2.pop %v3026
    %v3046 = vmul.f32 %v3045, 0.6931472
    %v3047 = vlog2.pop %v3027
    %v3048 = vmul.f32 %v3047, 0.6931472
    %v3049 = vlog2.pop %v3028
    %v3050 = vmul.f32 %v3049, 0.6931472
    %v3051 = vlog2.pop %v3029
    %v3052 = vmul.f32 %v3051, 0.6931472
    %v3053 = vlog2.pop %v3030
    %v3054 = vmul.f32 %v3053, 0.6931472
    %v3055 = vlog2.pop %v3031
    %v3056 = vmul.f32 %v3055, 0.6931472
    %v3057 = vlog2.pop %v3032
    %v3058 = vmul.f32 %v3057, 0.6931472
    %v3059 = vlog2.pop %v3033
    %v3060 = vmul.f32 %v3059, 0.6931472
    %v3061 = vlog2.pop %v3034
    %v3062 = vmul.f32 %v3061, 0.6931472
    %v3063 = vlog2.pop %v3035
    %v3064 = vmul.f32 %v3063, 0.6931472
    %v3065 = vlog2.pop %v3036
    %v3066 = vmul.f32 %v3065, 0.6931472
    %v3067 = vlog2.pop %v3037
    %v3068 = vmul.f32 %v3067, 0.6931472
    %v3069 = vlog2.pop %v3038
    %v3070 = vmul.f32 %v3069, 0.6931472
    %v3071 = vmul.f32 %v2971, %v3040
    %v3072 = vmul.f32 %v2972, %v3042
    %v3073 = vmul.f32 %v2973, %v3044
    %v3074 = vmul.f32 %v2974, %v3046
    %v3075 = vmul.f32 %v2975, %v3048
    %v3076 = vmul.f32 %v2976, %v3050
    %v3077 = vmul.f32 %v2977, %v3052
    %v3078 = vmul.f32 %v2978, %v3054
    %v3079 = vmul.f32 %v2979, %v3056
    %v3080 = vmul.f32 %v2980, %v3058
    %v3081 = vmul.f32 %v2981, %v3060
    %v3082 = vmul.f32 %v2982, %v3062
    %v3083 = vmul.f32 %v2983, %v3064
    %v3084 = vmul.f32 %v2984, %v3066
    %v3085 = vmul.f32 %v2985, %v3068
    %v3086 = vmul.f32 %v2986, %v3070
    %v3087 = vadd.f32 %v2791, %v3071
    %v3088 = vadd.f32 %v2792, %v3072
    %v3089 = vadd.f32 %v2793, %v3073
    %v3090 = vadd.f32 %v2794, %v3074
    %v3091 = vadd.f32 %v2795, %v3075
    %v3092 = vadd.f32 %v2796, %v3076
    %v3093 = vadd.f32 %v2797, %v3077
    %v3094 = vadd.f32 %v2798, %v3078
    %v3095 = vadd.f32 %v2799, %v3079
    %v3096 = vadd.f32 %v2800, %v3080
    %v3097 = vadd.f32 %v2801, %v3081
    %v3098 = vadd.f32 %v2802, %v3082
    %v3099 = vadd.f32 %v2803, %v3083
    %v3100 = vadd.f32 %v2804, %v3084
    %v3101 = vadd.f32 %v2805, %v3085
    %v3102 = vadd.f32 %v2806, %v3086
    %v3103 = vmax.f32 %v3007, 1e-30
    %v3104 = vmax.f32 %v3008, 1e-30
    %v3105 = vmax.f32 %v3009, 1e-30
    %v3106 = vmax.f32 %v3010, 1e-30
    %v3107 = vmax.f32 %v3011, 1e-30
    %v3108 = vmax.f32 %v3012, 1e-30
    %v3109 = vmax.f32 %v3013, 1e-30
    %v3110 = vmax.f32 %v3014, 1e-30
    %v3111 = vmax.f32 %v3015, 1e-30
    %v3112 = vmax.f32 %v3016, 1e-30
    %v3113 = vmax.f32 %v3017, 1e-30
    %v3114 = vmax.f32 %v3018, 1e-30
    %v3115 = vmax.f32 %v3019, 1e-30
    %v3116 = vmax.f32 %v3020, 1e-30
    %v3117 = vmax.f32 %v3021, 1e-30
    %v3118 = vmax.f32 %v3022, 1e-30
    %v3119 = vlog2.pop %v3103
    %v3120 = vmul.f32 %v3119, 0.6931472
    %v3121 = vlog2.pop %v3104
    %v3122 = vmul.f32 %v3121, 0.6931472
    %v3123 = vlog2.pop %v3105
    %v3124 = vmul.f32 %v3123, 0.6931472
    %v3125 = vlog2.pop %v3106
    %v3126 = vmul.f32 %v3125, 0.6931472
    %v3127 = vlog2.pop %v3107
    %v3128 = vmul.f32 %v3127, 0.6931472
    %v3129 = vlog2.pop %v3108
    %v3130 = vmul.f32 %v3129, 0.6931472
    %v3131 = vlog2.pop %v3109
    %v3132 = vmul.f32 %v3131, 0.6931472
    %v3133 = vlog2.pop %v3110
    %v3134 = vmul.f32 %v3133, 0.6931472
    %v3135 = vlog2.pop %v3111
    %v3136 = vmul.f32 %v3135, 0.6931472
    %v3137 = vlog2.pop %v3112
    %v3138 = vmul.f32 %v3137, 0.6931472
    %v3139 = vlog2.pop %v3113
    %v3140 = vmul.f32 %v3139, 0.6931472
    %v3141 = vlog2.pop %v3114
    %v3142 = vmul.f32 %v3141, 0.6931472
    %v3143 = vlog2.pop %v3115
    %v3144 = vmul.f32 %v3143, 0.6931472
    %v3145 = vlog2.pop %v3116
    %v3146 = vmul.f32 %v3145, 0.6931472
    %v3147 = vlog2.pop %v3117
    %v3148 = vmul.f32 %v3147, 0.6931472
    %v3149 = vlog2.pop %v3118
    %v3150 = vmul.f32 %v3149, 0.6931472
    %v3151 = vmul.f32 %v3007, %v3120
    %v3152 = vmul.f32 %v3008, %v3122
    %v3153 = vmul.f32 %v3009, %v3124
    %v3154 = vmul.f32 %v3010, %v3126
    %v3155 = vmul.f32 %v3011, %v3128
    %v3156 = vmul.f32 %v3012, %v3130
    %v3157 = vmul.f32 %v3013, %v3132
    %v3158 = vmul.f32 %v3014, %v3134
    %v3159 = vmul.f32 %v3015, %v3136
    %v3160 = vmul.f32 %v3016, %v3138
    %v3161 = vmul.f32 %v3017, %v3140
    %v3162 = vmul.f32 %v3018, %v3142
    %v3163 = vmul.f32 %v3019, %v3144
    %v3164 = vmul.f32 %v3020, %v3146
    %v3165 = vmul.f32 %v3021, %v3148
    %v3166 = vmul.f32 %v3022, %v3150
    %v3167 = vadd.f32 %v2871, %v3151
    %v3168 = vadd.f32 %v2872, %v3152
    %v3169 = vadd.f32 %v2873, %v3153
    %v3170 = vadd.f32 %v2874, %v3154
    %v3171 = vadd.f32 %v2875, %v3155
    %v3172 = vadd.f32 %v2876, %v3156
    %v3173 = vadd.f32 %v2877, %v3157
    %v3174 = vadd.f32 %v2878, %v3158
    %v3175 = vadd.f32 %v2879, %v3159
    %v3176 = vadd.f32 %v2880, %v3160
    %v3177 = vadd.f32 %v2881, %v3161
    %v3178 = vadd.f32 %v2882, %v3162
    %v3179 = vadd.f32 %v2883, %v3163
    %v3180 = vadd.f32 %v2884, %v3164
    %v3181 = vadd.f32 %v2885, %v3165
    %v3182 = vadd.f32 %v2886, %v3166
    %3183 = vset.pattern.permute.xlu0 6
    %3184 = vperm.xlu0 %3183, %v563
    %v3185 = vpop.permute.xlu0 %3184
    %3187 = vset.pattern.permute.xlu0 6
    %3188 = vperm.xlu0 %3187, %v565
    %v3189 = vpop.permute.xlu0 %3188
    %3191 = vset.pattern.permute.xlu0 6
    %3192 = vperm.xlu0 %3191, %v567
    %v3193 = vpop.permute.xlu0 %3192
    %3195 = vset.pattern.permute.xlu0 6
    %3196 = vperm.xlu0 %3195, %v569
    %v3197 = vpop.permute.xlu0 %3196
    %3199 = vset.pattern.permute.xlu0 6
    %3200 = vperm.xlu0 %3199, %v571
    %v3201 = vpop.permute.xlu0 %3200
    %3203 = vset.pattern.permute.xlu0 6
    %3204 = vperm.xlu0 %3203, %v573
    %v3205 = vpop.permute.xlu0 %3204
    %3207 = vset.pattern.permute.xlu0 6
    %3208 = vperm.xlu0 %3207, %v575
    %v3209 = vpop.permute.xlu0 %3208
    %3211 = vset.pattern.permute.xlu0 6
    %3212 = vperm.xlu0 %3211, %v577
    %v3213 = vpop.permute.xlu0 %3212
    %3215 = vset.pattern.permute.xlu0 6
    %3216 = vperm.xlu0 %3215, %v579
    %v3217 = vpop.permute.xlu0 %3216
    %3219 = vset.pattern.permute.xlu0 6
    %3220 = vperm.xlu0 %3219, %v581
    %v3221 = vpop.permute.xlu0 %3220
    %3223 = vset.pattern.permute.xlu0 6
    %3224 = vperm.xlu0 %3223, %v583
    %v3225 = vpop.permute.xlu0 %3224
    %3227 = vset.pattern.permute.xlu0 6
    %3228 = vperm.xlu0 %3227, %v585
    %v3229 = vpop.permute.xlu0 %3228
    %3231 = vset.pattern.permute.xlu0 6
    %3232 = vperm.xlu0 %3231, %v587
    %v3233 = vpop.permute.xlu0 %3232
    %3235 = vset.pattern.permute.xlu0 6
    %3236 = vperm.xlu0 %3235, %v589
    %v3237 = vpop.permute.xlu0 %3236
    %3239 = vset.pattern.permute.xlu0 6
    %3240 = vperm.xlu0 %3239, %v591
    %v3241 = vpop.permute.xlu0 %3240
    %3243 = vset.pattern.permute.xlu0 6
    %3244 = vperm.xlu0 %3243, %v593
    %v3245 = vpop.permute.xlu0 %3244
    %v3247 = vlaneseq
    %v3248 = vshrl.u32 %v3247, 7
    %v3249 = vsub.s32 6, %v3248
    %v3250 = vrot.slane %v979, %v3249
    %v3251 = vadd.f32 %v3185, %v3250
    %v3252 = vadd.f32 %v3189, %v3250
    %v3253 = vadd.f32 %v3193, %v3250
    %v3254 = vadd.f32 %v3197, %v3250
    %v3255 = vadd.f32 %v3201, %v3250
    %v3256 = vadd.f32 %v3205, %v3250
    %v3257 = vadd.f32 %v3209, %v3250
    %v3258 = vadd.f32 %v3213, %v3250
    %v3259 = vadd.f32 %v3217, %v3250
    %v3260 = vadd.f32 %v3221, %v3250
    %v3261 = vadd.f32 %v3225, %v3250
    %v3262 = vadd.f32 %v3229, %v3250
    %v3263 = vadd.f32 %v3233, %v3250
    %v3264 = vadd.f32 %v3237, %v3250
    %v3265 = vadd.f32 %v3241, %v3250
    %v3266 = vadd.f32 %v3245, %v3250
    %v3267 = vmul.f32 %v3251, 0.5
    %v3268 = vmul.f32 %v3252, 0.5
    %v3269 = vmul.f32 %v3253, 0.5
    %v3270 = vmul.f32 %v3254, 0.5
    %v3271 = vmul.f32 %v3255, 0.5
    %v3272 = vmul.f32 %v3256, 0.5
    %v3273 = vmul.f32 %v3257, 0.5
    %v3274 = vmul.f32 %v3258, 0.5
    %v3275 = vmul.f32 %v3259, 0.5
    %v3276 = vmul.f32 %v3260, 0.5
    %v3277 = vmul.f32 %v3261, 0.5
    %v3278 = vmul.f32 %v3262, 0.5
    %v3279 = vmul.f32 %v3263, 0.5
    %v3280 = vmul.f32 %v3264, 0.5
    %v3281 = vmul.f32 %v3265, 0.5
    %v3282 = vmul.f32 %v3266, 0.5
    %v3283 = vlaneseq
    %v3284 = vshrl.u32 %v3283, 7
    %v3285 = vsub.s32 6, %v3284
    %v3286 = vrot.slane %v1063, %v3285
    %v3287 = vadd.f32 %v3185, %v3286
    %v3288 = vadd.f32 %v3189, %v3286
    %v3289 = vadd.f32 %v3193, %v3286
    %v3290 = vadd.f32 %v3197, %v3286
    %v3291 = vadd.f32 %v3201, %v3286
    %v3292 = vadd.f32 %v3205, %v3286
    %v3293 = vadd.f32 %v3209, %v3286
    %v3294 = vadd.f32 %v3213, %v3286
    %v3295 = vadd.f32 %v3217, %v3286
    %v3296 = vadd.f32 %v3221, %v3286
    %v3297 = vadd.f32 %v3225, %v3286
    %v3298 = vadd.f32 %v3229, %v3286
    %v3299 = vadd.f32 %v3233, %v3286
    %v3300 = vadd.f32 %v3237, %v3286
    %v3301 = vadd.f32 %v3241, %v3286
    %v3302 = vadd.f32 %v3245, %v3286
    %v3303 = vmul.f32 %v3287, 0.5
    %v3304 = vmul.f32 %v3288, 0.5
    %v3305 = vmul.f32 %v3289, 0.5
    %v3306 = vmul.f32 %v3290, 0.5
    %v3307 = vmul.f32 %v3291, 0.5
    %v3308 = vmul.f32 %v3292, 0.5
    %v3309 = vmul.f32 %v3293, 0.5
    %v3310 = vmul.f32 %v3294, 0.5
    %v3311 = vmul.f32 %v3295, 0.5
    %v3312 = vmul.f32 %v3296, 0.5
    %v3313 = vmul.f32 %v3297, 0.5
    %v3314 = vmul.f32 %v3298, 0.5
    %v3315 = vmul.f32 %v3299, 0.5
    %v3316 = vmul.f32 %v3300, 0.5
    %v3317 = vmul.f32 %v3301, 0.5
    %v3318 = vmul.f32 %v3302, 0.5
    %v3319 = vmax.f32 %v3267, 1e-30
    %v3320 = vmax.f32 %v3268, 1e-30
    %v3321 = vmax.f32 %v3269, 1e-30
    %v3322 = vmax.f32 %v3270, 1e-30
    %v3323 = vmax.f32 %v3271, 1e-30
    %v3324 = vmax.f32 %v3272, 1e-30
    %v3325 = vmax.f32 %v3273, 1e-30
    %v3326 = vmax.f32 %v3274, 1e-30
    %v3327 = vmax.f32 %v3275, 1e-30
    %v3328 = vmax.f32 %v3276, 1e-30
    %v3329 = vmax.f32 %v3277, 1e-30
    %v3330 = vmax.f32 %v3278, 1e-30
    %v3331 = vmax.f32 %v3279, 1e-30
    %v3332 = vmax.f32 %v3280, 1e-30
    %v3333 = vmax.f32 %v3281, 1e-30
    %v3334 = vmax.f32 %v3282, 1e-30
    %v3335 = vlog2.pop %v3319
    %v3336 = vmul.f32 %v3335, 0.6931472
    %v3337 = vlog2.pop %v3320
    %v3338 = vmul.f32 %v3337, 0.6931472
    %v3339 = vlog2.pop %v3321
    %v3340 = vmul.f32 %v3339, 0.6931472
    %v3341 = vlog2.pop %v3322
    %v3342 = vmul.f32 %v3341, 0.6931472
    %v3343 = vlog2.pop %v3323
    %v3344 = vmul.f32 %v3343, 0.6931472
    %v3345 = vlog2.pop %v3324
    %v3346 = vmul.f32 %v3345, 0.6931472
    %v3347 = vlog2.pop %v3325
    %v3348 = vmul.f32 %v3347, 0.6931472
    %v3349 = vlog2.pop %v3326
    %v3350 = vmul.f32 %v3349, 0.6931472
    %v3351 = vlog2.pop %v3327
    %v3352 = vmul.f32 %v3351, 0.6931472
    %v3353 = vlog2.pop %v3328
    %v3354 = vmul.f32 %v3353, 0.6931472
    %v3355 = vlog2.pop %v3329
    %v3356 = vmul.f32 %v3355, 0.6931472
    %v3357 = vlog2.pop %v3330
    %v3358 = vmul.f32 %v3357, 0.6931472
    %v3359 = vlog2.pop %v3331
    %v3360 = vmul.f32 %v3359, 0.6931472
    %v3361 = vlog2.pop %v3332
    %v3362 = vmul.f32 %v3361, 0.6931472
    %v3363 = vlog2.pop %v3333
    %v3364 = vmul.f32 %v3363, 0.6931472
    %v3365 = vlog2.pop %v3334
    %v3366 = vmul.f32 %v3365, 0.6931472
    %v3367 = vmul.f32 %v3267, %v3336
    %v3368 = vmul.f32 %v3268, %v3338
    %v3369 = vmul.f32 %v3269, %v3340
    %v3370 = vmul.f32 %v3270, %v3342
    %v3371 = vmul.f32 %v3271, %v3344
    %v3372 = vmul.f32 %v3272, %v3346
    %v3373 = vmul.f32 %v3273, %v3348
    %v3374 = vmul.f32 %v3274, %v3350
    %v3375 = vmul.f32 %v3275, %v3352
    %v3376 = vmul.f32 %v3276, %v3354
    %v3377 = vmul.f32 %v3277, %v3356
    %v3378 = vmul.f32 %v3278, %v3358
    %v3379 = vmul.f32 %v3279, %v3360
    %v3380 = vmul.f32 %v3280, %v3362
    %v3381 = vmul.f32 %v3281, %v3364
    %v3382 = vmul.f32 %v3282, %v3366
    %v3383 = vadd.f32 %v3087, %v3367
    %v3384 = vadd.f32 %v3088, %v3368
    %v3385 = vadd.f32 %v3089, %v3369
    %v3386 = vadd.f32 %v3090, %v3370
    %v3387 = vadd.f32 %v3091, %v3371
    %v3388 = vadd.f32 %v3092, %v3372
    %v3389 = vadd.f32 %v3093, %v3373
    %v3390 = vadd.f32 %v3094, %v3374
    %v3391 = vadd.f32 %v3095, %v3375
    %v3392 = vadd.f32 %v3096, %v3376
    %v3393 = vadd.f32 %v3097, %v3377
    %v3394 = vadd.f32 %v3098, %v3378
    %v3395 = vadd.f32 %v3099, %v3379
    %v3396 = vadd.f32 %v3100, %v3380
    %v3397 = vadd.f32 %v3101, %v3381
    %v3398 = vadd.f32 %v3102, %v3382
    %v3399 = vmax.f32 %v3303, 1e-30
    %v3400 = vmax.f32 %v3304, 1e-30
    %v3401 = vmax.f32 %v3305, 1e-30
    %v3402 = vmax.f32 %v3306, 1e-30
    %v3403 = vmax.f32 %v3307, 1e-30
    %v3404 = vmax.f32 %v3308, 1e-30
    %v3405 = vmax.f32 %v3309, 1e-30
    %v3406 = vmax.f32 %v3310, 1e-30
    %v3407 = vmax.f32 %v3311, 1e-30
    %v3408 = vmax.f32 %v3312, 1e-30
    %v3409 = vmax.f32 %v3313, 1e-30
    %v3410 = vmax.f32 %v3314, 1e-30
    %v3411 = vmax.f32 %v3315, 1e-30
    %v3412 = vmax.f32 %v3316, 1e-30
    %v3413 = vmax.f32 %v3317, 1e-30
    %v3414 = vmax.f32 %v3318, 1e-30
    %v3415 = vlog2.pop %v3399
    %v3416 = vmul.f32 %v3415, 0.6931472
    %v3417 = vlog2.pop %v3400
    %v3418 = vmul.f32 %v3417, 0.6931472
    %v3419 = vlog2.pop %v3401
    %v3420 = vmul.f32 %v3419, 0.6931472
    %v3421 = vlog2.pop %v3402
    %v3422 = vmul.f32 %v3421, 0.6931472
    %v3423 = vlog2.pop %v3403
    %v3424 = vmul.f32 %v3423, 0.6931472
    %v3425 = vlog2.pop %v3404
    %v3426 = vmul.f32 %v3425, 0.6931472
    %v3427 = vlog2.pop %v3405
    %v3428 = vmul.f32 %v3427, 0.6931472
    %v3429 = vlog2.pop %v3406
    %v3430 = vmul.f32 %v3429, 0.6931472
    %v3431 = vlog2.pop %v3407
    %v3432 = vmul.f32 %v3431, 0.6931472
    %v3433 = vlog2.pop %v3408
    %v3434 = vmul.f32 %v3433, 0.6931472
    %v3435 = vlog2.pop %v3409
    %v3436 = vmul.f32 %v3435, 0.6931472
    %v3437 = vlog2.pop %v3410
    %v3438 = vmul.f32 %v3437, 0.6931472
    %v3439 = vlog2.pop %v3411
    %v3440 = vmul.f32 %v3439, 0.6931472
    %v3441 = vlog2.pop %v3412
    %v3442 = vmul.f32 %v3441, 0.6931472
    %v3443 = vlog2.pop %v3413
    %v3444 = vmul.f32 %v3443, 0.6931472
    %v3445 = vlog2.pop %v3414
    %v3446 = vmul.f32 %v3445, 0.6931472
    %v3447 = vmul.f32 %v3303, %v3416
    %v3448 = vmul.f32 %v3304, %v3418
    %v3449 = vmul.f32 %v3305, %v3420
    %v3450 = vmul.f32 %v3306, %v3422
    %v3451 = vmul.f32 %v3307, %v3424
    %v3452 = vmul.f32 %v3308, %v3426
    %v3453 = vmul.f32 %v3309, %v3428
    %v3454 = vmul.f32 %v3310, %v3430
    %v3455 = vmul.f32 %v3311, %v3432
    %v3456 = vmul.f32 %v3312, %v3434
    %v3457 = vmul.f32 %v3313, %v3436
    %v3458 = vmul.f32 %v3314, %v3438
    %v3459 = vmul.f32 %v3315, %v3440
    %v3460 = vmul.f32 %v3316, %v3442
    %v3461 = vmul.f32 %v3317, %v3444
    %v3462 = vmul.f32 %v3318, %v3446
    %v3463 = vadd.f32 %v3167, %v3447
    %v3464 = vadd.f32 %v3168, %v3448
    %v3465 = vadd.f32 %v3169, %v3449
    %v3466 = vadd.f32 %v3170, %v3450
    %v3467 = vadd.f32 %v3171, %v3451
    %v3468 = vadd.f32 %v3172, %v3452
    %v3469 = vadd.f32 %v3173, %v3453
    %v3470 = vadd.f32 %v3174, %v3454
    %v3471 = vadd.f32 %v3175, %v3455
    %v3472 = vadd.f32 %v3176, %v3456
    %v3473 = vadd.f32 %v3177, %v3457
    %v3474 = vadd.f32 %v3178, %v3458
    %v3475 = vadd.f32 %v3179, %v3459
    %v3476 = vadd.f32 %v3180, %v3460
    %v3477 = vadd.f32 %v3181, %v3461
    %v3478 = vadd.f32 %v3182, %v3462
    %3479 = vset.pattern.permute.xlu0 7
    %3480 = vperm.xlu0 %3479, %v563
    %v3481 = vpop.permute.xlu0 %3480
    %3483 = vset.pattern.permute.xlu0 7
    %3484 = vperm.xlu0 %3483, %v565
    %v3485 = vpop.permute.xlu0 %3484
    %3487 = vset.pattern.permute.xlu0 7
    %3488 = vperm.xlu0 %3487, %v567
    %v3489 = vpop.permute.xlu0 %3488
    %3491 = vset.pattern.permute.xlu0 7
    %3492 = vperm.xlu0 %3491, %v569
    %v3493 = vpop.permute.xlu0 %3492
    %3495 = vset.pattern.permute.xlu0 7
    %3496 = vperm.xlu0 %3495, %v571
    %v3497 = vpop.permute.xlu0 %3496
    %3499 = vset.pattern.permute.xlu0 7
    %3500 = vperm.xlu0 %3499, %v573
    %v3501 = vpop.permute.xlu0 %3500
    %3503 = vset.pattern.permute.xlu0 7
    %3504 = vperm.xlu0 %3503, %v575
    %v3505 = vpop.permute.xlu0 %3504
    %3507 = vset.pattern.permute.xlu0 7
    %3508 = vperm.xlu0 %3507, %v577
    %v3509 = vpop.permute.xlu0 %3508
    %3511 = vset.pattern.permute.xlu0 7
    %3512 = vperm.xlu0 %3511, %v579
    %v3513 = vpop.permute.xlu0 %3512
    %3515 = vset.pattern.permute.xlu0 7
    %3516 = vperm.xlu0 %3515, %v581
    %v3517 = vpop.permute.xlu0 %3516
    %3519 = vset.pattern.permute.xlu0 7
    %3520 = vperm.xlu0 %3519, %v583
    %v3521 = vpop.permute.xlu0 %3520
    %3523 = vset.pattern.permute.xlu0 7
    %3524 = vperm.xlu0 %3523, %v585
    %v3525 = vpop.permute.xlu0 %3524
    %3527 = vset.pattern.permute.xlu0 7
    %3528 = vperm.xlu0 %3527, %v587
    %v3529 = vpop.permute.xlu0 %3528
    %3531 = vset.pattern.permute.xlu0 7
    %3532 = vperm.xlu0 %3531, %v589
    %v3533 = vpop.permute.xlu0 %3532
    %3535 = vset.pattern.permute.xlu0 7
    %3536 = vperm.xlu0 %3535, %v591
    %v3537 = vpop.permute.xlu0 %3536
    %3539 = vset.pattern.permute.xlu0 7
    %3540 = vperm.xlu0 %3539, %v593
    %v3541 = vpop.permute.xlu0 %3540
    %v3543 = vlaneseq
    %v3544 = vshrl.u32 %v3543, 7
    %v3545 = vsub.s32 7, %v3544
    %v3546 = vrot.slane %v979, %v3545
    %v3547 = vadd.f32 %v3481, %v3546
    %v3548 = vadd.f32 %v3485, %v3546
    %v3549 = vadd.f32 %v3489, %v3546
    %v3550 = vadd.f32 %v3493, %v3546
    %v3551 = vadd.f32 %v3497, %v3546
    %v3552 = vadd.f32 %v3501, %v3546
    %v3553 = vadd.f32 %v3505, %v3546
    %v3554 = vadd.f32 %v3509, %v3546
    %v3555 = vadd.f32 %v3513, %v3546
    %v3556 = vadd.f32 %v3517, %v3546
    %v3557 = vadd.f32 %v3521, %v3546
    %v3558 = vadd.f32 %v3525, %v3546
    %v3559 = vadd.f32 %v3529, %v3546
    %v3560 = vadd.f32 %v3533, %v3546
    %v3561 = vadd.f32 %v3537, %v3546
    %v3562 = vadd.f32 %v3541, %v3546
    %v3563 = vmul.f32 %v3547, 0.5
    %v3564 = vmul.f32 %v3548, 0.5
    %v3565 = vmul.f32 %v3549, 0.5
    %v3566 = vmul.f32 %v3550, 0.5
    %v3567 = vmul.f32 %v3551, 0.5
    %v3568 = vmul.f32 %v3552, 0.5
    %v3569 = vmul.f32 %v3553, 0.5
    %v3570 = vmul.f32 %v3554, 0.5
    %v3571 = vmul.f32 %v3555, 0.5
    %v3572 = vmul.f32 %v3556, 0.5
    %v3573 = vmul.f32 %v3557, 0.5
    %v3574 = vmul.f32 %v3558, 0.5
    %v3575 = vmul.f32 %v3559, 0.5
    %v3576 = vmul.f32 %v3560, 0.5
    %v3577 = vmul.f32 %v3561, 0.5
    %v3578 = vmul.f32 %v3562, 0.5
    %v3579 = vlaneseq
    %v3580 = vshrl.u32 %v3579, 7
    %v3581 = vsub.s32 7, %v3580
    %v3582 = vrot.slane %v1063, %v3581
    %v3583 = vadd.f32 %v3481, %v3582
    %v3584 = vadd.f32 %v3485, %v3582
    %v3585 = vadd.f32 %v3489, %v3582
    %v3586 = vadd.f32 %v3493, %v3582
    %v3587 = vadd.f32 %v3497, %v3582
    %v3588 = vadd.f32 %v3501, %v3582
    %v3589 = vadd.f32 %v3505, %v3582
    %v3590 = vadd.f32 %v3509, %v3582
    %v3591 = vadd.f32 %v3513, %v3582
    %v3592 = vadd.f32 %v3517, %v3582
    %v3593 = vadd.f32 %v3521, %v3582
    %v3594 = vadd.f32 %v3525, %v3582
    %v3595 = vadd.f32 %v3529, %v3582
    %v3596 = vadd.f32 %v3533, %v3582
    %v3597 = vadd.f32 %v3537, %v3582
    %v3598 = vadd.f32 %v3541, %v3582
    %v3599 = vmul.f32 %v3583, 0.5
    %v3600 = vmul.f32 %v3584, 0.5
    %v3601 = vmul.f32 %v3585, 0.5
    %v3602 = vmul.f32 %v3586, 0.5
    %v3603 = vmul.f32 %v3587, 0.5
    %v3604 = vmul.f32 %v3588, 0.5
    %v3605 = vmul.f32 %v3589, 0.5
    %v3606 = vmul.f32 %v3590, 0.5
    %v3607 = vmul.f32 %v3591, 0.5
    %v3608 = vmul.f32 %v3592, 0.5
    %v3609 = vmul.f32 %v3593, 0.5
    %v3610 = vmul.f32 %v3594, 0.5
    %v3611 = vmul.f32 %v3595, 0.5
    %v3612 = vmul.f32 %v3596, 0.5
    %v3613 = vmul.f32 %v3597, 0.5
    %v3614 = vmul.f32 %v3598, 0.5
    %v3615 = vmax.f32 %v3563, 1e-30
    %v3616 = vmax.f32 %v3564, 1e-30
    %v3617 = vmax.f32 %v3565, 1e-30
    %v3618 = vmax.f32 %v3566, 1e-30
    %v3619 = vmax.f32 %v3567, 1e-30
    %v3620 = vmax.f32 %v3568, 1e-30
    %v3621 = vmax.f32 %v3569, 1e-30
    %v3622 = vmax.f32 %v3570, 1e-30
    %v3623 = vmax.f32 %v3571, 1e-30
    %v3624 = vmax.f32 %v3572, 1e-30
    %v3625 = vmax.f32 %v3573, 1e-30
    %v3626 = vmax.f32 %v3574, 1e-30
    %v3627 = vmax.f32 %v3575, 1e-30
    %v3628 = vmax.f32 %v3576, 1e-30
    %v3629 = vmax.f32 %v3577, 1e-30
    %v3630 = vmax.f32 %v3578, 1e-30
    %v3631 = vlog2.pop %v3615
    %v3632 = vmul.f32 %v3631, 0.6931472
    %v3633 = vlog2.pop %v3616
    %v3634 = vmul.f32 %v3633, 0.6931472
    %v3635 = vlog2.pop %v3617
    %v3636 = vmul.f32 %v3635, 0.6931472
    %v3637 = vlog2.pop %v3618
    %v3638 = vmul.f32 %v3637, 0.6931472
    %v3639 = vlog2.pop %v3619
    %v3640 = vmul.f32 %v3639, 0.6931472
    %v3641 = vlog2.pop %v3620
    %v3642 = vmul.f32 %v3641, 0.6931472
    %v3643 = vlog2.pop %v3621
    %v3644 = vmul.f32 %v3643, 0.6931472
    %v3645 = vlog2.pop %v3622
    %v3646 = vmul.f32 %v3645, 0.6931472
    %v3647 = vlog2.pop %v3623
    %v3648 = vmul.f32 %v3647, 0.6931472
    %v3649 = vlog2.pop %v3624
    %v3650 = vmul.f32 %v3649, 0.6931472
    %v3651 = vlog2.pop %v3625
    %v3652 = vmul.f32 %v3651, 0.6931472
    %v3653 = vlog2.pop %v3626
    %v3654 = vmul.f32 %v3653, 0.6931472
    %v3655 = vlog2.pop %v3627
    %v3656 = vmul.f32 %v3655, 0.6931472
    %v3657 = vlog2.pop %v3628
    %v3658 = vmul.f32 %v3657, 0.6931472
    %v3659 = vlog2.pop %v3629
    %v3660 = vmul.f32 %v3659, 0.6931472
    %v3661 = vlog2.pop %v3630
    %v3662 = vmul.f32 %v3661, 0.6931472
    %v3663 = vmul.f32 %v3563, %v3632
    %v3664 = vmul.f32 %v3564, %v3634
    %v3665 = vmul.f32 %v3565, %v3636
    %v3666 = vmul.f32 %v3566, %v3638
    %v3667 = vmul.f32 %v3567, %v3640
    %v3668 = vmul.f32 %v3568, %v3642
    %v3669 = vmul.f32 %v3569, %v3644
    %v3670 = vmul.f32 %v3570, %v3646
    %v3671 = vmul.f32 %v3571, %v3648
    %v3672 = vmul.f32 %v3572, %v3650
    %v3673 = vmul.f32 %v3573, %v3652
    %v3674 = vmul.f32 %v3574, %v3654
    %v3675 = vmul.f32 %v3575, %v3656
    %v3676 = vmul.f32 %v3576, %v3658
    %v3677 = vmul.f32 %v3577, %v3660
    %v3678 = vmul.f32 %v3578, %v3662
    %v3679 = vadd.f32 %v3383, %v3663
    %v3680 = vadd.f32 %v3384, %v3664
    %v3681 = vadd.f32 %v3385, %v3665
    %v3682 = vadd.f32 %v3386, %v3666
    %v3683 = vadd.f32 %v3387, %v3667
    %v3684 = vadd.f32 %v3388, %v3668
    %v3685 = vadd.f32 %v3389, %v3669
    %v3686 = vadd.f32 %v3390, %v3670
    %v3687 = vadd.f32 %v3391, %v3671
    %v3688 = vadd.f32 %v3392, %v3672
    %v3689 = vadd.f32 %v3393, %v3673
    %v3690 = vadd.f32 %v3394, %v3674
    %v3691 = vadd.f32 %v3395, %v3675
    %v3692 = vadd.f32 %v3396, %v3676
    %v3693 = vadd.f32 %v3397, %v3677
    %v3694 = vadd.f32 %v3398, %v3678
    %v3695 = vmax.f32 %v3599, 1e-30
    %v3696 = vmax.f32 %v3600, 1e-30
    %v3697 = vmax.f32 %v3601, 1e-30
    %v3698 = vmax.f32 %v3602, 1e-30
    %v3699 = vmax.f32 %v3603, 1e-30
    %v3700 = vmax.f32 %v3604, 1e-30
    %v3701 = vmax.f32 %v3605, 1e-30
    %v3702 = vmax.f32 %v3606, 1e-30
    %v3703 = vmax.f32 %v3607, 1e-30
    %v3704 = vmax.f32 %v3608, 1e-30
    %v3705 = vmax.f32 %v3609, 1e-30
    %v3706 = vmax.f32 %v3610, 1e-30
    %v3707 = vmax.f32 %v3611, 1e-30
    %v3708 = vmax.f32 %v3612, 1e-30
    %v3709 = vmax.f32 %v3613, 1e-30
    %v3710 = vmax.f32 %v3614, 1e-30
    %v3711 = vlog2.pop %v3695
    %v3712 = vmul.f32 %v3711, 0.6931472
    %v3713 = vlog2.pop %v3696
    %v3714 = vmul.f32 %v3713, 0.6931472
    %v3715 = vlog2.pop %v3697
    %v3716 = vmul.f32 %v3715, 0.6931472
    %v3717 = vlog2.pop %v3698
    %v3718 = vmul.f32 %v3717, 0.6931472
    %v3719 = vlog2.pop %v3699
    %v3720 = vmul.f32 %v3719, 0.6931472
    %v3721 = vlog2.pop %v3700
    %v3722 = vmul.f32 %v3721, 0.6931472
    %v3723 = vlog2.pop %v3701
    %v3724 = vmul.f32 %v3723, 0.6931472
    %v3725 = vlog2.pop %v3702
    %v3726 = vmul.f32 %v3725, 0.6931472
    %v3727 = vlog2.pop %v3703
    %v3728 = vmul.f32 %v3727, 0.6931472
    %v3729 = vlog2.pop %v3704
    %v3730 = vmul.f32 %v3729, 0.6931472
    %v3731 = vlog2.pop %v3705
    %v3732 = vmul.f32 %v3731, 0.6931472
    %v3733 = vlog2.pop %v3706
    %v3734 = vmul.f32 %v3733, 0.6931472
    %v3735 = vlog2.pop %v3707
    %v3736 = vmul.f32 %v3735, 0.6931472
    %v3737 = vlog2.pop %v3708
    %v3738 = vmul.f32 %v3737, 0.6931472
    %v3739 = vlog2.pop %v3709
    %v3740 = vmul.f32 %v3739, 0.6931472
    %v3741 = vlog2.pop %v3710
    %v3742 = vmul.f32 %v3741, 0.6931472
    %v3743 = vmul.f32 %v3599, %v3712
    %v3744 = vmul.f32 %v3600, %v3714
    %v3745 = vmul.f32 %v3601, %v3716
    %v3746 = vmul.f32 %v3602, %v3718
    %v3747 = vmul.f32 %v3603, %v3720
    %v3748 = vmul.f32 %v3604, %v3722
    %v3749 = vmul.f32 %v3605, %v3724
    %v3750 = vmul.f32 %v3606, %v3726
    %v3751 = vmul.f32 %v3607, %v3728
    %v3752 = vmul.f32 %v3608, %v3730
    %v3753 = vmul.f32 %v3609, %v3732
    %v3754 = vmul.f32 %v3610, %v3734
    %v3755 = vmul.f32 %v3611, %v3736
    %v3756 = vmul.f32 %v3612, %v3738
    %v3757 = vmul.f32 %v3613, %v3740
    %v3758 = vmul.f32 %v3614, %v3742
    %v3759 = vadd.f32 %v3463, %v3743
    %v3760 = vadd.f32 %v3464, %v3744
    %v3761 = vadd.f32 %v3465, %v3745
    %v3762 = vadd.f32 %v3466, %v3746
    %v3763 = vadd.f32 %v3467, %v3747
    %v3764 = vadd.f32 %v3468, %v3748
    %v3765 = vadd.f32 %v3469, %v3749
    %v3766 = vadd.f32 %v3470, %v3750
    %v3767 = vadd.f32 %v3471, %v3751
    %v3768 = vadd.f32 %v3472, %v3752
    %v3769 = vadd.f32 %v3473, %v3753
    %v3770 = vadd.f32 %v3474, %v3754
    %v3771 = vadd.f32 %v3475, %v3755
    %v3772 = vadd.f32 %v3476, %v3756
    %v3773 = vadd.f32 %v3477, %v3757
    %v3774 = vadd.f32 %v3478, %v3758
    %v3775 = vadd.f32 %v1243, %v1244
    %v3776 = vadd.f32 %v3775, %v1245
    %v3777 = vadd.f32 %v3776, %v1246
    %v3778 = vadd.f32 %v3777, %v1247
    %v3779 = vadd.f32 %v3778, %v1248
    %v3780 = vadd.f32 %v3779, %v1249
    %v3781 = vadd.f32 %v3780, %v1250
    %v3782 = vadd.f32 %v3781, %v1251
    %v3783 = vadd.f32 %v3782, %v1252
    %v3784 = vadd.f32 %v3783, %v1253
    %v3785 = vadd.f32 %v3784, %v1254
    %v3786 = vadd.f32 %v3785, %v1255
    %v3787 = vadd.f32 %v3786, %v1256
    %v3788 = vadd.f32 %v3787, %v1257
    %v3789 = vadd.f32 %v3788, %v1258
    %3790 = vadd.xlane.f32.xlu0 %v3789
    %v3791 = vpop.xlane.xlu0 %3790
    %v3792 = vrot.slane %v3791, 4
    %v3793 = vadd.f32 %v3791, %v3792
    %v3794 = vrot.slane %v3793, 2
    %v3795 = vadd.f32 %v3793, %v3794
    %v3796 = vrot.slane %v3795, 1
    %v3797 = vadd.f32 %v3795, %v3796
    %s3798 = vtos %v3797
    %v3799 = vadd.f32 %v1375, %v1376
    %v3800 = vadd.f32 %v3799, %v1377
    %v3801 = vadd.f32 %v3800, %v1378
    %v3802 = vadd.f32 %v3801, %v1379
    %v3803 = vadd.f32 %v3802, %v1380
    %v3804 = vadd.f32 %v3803, %v1381
    %v3805 = vadd.f32 %v3804, %v1382
    %v3806 = vadd.f32 %v3805, %v1383
    %v3807 = vadd.f32 %v3806, %v1384
    %v3808 = vadd.f32 %v3807, %v1385
    %v3809 = vadd.f32 %v3808, %v1386
    %v3810 = vadd.f32 %v3809, %v1387
    %v3811 = vadd.f32 %v3810, %v1388
    %v3812 = vadd.f32 %v3811, %v1389
    %v3813 = vadd.f32 %v3812, %v1390
    %3814 = vadd.xlane.f32.xlu0 %v3813
    %v3815 = vpop.xlane.xlu0 %3814
    %v3816 = vrot.slane %v3815, 4
    %v3817 = vadd.f32 %v3815, %v3816
    %v3818 = vrot.slane %v3817, 2
    %v3819 = vadd.f32 %v3817, %v3818
    %v3820 = vrot.slane %v3819, 1
    %v3821 = vadd.f32 %v3819, %v3820
    %s3822 = vtos %v3821
    %3823 = vadd.xlane.f32.xlu0 %v1243
    %v3824 = vpop.xlane.xlu0 %3823
    %3825 = vadd.xlane.f32.xlu0 %v1244
    %v3826 = vpop.xlane.xlu0 %3825
    %3827 = vadd.xlane.f32.xlu0 %v1245
    %v3828 = vpop.xlane.xlu0 %3827
    %3829 = vadd.xlane.f32.xlu0 %v1246
    %v3830 = vpop.xlane.xlu0 %3829
    %3831 = vadd.xlane.f32.xlu0 %v1247
    %v3832 = vpop.xlane.xlu0 %3831
    %3833 = vadd.xlane.f32.xlu0 %v1248
    %v3834 = vpop.xlane.xlu0 %3833
    %3835 = vadd.xlane.f32.xlu0 %v1249
    %v3836 = vpop.xlane.xlu0 %3835
    %3837 = vadd.xlane.f32.xlu0 %v1250
    %v3838 = vpop.xlane.xlu0 %3837
    %3839 = vadd.xlane.f32.xlu0 %v1251
    %v3840 = vpop.xlane.xlu0 %3839
    %3841 = vadd.xlane.f32.xlu0 %v1252
    %v3842 = vpop.xlane.xlu0 %3841
    %3843 = vadd.xlane.f32.xlu0 %v1253
    %v3844 = vpop.xlane.xlu0 %3843
    %3845 = vadd.xlane.f32.xlu0 %v1254
    %v3846 = vpop.xlane.xlu0 %3845
    %3847 = vadd.xlane.f32.xlu0 %v1255
    %v3848 = vpop.xlane.xlu0 %3847
    %3849 = vadd.xlane.f32.xlu0 %v1256
    %v3850 = vpop.xlane.xlu0 %3849
    %3851 = vadd.xlane.f32.xlu0 %v1257
    %v3852 = vpop.xlane.xlu0 %3851
    %3853 = vadd.xlane.f32.xlu0 %v1258
    %v3854 = vpop.xlane.xlu0 %3853
    %v3855 = vrot.slane %v3789, 4
    %v3856 = vadd.f32 %v3789, %v3855
    %v3857 = vrot.slane %v3856, 2
    %v3858 = vadd.f32 %v3856, %v3857
    %v3859 = vrot.slane %v3858, 1
    %v3860 = vadd.f32 %v3858, %v3859
    %v3861 = vmul.f32 %v611, %v3824
    %v3862 = vmul.f32 %v613, %v3826
    %v3863 = vmul.f32 %v615, %v3828
    %v3864 = vmul.f32 %v617, %v3830
    %v3865 = vmul.f32 %v619, %v3832
    %v3866 = vmul.f32 %v621, %v3834
    %v3867 = vmul.f32 %v623, %v3836
    %v3868 = vmul.f32 %v625, %v3838
    %v3869 = vmul.f32 %v627, %v3840
    %v3870 = vmul.f32 %v629, %v3842
    %v3871 = vmul.f32 %v631, %v3844
    %v3872 = vmul.f32 %v633, %v3846
    %v3873 = vmul.f32 %v635, %v3848
    %v3874 = vmul.f32 %v637, %v3850
    %v3875 = vmul.f32 %v639, %v3852
    %v3876 = vmul.f32 %v641, %v3854
    %vm3877 = vcmask 7168
    %v3878 = vsel %vm3877, %v3861, 0.0
    %v3879 = vsel %vm3877, %v3862, 0.0
    %v3880 = vadd.f32 %v3878, %v3879
    %v3881 = vsel %vm3877, %v3863, 0.0
    %v3882 = vadd.f32 %v3880, %v3881
    %v3883 = vsel %vm3877, %v3864, 0.0
    %v3884 = vadd.f32 %v3882, %v3883
    %v3885 = vsel %vm3877, %v3865, 0.0
    %v3886 = vadd.f32 %v3884, %v3885
    %v3887 = vsel %vm3877, %v3866, 0.0
    %v3888 = vadd.f32 %v3886, %v3887
    %v3889 = vsel %vm3877, %v3867, 0.0
    %v3890 = vadd.f32 %v3888, %v3889
    %v3891 = vsel %vm3877, %v3868, 0.0
    %v3892 = vadd.f32 %v3890, %v3891
    %v3893 = vsel %vm3877, %v3869, 0.0
    %v3894 = vadd.f32 %v3892, %v3893
    %v3895 = vsel %vm3877, %v3870, 0.0
    %v3896 = vadd.f32 %v3894, %v3895
    %v3897 = vsel %vm3877, %v3871, 0.0
    %v3898 = vadd.f32 %v3896, %v3897
    %v3899 = vsel %vm3877, %v3872, 0.0
    %v3900 = vadd.f32 %v3898, %v3899
    %v3901 = vsel %vm3877, %v3873, 0.0
    %v3902 = vadd.f32 %v3900, %v3901
    %v3903 = vsel %vm3877, %v3874, 0.0
    %v3904 = vadd.f32 %v3902, %v3903
    %v3905 = vsel %vm3877, %v3875, 0.0
    %v3906 = vadd.f32 %v3904, %v3905
    %v3907 = vsel %vm3877, %v3876, 0.0
    %v3908 = vadd.f32 %v3906, %v3907
    %3909 = vadd.xlane.f32.xlu0 %v3908
    %v3910 = vpop.xlane.xlu0 %3909
    %v3911 = vrot.slane %v3910, 4
    %v3912 = vadd.f32 %v3910, %v3911
    %v3913 = vrot.slane %v3912, 2
    %v3914 = vadd.f32 %v3912, %v3913
    %v3915 = vrot.slane %v3914, 1
    %v3916 = vadd.f32 %v3914, %v3915
    %s3917 = vtos %v3916
    %v3918 = vmul.f32 %v1046, %v3860
    %vm3919 = vcmask 1040384
    %v3920 = vsel %vm3919, %v3918, 0.0
    %3921 = vadd.xlane.f32.xlu0 %v3920
    %v3922 = vpop.xlane.xlu0 %3921
    %v3923 = vrot.slane %v3922, 4
    %v3924 = vadd.f32 %v3922, %v3923
    %v3925 = vrot.slane %v3924, 2
    %v3926 = vadd.f32 %v3924, %v3925
    %v3927 = vrot.slane %v3926, 1
    %v3928 = vadd.f32 %v3926, %v3927
    %s3929 = vtos %v3928
    %s3930 = sadd.f32 %s3917, %s3929
    %s3931 = smul.f32 %s3930, 0.5
    %v3932 = vmul.f32 %v1243, %v3679
    %v3933 = vmul.f32 %v1244, %v3680
    %v3934 = vmul.f32 %v1245, %v3681
    %v3935 = vmul.f32 %v1246, %v3682
    %v3936 = vmul.f32 %v1247, %v3683
    %v3937 = vmul.f32 %v1248, %v3684
    %v3938 = vmul.f32 %v1249, %v3685
    %v3939 = vmul.f32 %v1250, %v3686
    %v3940 = vmul.f32 %v1251, %v3687
    %v3941 = vmul.f32 %v1252, %v3688
    %v3942 = vmul.f32 %v1253, %v3689
    %v3943 = vmul.f32 %v1254, %v3690
    %v3944 = vmul.f32 %v1255, %v3691
    %v3945 = vmul.f32 %v1256, %v3692
    %v3946 = vmul.f32 %v1257, %v3693
    %v3947 = vmul.f32 %v1258, %v3694
    %v3948 = vadd.f32 %v3932, %v3933
    %v3949 = vadd.f32 %v3948, %v3934
    %v3950 = vadd.f32 %v3949, %v3935
    %v3951 = vadd.f32 %v3950, %v3936
    %v3952 = vadd.f32 %v3951, %v3937
    %v3953 = vadd.f32 %v3952, %v3938
    %v3954 = vadd.f32 %v3953, %v3939
    %v3955 = vadd.f32 %v3954, %v3940
    %v3956 = vadd.f32 %v3955, %v3941
    %v3957 = vadd.f32 %v3956, %v3942
    %v3958 = vadd.f32 %v3957, %v3943
    %v3959 = vadd.f32 %v3958, %v3944
    %v3960 = vadd.f32 %v3959, %v3945
    %v3961 = vadd.f32 %v3960, %v3946
    %v3962 = vadd.f32 %v3961, %v3947
    %3963 = vadd.xlane.f32.xlu0 %v3962
    %v3964 = vpop.xlane.xlu0 %3963
    %v3965 = vrot.slane %v3964, 4
    %v3966 = vadd.f32 %v3964, %v3965
    %v3967 = vrot.slane %v3966, 2
    %v3968 = vadd.f32 %v3966, %v3967
    %v3969 = vrot.slane %v3968, 1
    %v3970 = vadd.f32 %v3968, %v3969
    %s3971 = vtos %v3970
    %s3972 = ssub.f32 %s3931, %s3971
    %v3973 = vsel %vm1098, 1, 0
    %v3974 = vsel %vm1099, 1, 0
    %v3975 = vsel %vm1100, 1, 0
    %v3976 = vsel %vm1101, 1, 0
    %v3977 = vsel %vm1102, 1, 0
    %v3978 = vsel %vm1103, 1, 0
    %v3979 = vsel %vm1104, 1, 0
    %v3980 = vsel %vm1105, 1, 0
    %v3981 = vsel %vm1106, 1, 0
    %v3982 = vsel %vm1107, 1, 0
    %v3983 = vsel %vm1108, 1, 0
    %v3984 = vsel %vm1109, 1, 0
    %v3985 = vsel %vm1110, 1, 0
    %v3986 = vsel %vm1111, 1, 0
    %v3987 = vsel %vm1112, 1, 0
    %v3988 = vsel %vm1113, 1, 0
    %v3989 = vcvt.s32.f32 %v3973
    %v3990 = vcvt.s32.f32 %v3974
    %v3991 = vcvt.s32.f32 %v3975
    %v3992 = vcvt.s32.f32 %v3976
    %v3993 = vcvt.s32.f32 %v3977
    %v3994 = vcvt.s32.f32 %v3978
    %v3995 = vcvt.s32.f32 %v3979
    %v3996 = vcvt.s32.f32 %v3980
    %v3997 = vcvt.s32.f32 %v3981
    %v3998 = vcvt.s32.f32 %v3982
    %v3999 = vcvt.s32.f32 %v3983
    %v4000 = vcvt.s32.f32 %v3984
    %v4001 = vcvt.s32.f32 %v3985
    %v4002 = vcvt.s32.f32 %v3986
    %v4003 = vcvt.s32.f32 %v3987
    %v4004 = vcvt.s32.f32 %v3988
    %4005 = vadd.xlane.f32.xlu0 %v1311
    %v4006 = vpop.xlane.xlu0 %4005
    %4007 = vadd.xlane.f32.xlu0 %v1312
    %v4008 = vpop.xlane.xlu0 %4007
    %4009 = vadd.xlane.f32.xlu0 %v1313
    %v4010 = vpop.xlane.xlu0 %4009
    %4011 = vadd.xlane.f32.xlu0 %v1314
    %v4012 = vpop.xlane.xlu0 %4011
    %4013 = vadd.xlane.f32.xlu0 %v1315
    %v4014 = vpop.xlane.xlu0 %4013
    %4015 = vadd.xlane.f32.xlu0 %v1316
    %v4016 = vpop.xlane.xlu0 %4015
    %4017 = vadd.xlane.f32.xlu0 %v1317
    %v4018 = vpop.xlane.xlu0 %4017
    %4019 = vadd.xlane.f32.xlu0 %v1318
    %v4020 = vpop.xlane.xlu0 %4019
    %4021 = vadd.xlane.f32.xlu0 %v1319
    %v4022 = vpop.xlane.xlu0 %4021
    %4023 = vadd.xlane.f32.xlu0 %v1320
    %v4024 = vpop.xlane.xlu0 %4023
    %4025 = vadd.xlane.f32.xlu0 %v1321
    %v4026 = vpop.xlane.xlu0 %4025
    %4027 = vadd.xlane.f32.xlu0 %v1322
    %v4028 = vpop.xlane.xlu0 %4027
    %4029 = vadd.xlane.f32.xlu0 %v1323
    %v4030 = vpop.xlane.xlu0 %4029
    %4031 = vadd.xlane.f32.xlu0 %v1324
    %v4032 = vpop.xlane.xlu0 %4031
    %4033 = vadd.xlane.f32.xlu0 %v1325
    %v4034 = vpop.xlane.xlu0 %4033
    %4035 = vadd.xlane.f32.xlu0 %v1326
    %v4036 = vpop.xlane.xlu0 %4035
    %v4037 = vmul.f32 %v3989, %v611
    %v4038 = vmul.f32 %v3990, %v613
    %v4039 = vmul.f32 %v3991, %v615
    %v4040 = vmul.f32 %v3992, %v617
    %v4041 = vmul.f32 %v3993, %v619
    %v4042 = vmul.f32 %v3994, %v621
    %v4043 = vmul.f32 %v3995, %v623
    %v4044 = vmul.f32 %v3996, %v625
    %v4045 = vmul.f32 %v3997, %v627
    %v4046 = vmul.f32 %v3998, %v629
    %v4047 = vmul.f32 %v3999, %v631
    %v4048 = vmul.f32 %v4000, %v633
    %v4049 = vmul.f32 %v4001, %v635
    %v4050 = vmul.f32 %v4002, %v637
    %v4051 = vmul.f32 %v4003, %v639
    %v4052 = vmul.f32 %v4004, %v641
    %v4053 = vsub.f32 %v4006, 1.0
    %v4054 = vsub.f32 %v4008, 1.0
    %v4055 = vsub.f32 %v4010, 1.0
    %v4056 = vsub.f32 %v4012, 1.0
    %v4057 = vsub.f32 %v4014, 1.0
    %v4058 = vsub.f32 %v4016, 1.0
    %v4059 = vsub.f32 %v4018, 1.0
    %v4060 = vsub.f32 %v4020, 1.0
    %v4061 = vsub.f32 %v4022, 1.0
    %v4062 = vsub.f32 %v4024, 1.0
    %v4063 = vsub.f32 %v4026, 1.0
    %v4064 = vsub.f32 %v4028, 1.0
    %v4065 = vsub.f32 %v4030, 1.0
    %v4066 = vsub.f32 %v4032, 1.0
    %v4067 = vsub.f32 %v4034, 1.0
    %v4068 = vsub.f32 %v4036, 1.0
    %v4069 = vmul.f32 %v4037, %v4053
    %v4070 = vmul.f32 %v4038, %v4054
    %v4071 = vmul.f32 %v4039, %v4055
    %v4072 = vmul.f32 %v4040, %v4056
    %v4073 = vmul.f32 %v4041, %v4057
    %v4074 = vmul.f32 %v4042, %v4058
    %v4075 = vmul.f32 %v4043, %v4059
    %v4076 = vmul.f32 %v4044, %v4060
    %v4077 = vmul.f32 %v4045, %v4061
    %v4078 = vmul.f32 %v4046, %v4062
    %v4079 = vmul.f32 %v4047, %v4063
    %v4080 = vmul.f32 %v4048, %v4064
    %v4081 = vmul.f32 %v4049, %v4065
    %v4082 = vmul.f32 %v4050, %v4066
    %v4083 = vmul.f32 %v4051, %v4067
    %v4084 = vmul.f32 %v4052, %v4068
    %v4085 = vsel %vm3877, %v4069, 0.0
    %v4086 = vsel %vm3877, %v4070, 0.0
    %v4087 = vadd.f32 %v4085, %v4086
    %v4088 = vsel %vm3877, %v4071, 0.0
    %v4089 = vadd.f32 %v4087, %v4088
    %v4090 = vsel %vm3877, %v4072, 0.0
    %v4091 = vadd.f32 %v4089, %v4090
    %v4092 = vsel %vm3877, %v4073, 0.0
    %v4093 = vadd.f32 %v4091, %v4092
    %v4094 = vsel %vm3877, %v4074, 0.0
    %v4095 = vadd.f32 %v4093, %v4094
    %v4096 = vsel %vm3877, %v4075, 0.0
    %v4097 = vadd.f32 %v4095, %v4096
    %v4098 = vsel %vm3877, %v4076, 0.0
    %v4099 = vadd.f32 %v4097, %v4098
    %v4100 = vsel %vm3877, %v4077, 0.0
    %v4101 = vadd.f32 %v4099, %v4100
    %v4102 = vsel %vm3877, %v4078, 0.0
    %v4103 = vadd.f32 %v4101, %v4102
    %v4104 = vsel %vm3877, %v4079, 0.0
    %v4105 = vadd.f32 %v4103, %v4104
    %v4106 = vsel %vm3877, %v4080, 0.0
    %v4107 = vadd.f32 %v4105, %v4106
    %v4108 = vsel %vm3877, %v4081, 0.0
    %v4109 = vadd.f32 %v4107, %v4108
    %v4110 = vsel %vm3877, %v4082, 0.0
    %v4111 = vadd.f32 %v4109, %v4110
    %v4112 = vsel %vm3877, %v4083, 0.0
    %v4113 = vadd.f32 %v4111, %v4112
    %v4114 = vsel %vm3877, %v4084, 0.0
    %v4115 = vadd.f32 %v4113, %v4114
    %4116 = vadd.xlane.f32.xlu0 %v4115
    %v4117 = vpop.xlane.xlu0 %4116
    %v4118 = vrot.slane %v4117, 4
    %v4119 = vadd.f32 %v4117, %v4118
    %v4120 = vrot.slane %v4119, 2
    %v4121 = vadd.f32 %v4119, %v4120
    %v4122 = vrot.slane %v4121, 1
    %v4123 = vadd.f32 %v4121, %v4122
    %s4124 = vtos %v4123
    %s4125 = smul.f32 %s4124, 0.5
    %v4126 = vmul.f32 %v1375, %v3759
    %v4127 = vmul.f32 %v1376, %v3760
    %v4128 = vmul.f32 %v1377, %v3761
    %v4129 = vmul.f32 %v1378, %v3762
    %v4130 = vmul.f32 %v1379, %v3763
    %v4131 = vmul.f32 %v1380, %v3764
    %v4132 = vmul.f32 %v1381, %v3765
    %v4133 = vmul.f32 %v1382, %v3766
    %v4134 = vmul.f32 %v1383, %v3767
    %v4135 = vmul.f32 %v1384, %v3768
    %v4136 = vmul.f32 %v1385, %v3769
    %v4137 = vmul.f32 %v1386, %v3770
    %v4138 = vmul.f32 %v1387, %v3771
    %v4139 = vmul.f32 %v1388, %v3772
    %v4140 = vmul.f32 %v1389, %v3773
    %v4141 = vmul.f32 %v1390, %v3774
    %v4142 = vadd.f32 %v4126, %v4127
    %v4143 = vadd.f32 %v4142, %v4128
    %v4144 = vadd.f32 %v4143, %v4129
    %v4145 = vadd.f32 %v4144, %v4130
    %v4146 = vadd.f32 %v4145, %v4131
    %v4147 = vadd.f32 %v4146, %v4132
    %v4148 = vadd.f32 %v4147, %v4133
    %v4149 = vadd.f32 %v4148, %v4134
    %v4150 = vadd.f32 %v4149, %v4135
    %v4151 = vadd.f32 %v4150, %v4136
    %v4152 = vadd.f32 %v4151, %v4137
    %v4153 = vadd.f32 %v4152, %v4138
    %v4154 = vadd.f32 %v4153, %v4139
    %v4155 = vadd.f32 %v4154, %v4140
    %v4156 = vadd.f32 %v4155, %v4141
    %4157 = vadd.xlane.f32.xlu0 %v4156
    %v4158 = vpop.xlane.xlu0 %4157
    %v4159 = vrot.slane %v4158, 4
    %v4160 = vadd.f32 %v4158, %v4159
    %v4161 = vrot.slane %v4160, 2
    %v4162 = vadd.f32 %v4160, %v4161
    %v4163 = vrot.slane %v4162, 1
    %v4164 = vadd.f32 %v4162, %v4163
    %s4165 = vtos %v4164
    %s4166 = ssub.f32 %s4125, %s4165
    %p4167 = scmp.gt.f32.partialorder %s3798, 0.0
    %s4168 = smax.f32 %s3798, 1.0
    %v4169 = vstv %s4168
    %v4170 = vrcp.pop %v4169
    %s4171 = vtos %v4170
    %s4172 = smul.f32 %s3972, %s4171
    %s4173 = scalar_select %p4167, %s4172, 0.0
    %p4174 = scmp.gt.f32.partialorder %s3822, 0.0
    %s4175 = smax.f32 %s3822, 1.0
    %v4176 = vstv %s4175
    %v4177 = vrcp.pop %v4176
    %s4178 = vtos %v4177
    %s4179 = smul.f32 %s4166, %s4178
    %s4180 = scalar_select %p4174, %s4179, 0.0
    %s4181 = sadd.f32 %s4173, %s4180
    %s4182 = smul.f32 %s4181, 100.0
    %s4183 = scalar_lea.smem [#allocation2], 0
    %4184 = sst [smem:[%s4183]] %s4182
    // Predicated region
    $region22: #{adversarial_loss_pdd.1} parent=1 // pred_check
      _
    $region23: #{adversarial_loss_pdd.1} parent=1 // pred_check_branch
      %4186 = sbr.rel (0) target = $region25
    $region24: #{adversarial_loss_pdd.1} parent=1 // pred_region
      %s4188 = ssub.s32 16, 16
      %4189 = vsyncadd [#allocation3], %s4188
      %4192 = dma.smem_to_hbm [#allocation2], 16, %s5, [#allocation3]
    $region25: #{adversarial_loss_pdd.1} parent=1 // pred_fallthru
      _
    // Predicated region
    $region26: #{adversarial_loss_pdd.1} parent=1 // pred_check
      _
    $region27: #{adversarial_loss_pdd.1} parent=1 // pred_check_branch
      %4194 = sbr.rel (0) target = $region29
    $region28: #{adversarial_loss_pdd.1} parent=1 // pred_region
      %4195 = dma.done [#allocation3], 16
    $region29: #{adversarial_loss_pdd.1} parent=1 // pred_fallthru
      _
    %4196 = sfence
    %4197 = vsyncpa [#allocation3], 1

</llo_original>
